<compile_context>
chip_gen: v7x
topology: tpu7x:2x2x1
jax: 0.10.0
libtpu: 0.0.40
codegen_flags: <defaults>
</compile_context>

<pallas_src>
import functools

import jax
import jax.numpy as jnp
from jax import lax
from jax.experimental import pallas as pl
from jax.experimental.pallas import tpu as pltpu


def _round_up(v, m):
    return ((v + m - 1) // m) * m


def _ffn_kernel(xpad_ref, w1_ref, b1_ref, w2_ref, b2_ref, o_ref, im2col_ref, *,
                k1, d_in, seq_tile, p1):
    # xpad_ref:   (T_round + 2*p1, d_in) f32  -- per-batch resident padded x
    # w1_ref:     (k1*d_in, d_hid) bf16        b1_ref: (1, d_hid) f32
    # w2_ref:     (d_hid, d_in) bf16           b2_ref: (1, d_in) f32
    # o_ref:      (seq_tile, d_in)
    # im2col_ref: (seq_tile, k1*d_in) bf16 VMEM scratch
    halo = k1 - 1
    start = pl.multiple_of(pl.program_id(1) * seq_tile, seq_tile)

    # One dynamic-offset window load (f32 -> 1 row/sublane, so the shifted tap
    # slices below are plain offset slices, no bf16 sublane repack).
    xw = xpad_ref[pl.ds(start, seq_tile + halo), :]          # (tT+halo, d_in) f32

    # Build the im2col LHS: column block k holds the k-th tap shift (bf16).
    for k in range(k1):                                      # static unroll
        im2col_ref[:, k * d_in:(k + 1) * d_in] = (
            xw[k:k + seq_tile, :].astype(jnp.bfloat16))

    # conv1 (d_in -> d_hid, 'same') as ONE MXU matmul with K = k1*d_in,
    # f32 accumulation; single accumulator pass.
    acc = jnp.dot(im2col_ref[...], w1_ref[...],
                  preferred_element_type=jnp.float32)
    h = jnp.maximum(acc + b1_ref[...], 0.0)                  # f32 VPU ops

    # conv2 is pointwise (k=1, pad=0): one MXU matmul, bf16 operands, f32 acc.
    y = jnp.dot(h.astype(jnp.bfloat16), w2_ref[...],
                preferred_element_type=jnp.float32) + b2_ref[...]

    # dropout (eval mode: identity) + residual from the exact f32 center slice.
    o_ref[...] = (y + xw[p1:p1 + seq_tile, :]).astype(o_ref.dtype)


def _device_vmem_bytes():
    """Rough per-core VMEM capacity from the device kind (conservative default)."""
    try:
        kind = jax.devices()[0].device_kind.lower()
    except Exception:
        return 64 << 20
    if any(tag in kind for tag in ("v5", "v6")):
        return 128 << 20
    return 64 << 20          # v7x has 64 MiB per TensorCore; unknown -> conservative


def _vmem_footprint(seq_tile, t_pad, d_in, d_hid, k1, weight_buffers):
    f = 0
    f += 2 * t_pad * d_in * 4                     # resident padded x (pipelined over batch)
    f += 2 * seq_tile * d_in * 4                  # output tile (double-buffered)
    f += weight_buffers * ((k1 * d_in + d_in) * d_hid * 2 + (d_hid + d_in) * 4)
    f += seq_tile * k1 * d_in * 2                 # im2col scratch
    f += 3 * seq_tile * d_hid * 4                 # conv1 acc / h f32 intermediates
    f += seq_tile * d_hid * 2                     # h bf16 operand
    return f


def _pick_seq_tile(T, target):
    target = max(64, _round_up(target, 8))
    if T <= target:
        return _round_up(T, 8)
    n_t = -(-T // target)
    return _round_up(-(-T // n_t), 8)


def _const_spec_factory():
    """Single-buffered BlockSpec factory for grid-constant operands.

    Narrow feature probe at spec-construction time only (does NOT wrap
    pallas_call, so genuine lowering errors are never swallowed)."""
    try:
        pl.BlockSpec((8, 128), lambda b, t: (0, 0), pipeline_mode=pl.Buffered(1))
    except Exception:
        return (lambda shape, imap: pl.BlockSpec(shape, imap)), 2
    return (lambda shape, imap:
            pl.BlockSpec(shape, imap, pipeline_mode=pl.Buffered(1))), 1


def positionwise_feed_forward(x, w1, b1, w2, b2, *, padding=(4, 0), seq_tile=None):
    """x: (B, T, d_in) float32.
    w1: (d_hid, d_in, k1), b1: (d_hid,)   -- torch Conv1d layout
    w2: (d_in, d_hid, 1),  b2: (d_in,)
    """
    B, T, d_in = x.shape
    d_hid, d_in_w1, k1 = w1.shape
    d_in_w2, d_hid_w2, k2 = w2.shape
    p1, p2 = padding
    assert d_in_w1 == d_in and d_hid_w2 == d_hid and d_in_w2 == d_in
    assert k1 == 2 * p1 + 1, "conv1 must be 'same' so the residual add is valid"
    if k2 != 1 or p2 != 0:
        raise NotImplementedError("conv2 is pointwise (k=1, pad=0) in FastSpeech")

    const_spec, weight_buffers = _const_spec_factory()
    vmem_cap = _device_vmem_bytes()

    if seq_tile is None:
        seq_tile = _pick_seq_tile(T, 1024 if vmem_cap >= (128 << 20) else 512)
        while seq_tile > 64:                      # shrink until footprint fits budget
            t_pad_probe = _round_up(T, seq_tile) + 2 * p1
            if _vmem_footprint(seq_tile, t_pad_probe, d_in, d_hid, k1,
                               weight_buffers) <= 0.7 * vmem_cap:
                break
            seq_tile = max(64, _round_up(seq_tile // 2, 8))
    seq_tile = _round_up(min(seq_tile, _round_up(T, 8)), 8)

    n_t = -(-T // seq_tile)
    T_round = n_t * seq_tile
    t_pad = T_round + 2 * p1
    footprint = _vmem_footprint(seq_tile, t_pad, d_in, d_hid, k1, weight_buffers)
    vmem_limit = int(min(0.9 * vmem_cap, max(32 << 20, 1.5 * footprint)))

    # HBM-side prep: zero-pad T once (conv halo + T rounding, single f32 stream)
    # and put the weights into MXU layout (bf16).  Biases stay f32.
    x_pad = jnp.pad(x, ((0, 0), (p1, p1 + (T_round - T)), (0, 0)))
    w1_t = jnp.transpose(w1, (2, 1, 0)).reshape(k1 * d_in, d_hid).astype(jnp.bfloat16)
    w2_t = jnp.transpose(w2[:, :, 0]).astype(jnp.bfloat16)       # (d_hid, d_in)
    b1_r = b1.reshape(1, d_hid).astype(jnp.float32)
    b2_r = b2.reshape(1, d_in).astype(jnp.float32)

    kernel = functools.partial(_ffn_kernel, k1=k1, d_in=d_in,
                               seq_tile=seq_tile, p1=p1)

    grid_spec = pltpu.PrefetchScalarGridSpec(
        num_scalar_prefetch=0,
        grid=(B, n_t),
        in_specs=[
            # Padded sequence: resident per batch (block index constant in t).
            pl.BlockSpec((None, t_pad, d_in), lambda b, t: (b, 0, 0)),
            # Constant weights / biases: single-buffered when supported.
            const_spec((k1 * d_in, d_hid), lambda b, t: (0, 0)),
            const_spec((1, d_hid), lambda b, t: (0, 0)),
            const_spec((d_hid, d_in), lambda b, t: (0, 0)),
            const_spec((1, d_in), lambda b, t: (0, 0)),
        ],
        out_specs=pl.BlockSpec((None, seq_tile, d_in), lambda b, t: (b, t, 0)),
        scratch_shapes=[pltpu.VMEM((seq_tile, k1 * d_in), jnp.bfloat16)],
    )

    flops = 2 * B * T_round * d_hid * (k1 * d_in + d_in)
    bytes_accessed = (B * t_pad * d_in * 4 + B * T_round * d_in * 4
                      + (k1 * d_in + d_in) * d_hid * 2 + (d_hid + d_in) * 4)
    cost = pl.CostEstimate(flops=flops, transcendentals=0,
                           bytes_accessed=bytes_accessed)

    # v7x: shard the 2 TensorCores over batch (t marked arbitrary) so the
    # per-batch resident activation is not fetched twice.  No measurable effect
    # on single-TC v5e/v6e.  With B == 1, let the t axis be the parallel one.
    dims = ("parallel", "arbitrary") if B >= 2 else ("parallel", "parallel")

    out = pl.pallas_call(
        kernel,
        out_shape=jax.ShapeDtypeStruct((B, T_round, d_in), x.dtype),
        grid_spec=grid_spec,
        compiler_params=pltpu.CompilerParams(
            dimension_semantics=dims,
            vmem_limit_bytes=vmem_limit),
        cost_estimate=cost,
    )(x_pad, w1_t, b1_r, w2_t, b2_r)
    return out[:, :T, :] if T_round != T else out


def _reference(x, w1, b1, w2, b2, padding=(4, 0), operand_dtype=None):
    # Pure-JAX reference mirroring the PyTorch module (eval mode).
    # operand_dtype=jnp.bfloat16 gives a matched-precision reference that
    # rounds the MXU operands exactly like the kernel does.
    if operand_dtype is None:
        cast = lambda a: a
    else:
        cast = lambda a: a.astype(operand_dtype).astype(jnp.float32)
    dn = ("NCH", "OIH", "NCH")
    xt = jnp.transpose(cast(x), (0, 2, 1))                       # (B, d_in, T)
    h = lax.conv_general_dilated(
        xt, cast(w1), window_strides=(1,), padding=[(padding[0], padding[0])],
        dimension_numbers=dn, precision=lax.Precision.HIGHEST) + b1[None, :, None]
    h = cast(jnp.maximum(h, 0.0))
    y = lax.conv_general_dilated(
        h, cast(w2), window_strides=(1,), padding=[(padding[1], padding[1])],
        dimension_numbers=dn, precision=lax.Precision.HIGHEST) + b2[None, :, None]
    return jnp.transpose(y, (0, 2, 1)) + x


if __name__ == "__main__":
    # FastSpeech defaults: fft_conv1d_kernel=(9, 1), fft_conv1d_padding=(4, 0).
    # Small shapes; d_in a multiple of 128 keeps the im2col column blocks
    # lane-aligned.  T=200 exercises the non-divisible-T rounding path.
    B, T, d_in, d_hid = 2, 200, 128, 256
    k1, k2, p1, p2 = 9, 1, 4, 0

    key = jax.random.PRNGKey(0)
    kx, kw1, kb1, kw2, kb2 = jax.random.split(key, 5)
    x = jax.random.normal(kx, (B, T, d_in), jnp.float32)
    w1 = jax.random.normal(kw1, (d_hid, d_in, k1), jnp.float32) * 0.05
    b1 = jax.random.normal(kb1, (d_hid,), jnp.float32) * 0.05
    w2 = jax.random.normal(kw2, (d_in, d_hid, k2), jnp.float32) * 0.05
    b2 = jax.random.normal(kb2, (d_in,), jnp.float32) * 0.05

    ref_matched = _reference(x, w1, b1, w2, b2, padding=(p1, p2),
                             operand_dtype=jnp.bfloat16)
    ref_f32 = _reference(x, w1, b1, w2, b2, padding=(p1, p2))

    # Run 1: automatic tile selection (single tile covering T).
    out = jax.block_until_ready(
        positionwise_feed_forward(x, w1, b1, w2, b2, padding=(p1, p2)))
    assert out.shape == (B, T, d_in)
    err = float(jnp.max(jnp.abs(out - ref_matched)))
    assert err < 5e-3, f"auto-tile kernel mismatch vs matched-precision ref: {err}"
    err_loose = float(jnp.max(jnp.abs(out - ref_f32)))
    assert err_loose < 1e-1, f"auto-tile kernel drifted from f32 ref: {err_loose}"

    # Run 2: forced multi-tile + T-rounding path (T=200 rounded to 256).
    out2 = jax.block_until_ready(
        positionwise_feed_forward(x, w1, b1, w2, b2, padding=(p1, p2),
                                  seq_tile=64))
    assert out2.shape == (B, T, d_in)
    err2 = float(jnp.max(jnp.abs(out2 - ref_matched)))
    assert err2 < 5e-3, f"tiled kernel mismatch vs matched-precision ref: {err2}"
    err2_loose = float(jnp.max(jnp.abs(out2 - ref_f32)))
    assert err2_loose < 1e-1, f"tiled kernel drifted from f32 ref: {err2_loose}"

    print("KERNEL_OK")
</pallas_src>

<mosaic_0001>
module attributes {stable_mosaic.version = 11 : i64} {
  func.func @_ffn_kernel(%arg0: i32, %arg1: i32, %arg2: memref<1x208x128xf32, #tpu.memory_space<vmem>>, %arg3: memref<1152x256xbf16, #tpu.memory_space<vmem>>, %arg4: memref<1x256xf32, #tpu.memory_space<vmem>>, %arg5: memref<256x128xbf16, #tpu.memory_space<vmem>>, %arg6: memref<1x128xf32, #tpu.memory_space<vmem>>, %arg7: memref<1x200x128xf32, #tpu.memory_space<vmem>>, %arg8: memref<200x1152xbf16, #tpu.memory_space<vmem>>) attributes {dimension_semantics = [#tpu.dimension_semantics<parallel>, #tpu.dimension_semantics<arbitrary>], iteration_bounds = array<i64: 2, 1>, scalar_prefetch = 0 : i64, scratch_operands = 1 : i64, tpu.core_type = #tpu.core_type<tc>, window_params = [{transform_indices = @transform_0, window_bounds = array<i64: 1, 208, 128>}, {pipeline_mode = #tpu.pipeline_mode<synchronous>, transform_indices = @transform_1, window_bounds = array<i64: 1152, 256>}, {pipeline_mode = #tpu.pipeline_mode<synchronous>, transform_indices = @transform_2, window_bounds = array<i64: 1, 256>}, {pipeline_mode = #tpu.pipeline_mode<synchronous>, transform_indices = @transform_3, window_bounds = array<i64: 256, 128>}, {pipeline_mode = #tpu.pipeline_mode<synchronous>, transform_indices = @transform_4, window_bounds = array<i64: 1, 128>}, {transform_indices = @transform_5, window_bounds = array<i64: 1, 200, 128>}]} {
    %c200_i32 = arith.constant 200 : i32
    %0 = arith.muli %arg1, %c200_i32 : i32
    %1 = tpu.assume_multiple %0, 200 : i32
    %c0 = arith.constant 0 : index
    %2 = arith.index_cast %1 : i32 to index
    %c0_0 = arith.constant 0 : index
    %3 = vector.load %arg2[%c0, %2, %c0_0] : memref<1x208x128xf32, #tpu.memory_space<vmem>>, vector<1x208x128xf32>
    %4 = vector.shape_cast %3 : vector<1x208x128xf32> to vector<208x128xf32>
    %5 = vector.extract_strided_slice %4 {offsets = [0, 0], sizes = [200, 128], strides = [1, 1]} : vector<208x128xf32> to vector<200x128xf32>
    %6 = arith.truncf %5 : vector<200x128xf32> to vector<200x128xbf16>
    %c0_1 = arith.constant 0 : index
    %c0_2 = arith.constant 0 : index
    %7 = vector.load %arg8[%c0_1, %c0_2] : memref<200x1152xbf16, #tpu.memory_space<vmem>>, vector<200x128xbf16>
    tpu.vector_store %arg8[%c0_1, %c0_2], %6 {strides = array<i32>} : memref<200x1152xbf16, #tpu.memory_space<vmem>>, vector<200x128xbf16>,
    %8 = vector.extract_strided_slice %4 {offsets = [1, 0], sizes = [200, 128], strides = [1, 1]} : vector<208x128xf32> to vector<200x128xf32>
    %9 = arith.truncf %8 : vector<200x128xf32> to vector<200x128xbf16>
    %c0_3 = arith.constant 0 : index
    %c128 = arith.constant 128 : index
    %10 = vector.load %arg8[%c0_3, %c128] : memref<200x1152xbf16, #tpu.memory_space<vmem>>, vector<200x128xbf16>
    tpu.vector_store %arg8[%c0_3, %c128], %9 {strides = array<i32>} : memref<200x1152xbf16, #tpu.memory_space<vmem>>, vector<200x128xbf16>,
    %11 = vector.extract_strided_slice %4 {offsets = [2, 0], sizes = [200, 128], strides = [1, 1]} : vector<208x128xf32> to vector<200x128xf32>
    %12 = arith.truncf %11 : vector<200x128xf32> to vector<200x128xbf16>
    %c0_4 = arith.constant 0 : index
    %c256 = arith.constant 256 : index
    %13 = vector.load %arg8[%c0_4, %c256] : memref<200x1152xbf16, #tpu.memory_space<vmem>>, vector<200x128xbf16>
    tpu.vector_store %arg8[%c0_4, %c256], %12 {strides = array<i32>} : memref<200x1152xbf16, #tpu.memory_space<vmem>>, vector<200x128xbf16>,
    %14 = vector.extract_strided_slice %4 {offsets = [3, 0], sizes = [200, 128], strides = [1, 1]} : vector<208x128xf32> to vector<200x128xf32>
    %15 = arith.truncf %14 : vector<200x128xf32> to vector<200x128xbf16>
    %c0_5 = arith.constant 0 : index
    %c384 = arith.constant 384 : index
    %16 = vector.load %arg8[%c0_5, %c384] : memref<200x1152xbf16, #tpu.memory_space<vmem>>, vector<200x128xbf16>
    tpu.vector_store %arg8[%c0_5, %c384], %15 {strides = array<i32>} : memref<200x1152xbf16, #tpu.memory_space<vmem>>, vector<200x128xbf16>,
    %17 = vector.extract_strided_slice %4 {offsets = [4, 0], sizes = [200, 128], strides = [1, 1]} : vector<208x128xf32> to vector<200x128xf32>
    %18 = arith.truncf %17 : vector<200x128xf32> to vector<200x128xbf16>
    %c0_6 = arith.constant 0 : index
    %c512 = arith.constant 512 : index
    %19 = vector.load %arg8[%c0_6, %c512] : memref<200x1152xbf16, #tpu.memory_space<vmem>>, vector<200x128xbf16>
    tpu.vector_store %arg8[%c0_6, %c512], %18 {strides = array<i32>} : memref<200x1152xbf16, #tpu.memory_space<vmem>>, vector<200x128xbf16>,
    %20 = vector.extract_strided_slice %4 {offsets = [5, 0], sizes = [200, 128], strides = [1, 1]} : vector<208x128xf32> to vector<200x128xf32>
    %21 = arith.truncf %20 : vector<200x128xf32> to vector<200x128xbf16>
    %c0_7 = arith.constant 0 : index
    %c640 = arith.constant 640 : index
    %22 = vector.load %arg8[%c0_7, %c640] : memref<200x1152xbf16, #tpu.memory_space<vmem>>, vector<200x128xbf16>
    tpu.vector_store %arg8[%c0_7, %c640], %21 {strides = array<i32>} : memref<200x1152xbf16, #tpu.memory_space<vmem>>, vector<200x128xbf16>,
    %23 = vector.extract_strided_slice %4 {offsets = [6, 0], sizes = [200, 128], strides = [1, 1]} : vector<208x128xf32> to vector<200x128xf32>
    %24 = arith.truncf %23 : vector<200x128xf32> to vector<200x128xbf16>
    %c0_8 = arith.constant 0 : index
    %c768 = arith.constant 768 : index
    %25 = vector.load %arg8[%c0_8, %c768] : memref<200x1152xbf16, #tpu.memory_space<vmem>>, vector<200x128xbf16>
    tpu.vector_store %arg8[%c0_8, %c768], %24 {strides = array<i32>} : memref<200x1152xbf16, #tpu.memory_space<vmem>>, vector<200x128xbf16>,
    %26 = vector.extract_strided_slice %4 {offsets = [7, 0], sizes = [200, 128], strides = [1, 1]} : vector<208x128xf32> to vector<200x128xf32>
    %27 = arith.truncf %26 : vector<200x128xf32> to vector<200x128xbf16>
    %c0_9 = arith.constant 0 : index
    %c896 = arith.constant 896 : index
    %28 = vector.load %arg8[%c0_9, %c896] : memref<200x1152xbf16, #tpu.memory_space<vmem>>, vector<200x128xbf16>
    tpu.vector_store %arg8[%c0_9, %c896], %27 {strides = array<i32>} : memref<200x1152xbf16, #tpu.memory_space<vmem>>, vector<200x128xbf16>,
    %29 = vector.extract_strided_slice %4 {offsets = [8, 0], sizes = [200, 128], strides = [1, 1]} : vector<208x128xf32> to vector<200x128xf32>
    %30 = arith.truncf %29 : vector<200x128xf32> to vector<200x128xbf16>
    %c0_10 = arith.constant 0 : index
    %c1024 = arith.constant 1024 : index
    %31 = vector.load %arg8[%c0_10, %c1024] : memref<200x1152xbf16, #tpu.memory_space<vmem>>, vector<200x128xbf16>
    tpu.vector_store %arg8[%c0_10, %c1024], %30 {strides = array<i32>} : memref<200x1152xbf16, #tpu.memory_space<vmem>>, vector<200x128xbf16>,
    %c0_11 = arith.constant 0 : index
    %c0_12 = arith.constant 0 : index
    %32 = vector.load %arg8[%c0_11, %c0_12] : memref<200x1152xbf16, #tpu.memory_space<vmem>>, vector<200x1152xbf16>
    %c0_13 = arith.constant 0 : index
    %c0_14 = arith.constant 0 : index
    %33 = vector.load %arg3[%c0_13, %c0_14] : memref<1152x256xbf16, #tpu.memory_space<vmem>>, vector<1152x256xbf16>
    %cst = arith.constant dense<0.000000e+00> : vector<200x256xf32>
    %34 = tpu.matmul %32, %33, %cst {dimension_numbers = #tpu.dot_dimension_numbers<[1], [0], [0], [1], [0, 0, 1, 1], [], []>} : vector<200x1152xbf16>, vector<1152x256xbf16>, vector<200x256xf32> -> vector<200x256xf32>
    %c0_15 = arith.constant 0 : index
    %c0_16 = arith.constant 0 : index
    %35 = vector.load %arg4[%c0_15, %c0_16] : memref<1x256xf32, #tpu.memory_space<vmem>>, vector<1x256xf32>
    %36 = vector.broadcast %35 : vector<1x256xf32> to vector<200x256xf32>
    %37 = arith.addf %34, %36 : vector<200x256xf32>
    %cst_17 = arith.constant 0.000000e+00 : f32
    %38 = vector.broadcast %cst_17 : f32 to vector<200x256xf32>
    %39 = arith.maximumf %37, %38 : vector<200x256xf32>
    %40 = arith.truncf %39 : vector<200x256xf32> to vector<200x256xbf16>
    %c0_18 = arith.constant 0 : index
    %c0_19 = arith.constant 0 : index
    %41 = vector.load %arg5[%c0_18, %c0_19] : memref<256x128xbf16, #tpu.memory_space<vmem>>, vector<256x128xbf16>
    %cst_20 = arith.constant dense<0.000000e+00> : vector<200x128xf32>
    %42 = tpu.matmul %40, %41, %cst_20 {dimension_numbers = #tpu.dot_dimension_numbers<[1], [0], [0], [1], [0, 0, 1, 1], [], []>} : vector<200x256xbf16>, vector<256x128xbf16>, vector<200x128xf32> -> vector<200x128xf32>
    %c0_21 = arith.constant 0 : index
    %c0_22 = arith.constant 0 : index
    %43 = vector.load %arg6[%c0_21, %c0_22] : memref<1x128xf32, #tpu.memory_space<vmem>>, vector<1x128xf32>
    %44 = vector.broadcast %43 : vector<1x128xf32> to vector<200x128xf32>
    %45 = arith.addf %42, %44 : vector<200x128xf32>
    %46 = vector.extract_strided_slice %4 {offsets = [4, 0], sizes = [200, 128], strides = [1, 1]} : vector<208x128xf32> to vector<200x128xf32>
    %47 = arith.addf %45, %46 : vector<200x128xf32>
    %c0_23 = arith.constant 0 : index
    %c0_24 = arith.constant 0 : index
    %c0_25 = arith.constant 0 : index
    %48 = vector.load %arg7[%c0_23, %c0_24, %c0_25] : memref<1x200x128xf32, #tpu.memory_space<vmem>>, vector<1x200x128xf32>
    %49 = vector.shape_cast %48 : vector<1x200x128xf32> to vector<200x128xf32>
    %50 = vector.shape_cast %47 : vector<200x128xf32> to vector<1x200x128xf32>
    tpu.vector_store %arg7[%c0_23, %c0_24, %c0_25], %50 {strides = array<i32>} : memref<1x200x128xf32, #tpu.memory_space<vmem>>, vector<1x200x128xf32>,
    return
  }
  func.func @transform_0(%arg0: i32, %arg1: i32) -> (i32, i32, i32) {
    %c0_i32 = arith.constant 0 : i32
    %c0_i32_0 = arith.constant 0 : i32
    %c0_i32_1 = arith.constant 0 : i32
    return %arg0, %c0_i32, %c0_i32_0 : i32, i32, i32
  }
  func.func @transform_1(%arg0: i32, %arg1: i32) -> (i32, i32) {
    %c0_i32 = arith.constant 0 : i32
    %c0_i32_0 = arith.constant 0 : i32
    %c0_i32_1 = arith.constant 0 : i32
    return %c0_i32, %c0_i32_0 : i32, i32
  }
  func.func @transform_2(%arg0: i32, %arg1: i32) -> (i32, i32) {
    %c0_i32 = arith.constant 0 : i32
    %c0_i32_0 = arith.constant 0 : i32
    %c0_i32_1 = arith.constant 0 : i32
    return %c0_i32, %c0_i32_0 : i32, i32
  }
  func.func @transform_3(%arg0: i32, %arg1: i32) -> (i32, i32) {
    %c0_i32 = arith.constant 0 : i32
    %c0_i32_0 = arith.constant 0 : i32
    %c0_i32_1 = arith.constant 0 : i32
    return %c0_i32, %c0_i32_0 : i32, i32
  }
  func.func @transform_4(%arg0: i32, %arg1: i32) -> (i32, i32) {
    %c0_i32 = arith.constant 0 : i32
    %c0_i32_0 = arith.constant 0 : i32
    %c0_i32_1 = arith.constant 0 : i32
    return %c0_i32, %c0_i32_0 : i32, i32
  }
  func.func @transform_5(%arg0: i32, %arg1: i32) -> (i32, i32, i32) {
    %c0_i32 = arith.constant 0 : i32
    %c0_i32_0 = arith.constant 0 : i32
    return %arg0, %arg1, %c0_i32 : i32, i32, i32
  }
}

</mosaic_0001>

<llo_original>
// kernel: tpu_custom_call.1
$region0: #{tpu_custom_call.1}
  #allocation0 [shape = 'u32[]', space=smem, size = 0x4, offset = 0x4, fixed_abs, tag = 'smem constant byte address 0x4 - core index']
  #allocation1 [shape = 'u32[144,128]{1,0:T(1,128)}', space=vmem, size = 0x12000, scoped, tag = 'internal scratch']
  #allocation2 [shape = 'bf16[200,1152]{1,0:T(8,128)(2,1)}', space=vmem, size = 0x70800, scoped, tag = 'scratch operand']
  %s0 = inlined_call_operand.hbm [shape: f32[2,208,128], index: 0, kind: input, shape index: {}]
  %s1 = inlined_call_operand.hbm [shape: bf16[1152,256], index: 1, kind: input, shape index: {}]
  %s2 = inlined_call_operand.vmem [shape: f32[1,256], index: 2, kind: input, shape index: {}]
  %s3 = inlined_call_operand.hbm [shape: bf16[256,128], index: 3, kind: input, shape index: {}]
  %s4 = inlined_call_operand.vmem [shape: f32[1,128], index: 4, kind: input, shape index: {}]
  %s5 = inlined_call_operand.hbm [shape: f32[2,200,128], index: 5, kind: output, shape index: {}]
  %s6 = sld [smem:[#allocation0]]
  $region65: #{tpu_custom_call.1} parent=0
    _
  %s8 = ssub.s32 1, %s6
  %s9 = scalar_select 0, %s8, %s6
  $region1: #{tpu_custom_call.1} parent=0
    #allocation3 [shape = 'u8[212992]{0}', space=vmem, size = 0x34000, scoped, tag = 'input window, operand 0']
    #allocation4 [shape = 's32[2]{0}', space=sflag, size = 0x8, scoped, tag = 'scoped memory for tpu_custom_call.1']
    #allocation5 [shape = 's32[2]{0}', space=sflag, size = 0x8, scoped, tag = 'scoped memory for tpu_custom_call.1']
    #allocation6 [shape = 'u8[589824]{0}', space=vmem, size = 0x90000, scoped, tag = 'input window, operand 1, single buffered']
    #allocation7 [shape = 's32[1]{0}', space=sflag, size = 0x4, scoped, tag = 'scoped memory for tpu_custom_call.1']
    #allocation8 [shape = 'u8[65536]{0}', space=vmem, size = 0x10000, scoped, tag = 'input window, operand 3, single buffered']
    #allocation9 [shape = 'u8[204800]{0}', space=vmem, size = 0x32000, scoped, tag = 'output window, operand 0']
    %10 = vsyncpa [#allocation4], 0
    %s11 = scalar_lea.sflag [#allocation4], 1
    %12 = vsyncpa %s11, 0
    %13 = vsyncpa [#allocation7], 0
    %14 = vsyncpa [#allocation5], 0
    %s15 = scalar_lea.sflag [#allocation5], 1
    %16 = vsyncpa %s15, 0
    loop: start=0, step=1, limit=4
    $region2: #{tpu_custom_call.1} parent=1 // loop_pre_header
      _
    $region3: #{tpu_custom_call.1} parent=1 // loop_header
      %s18 = sphi 0, %s22
      %p19 = scmp.ge.s32.totalorder %s18, 4
      %s25 = sphi 0, %s37
      %s26 = sphi 0, %s33
      %s27 = sphi 0, %s25
      %s28 = sphi 0, %s26
      %s29 = sphi 0, %s27
      %s30 = sphi 0, %s28
      %s40 = sphi 0, %s42
      %s43 = sphi 0, %s40
      %s44 = sphi 0, %s43
      %s60 = sphi 0, %s44
      %s64 = sphi 0, %s64
      %s66 = sphi 0, %s64
      %s67 = sphi 0, %s66
      %s81 = sphi 0, %s67
      %s85 = sphi 0, %s85
      %s87 = sphi 0, %s85
      %s88 = sphi 0, %s87
      %s102 = sphi 0, %s88
      %s106 = sphi 0, %s106
      %s108 = sphi 0, %s106
      %s109 = sphi 0, %s108
      %s123 = sphi 0, %s109
      %s127 = sphi 0, %s127
      %s129 = sphi 0, %s127
      %s130 = sphi 0, %s129
      %s144 = sphi 0, %s130
      %s152 = sphi 0, %s154
      %s155 = sphi 0, %s152
      %s156 = sphi 0, %s155
      %s172 = sphi 0, %s156
    $region4: #{tpu_custom_call.1} parent=1 // loop_header_branch
      %21 = sbr.rel (%p19) target = $region8
    $region5: #{tpu_custom_call.1} parent=1 // loop_body
      %s23 = ssub.s32 %s18, 1
      %s24 = ssub.s32 %s18, 2
      %s31 = sadd.s32 1, %s26
      %p32 = scmp.ge.s32.totalorder %s31, 1
      %s33 = scalar_select %p32, 0, %s31
      %s34 = sadd.s32 1, %s25
      %s35 = scalar_select %p32, %s34, %s25
      %p36 = scmp.ge.s32.totalorder %s35, 2
      %s37 = scalar_select %p36, 0, %s35
      %s38 = ssub.s32 %s25, %s37
      %p39 = scmp.eq.s32.totalorder %s38, 0
      %s41 = sadd.s32 %s40, 1
      %s42 = scalar_select %p39, %s40, %s41
      %p45 = pneg %p39
      %p46 = scmp.eq.s32.totalorder %s18, 1
      %p47 = por %p45, %p46
      %p48 = scmp.ne.s32.totalorder %s40, %s43
      %p49 = scmp.eq.s32.totalorder %s18, 0
      %p50 = por %p48, %p49
      %p51 = scmp.ne.s32.totalorder %s40, %s43
      %p52 = scmp.eq.s32.totalorder %s23, 1
      %p53 = por %p51, %p52
      %p54 = scmp.ne.s32.totalorder %s43, %s44
      %p55 = scmp.eq.s32.totalorder %s23, 0
      %p56 = por %p54, %p55
      %p57 = scmp.ne.s32.totalorder %s43, %s44
      %p58 = scmp.eq.s32.totalorder %s24, 1
      %p59 = por %p57, %p58
      %p61 = scmp.ne.s32.totalorder %s44, %s60
      %p62 = scmp.eq.s32.totalorder %s24, 0
      %p63 = por %p61, %p62
      %s65 = sadd.s32 %s64, 1
      %p68 = scmp.eq.s32.totalorder %s18, 1
      %p69 = scmp.ne.s32.totalorder %s64, %s66
      %p70 = scmp.eq.s32.totalorder %s18, 0
      %p71 = por %p69, %p70
      %p72 = scmp.ne.s32.totalorder %s64, %s66
      %p73 = scmp.eq.s32.totalorder %s23, 1
      %p74 = por %p72, %p73
      %p75 = scmp.ne.s32.totalorder %s66, %s67
      %p76 = scmp.eq.s32.totalorder %s23, 0
      %p77 = por %p75, %p76
      %p78 = scmp.ne.s32.totalorder %s66, %s67
      %p79 = scmp.eq.s32.totalorder %s24, 1
      %p80 = por %p78, %p79
      %p82 = scmp.ne.s32.totalorder %s67, %s81
      %p83 = scmp.eq.s32.totalorder %s24, 0
      %p84 = por %p82, %p83
      %s86 = sadd.s32 %s85, 1
      %p89 = scmp.eq.s32.totalorder %s18, 1
      %p90 = scmp.ne.s32.totalorder %s85, %s87
      %p91 = scmp.eq.s32.totalorder %s18, 0
      %p92 = por %p90, %p91
      %p93 = scmp.ne.s32.totalorder %s85, %s87
      %p94 = scmp.eq.s32.totalorder %s23, 1
      %p95 = por %p93, %p94
      %p96 = scmp.ne.s32.totalorder %s87, %s88
      %p97 = scmp.eq.s32.totalorder %s23, 0
      %p98 = por %p96, %p97
      %p99 = scmp.ne.s32.totalorder %s87, %s88
      %p100 = scmp.eq.s32.totalorder %s24, 1
      %p101 = por %p99, %p100
      %p103 = scmp.ne.s32.totalorder %s88, %s102
      %p104 = scmp.eq.s32.totalorder %s24, 0
      %p105 = por %p103, %p104
      %s107 = sadd.s32 %s106, 1
      %p110 = scmp.eq.s32.totalorder %s18, 1
      %p111 = scmp.ne.s32.totalorder %s106, %s108
      %p112 = scmp.eq.s32.totalorder %s18, 0
      %p113 = por %p111, %p112
      %p114 = scmp.ne.s32.totalorder %s106, %s108
      %p115 = scmp.eq.s32.totalorder %s23, 1
      %p116 = por %p114, %p115
      %p117 = scmp.ne.s32.totalorder %s108, %s109
      %p118 = scmp.eq.s32.totalorder %s23, 0
      %p119 = por %p117, %p118
      %p120 = scmp.ne.s32.totalorder %s108, %s109
      %p121 = scmp.eq.s32.totalorder %s24, 1
      %p122 = por %p120, %p121
      %p124 = scmp.ne.s32.totalorder %s109, %s123
      %p125 = scmp.eq.s32.totalorder %s24, 0
      %p126 = por %p124, %p125
      %s128 = sadd.s32 %s127, 1
      %p131 = scmp.eq.s32.totalorder %s18, 1
      %p132 = scmp.ne.s32.totalorder %s127, %s129
      %p133 = scmp.eq.s32.totalorder %s18, 0
      %p134 = por %p132, %p133
      %p135 = scmp.ne.s32.totalorder %s127, %s129
      %p136 = scmp.eq.s32.totalorder %s23, 1
      %p137 = por %p135, %p136
      %p138 = scmp.ne.s32.totalorder %s129, %s130
      %p139 = scmp.eq.s32.totalorder %s23, 0
      %p140 = por %p138, %p139
      %p141 = scmp.ne.s32.totalorder %s129, %s130
      %p142 = scmp.eq.s32.totalorder %s24, 1
      %p143 = por %p141, %p142
      %p145 = scmp.ne.s32.totalorder %s130, %s144
      %p146 = scmp.eq.s32.totalorder %s24, 0
      %p147 = por %p145, %p146
      %s148 = ssub.s32 %s25, %s37
      %s149 = ssub.s32 %s26, %s33
      %s150 = sor.u32 %s148, %s149
      %p151 = scmp.eq.s32.totalorder %s150, 0
      %s153 = sadd.s32 %s152, 1
      %s154 = scalar_select %p151, %s152, %s153
      %p157 = pneg %p151
      %p158 = scmp.eq.s32.totalorder %s18, 1
      %p159 = por %p157, %p158
      %p160 = scmp.ne.s32.totalorder %s152, %s155
      %p161 = scmp.eq.s32.totalorder %s18, 0
      %p162 = por %p160, %p161
      %p163 = scmp.ne.s32.totalorder %s152, %s155
      %p164 = scmp.eq.s32.totalorder %s23, 1
      %p165 = por %p163, %p164
      %p166 = scmp.ne.s32.totalorder %s155, %s156
      %p167 = scmp.eq.s32.totalorder %s23, 0
      %p168 = por %p166, %p167
      %p169 = scmp.ne.s32.totalorder %s155, %s156
      %p170 = scmp.eq.s32.totalorder %s24, 1
      %p171 = por %p169, %p170
      %p173 = scmp.ne.s32.totalorder %s156, %s172
      %p174 = scmp.eq.s32.totalorder %s24, 0
      %p175 = por %p173, %p174
      %p176 = scmp.le.s32.totalorder 1, %s18
      %p177 = scmp.lt.s32.totalorder %s18, 3
      %p178 = pnand %p176, %p177
      %p179 = pneg %p178
      // Predicated region
      $region9: #{tpu_custom_call.1} parent=5 // pred_check
        _
      $region10: #{tpu_custom_call.1} parent=5 // pred_check_branch
        %181 = sbr.rel (%p178) target = $region12
      $region11: #{tpu_custom_call.1} parent=5 // pred_region
        %s182 = ssub.s32 %s18, 1
        // Predicated region
        $region13: #{tpu_custom_call.1} parent=11 // pred_check
          %p183 = pneg %p77
        $region14: #{tpu_custom_call.1} parent=11 // pred_check_branch
          %185 = sbr.rel (%p183) target = $region16
        $region15: #{tpu_custom_call.1} parent=11 // pred_region
          %s187 = ssub.s32 18432, 18432
          %188 = vsyncadd [#allocation7], %s187
          %s189 = sshll.u32 [#allocation6], 4
          %s190 = int_to_ptr.vmem [resolvable:$true] %s189
          %195 = dma.hbm_to_vmem [thread:$0]  %s1, 18432, %s190, [#allocation7], 128, 128, 8
        $region16: #{tpu_custom_call.1} parent=11 // pred_fallthru
          _
        // Predicated region
        $region17: #{tpu_custom_call.1} parent=11 // pred_check
          %p196 = pneg %p98
        $region18: #{tpu_custom_call.1} parent=11 // pred_check_branch
          %198 = sbr.rel (%p196) target = $region20
        $region19: #{tpu_custom_call.1} parent=11 // pred_region
          _
        $region20: #{tpu_custom_call.1} parent=11 // pred_fallthru
          _
        // Predicated region
        $region21: #{tpu_custom_call.1} parent=11 // pred_check
          %p199 = pneg %p119
        $region22: #{tpu_custom_call.1} parent=11 // pred_check_branch
          %201 = sbr.rel (%p199) target = $region24
        $region23: #{tpu_custom_call.1} parent=11 // pred_region
          %s203 = ssub.s32 2048, 2048
          %204 = vsyncadd [#allocation7], %s203
          %s205 = sshll.u32 [#allocation8], 4
          %s206 = int_to_ptr.vmem [resolvable:$true] %s205
          %211 = dma.hbm_to_vmem [thread:$0]  %s3, 2048, %s206, [#allocation7], 64, 64, 4
        $region24: #{tpu_custom_call.1} parent=11 // pred_fallthru
          _
        // Predicated region
        $region25: #{tpu_custom_call.1} parent=11 // pred_check
          %p212 = pneg %p140
        $region26: #{tpu_custom_call.1} parent=11 // pred_check_branch
          %214 = sbr.rel (%p212) target = $region28
        $region27: #{tpu_custom_call.1} parent=11 // pred_region
          _
        $region28: #{tpu_custom_call.1} parent=11 // pred_fallthru
          _
      $region12: #{tpu_custom_call.1} parent=5 // pred_fallthru
        _
      %p215 = scmp.lt.s32.totalorder %s18, 2
      // Predicated region
      $region29: #{tpu_custom_call.1} parent=5 // pred_check
        %p216 = pneg %p215
      $region30: #{tpu_custom_call.1} parent=5 // pred_check_branch
        %218 = sbr.rel (%p216) target = $region32
      $region31: #{tpu_custom_call.1} parent=5 // pred_region
        // Predicated region
        $region33: #{tpu_custom_call.1} parent=31 // pred_check
          %p219 = pneg %p50
        $region34: #{tpu_custom_call.1} parent=31 // pred_check_branch
          %221 = sbr.rel (%p219) target = $region36
        $region35: #{tpu_custom_call.1} parent=31 // pred_region
          %s222 = sand.u32 %s40, 1
          %s223 = scalar_lea.sflag [#allocation4], %s222
          %s224 = sand.u32 %s40, 1
          %s225 = smul.addr %s224, 208
          %s226 = scalar_lea.vmem [#allocation3], %s225
          %s228 = ssub.s32 3328, 3328
          %229 = vsyncadd %s223, %s228
          %s230 = smul.addr %s25, 26
          %s231 = smul.addr %s230, 128
          %s232 = scalar_lea.hbm %s0, %s231
          %s233 = sshll.u32 %s226, 4
          %s234 = int_to_ptr.vmem [resolvable:$true] %s233
          %239 = dma.hbm_to_vmem [thread:$0]  %s232, 3328, %s234, %s223, 128, 128, 8
        $region36: #{tpu_custom_call.1} parent=31 // pred_fallthru
          _
      $region32: #{tpu_custom_call.1} parent=5 // pred_fallthru
        _
      %p240 = scmp.le.s32.totalorder 1, %s18
      %p241 = scmp.lt.s32.totalorder %s18, 3
      %p242 = pnand %p240, %p241
      %p243 = pneg %p242
      // Predicated region
      $region37: #{tpu_custom_call.1} parent=5 // pred_check
        _
      $region38: #{tpu_custom_call.1} parent=5 // pred_check_branch
        %245 = sbr.rel (%p242) target = $region40
      $region39: #{tpu_custom_call.1} parent=5 // pred_region
        %s246 = ssub.s32 %s18, 1
        %s247 = sand.u32 %s43, 1
        %s248 = scalar_lea.sflag [#allocation4], %s247
        %s249 = sand.u32 %s43, 1
        %s250 = smul.addr %s249, 208
        %s251 = scalar_lea.vmem [#allocation3], %s250
        // Predicated region
        $region41: #{tpu_custom_call.1} parent=39 // pred_check
          %p252 = pneg %p56
        $region42: #{tpu_custom_call.1} parent=39 // pred_check_branch
          %254 = sbr.rel (%p252) target = $region44
        $region43: #{tpu_custom_call.1} parent=39 // pred_region
          %255 = dma.done %s248, 3328
        $region44: #{tpu_custom_call.1} parent=39 // pred_fallthru
          _
        // Predicated region
        $region45: #{tpu_custom_call.1} parent=39 // pred_check
          %p256 = pneg %p77
        $region46: #{tpu_custom_call.1} parent=39 // pred_check_branch
          %258 = sbr.rel (%p256) target = $region48
        $region47: #{tpu_custom_call.1} parent=39 // pred_region
          %259 = dma.done [#allocation7], 18432
        $region48: #{tpu_custom_call.1} parent=39 // pred_fallthru
          _
        // Predicated region
        $region49: #{tpu_custom_call.1} parent=39 // pred_check
          %p260 = pneg %p119
        $region50: #{tpu_custom_call.1} parent=39 // pred_check_branch
          %262 = sbr.rel (%p260) target = $region52
        $region51: #{tpu_custom_call.1} parent=39 // pred_region
          %263 = dma.done [#allocation7], 2048
        $region52: #{tpu_custom_call.1} parent=39 // pred_fallthru
          _
        %s264 = sand.u32 %s43, 1
        %s265 = scalar_lea.sflag [#allocation4], %s264
        %s266 = sand.u32 %s43, 1
        %s267 = smul.addr %s266, 208
        %s268 = scalar_lea.vmem [#allocation3], %s267
        %p269 = pneg %p56
        %p270 = pneg %p53
        %p271 = pneg %p77
        %p272 = pneg %p74
        %p273 = pneg %p98
        %p274 = pneg %p95
        %p275 = pneg %p119
        %p276 = pneg %p116
        %p277 = pneg %p140
        %p278 = pneg %p137
        %p279 = pneg %p168
        %p280 = pneg %p165
        %s281 = sand.u32 %s155, 1
        %s282 = scalar_lea.sflag [#allocation5], %s281
        %s283 = sand.u32 %s155, 1
        %s284 = smul.addr %s283, 200
        %s285 = scalar_lea.vmem [#allocation9], %s284
        %s286 = smul.u32 25, %s28
        %s288 = smul.u32 %s28, 200
        %s289 = scalar_lea.vmem %s251, %s288 [#allocation3]
        %v290 = vld [vmem:[%s289] sm:$0xff]
        %v291 = vld [vmem:[%s289 + $0x8] sm:$0xff]
        %v292 = vld [vmem:[%s289 + $0x10] sm:$0xff]
        %v293 = vld [vmem:[%s289 + $0x18] sm:$0xff]
        %v294 = vld [vmem:[%s289 + $0x20] sm:$0xff]
        %v295 = vld [vmem:[%s289 + $0x28] sm:$0xff]
        %v296 = vld [vmem:[%s289 + $0x30] sm:$0xff]
        %v297 = vld [vmem:[%s289 + $0x38] sm:$0xff]
        %v298 = vld [vmem:[%s289 + $0x40] sm:$0xff]
        %v299 = vld [vmem:[%s289 + $0x48] sm:$0xff]
        %v300 = vld [vmem:[%s289 + $0x50] sm:$0xff]
        %v301 = vld [vmem:[%s289 + $0x58] sm:$0xff]
        %v302 = vld [vmem:[%s289 + $0x60] sm:$0xff]
        %v303 = vld [vmem:[%s289 + $0x68] sm:$0xff]
        %v304 = vld [vmem:[%s289 + $0x70] sm:$0xff]
        %v305 = vld [vmem:[%s289 + $0x78] sm:$0xff]
        %v306 = vld [vmem:[%s289 + $0x80] sm:$0xff]
        %v307 = vld [vmem:[%s289 + $0x88] sm:$0xff]
        %v308 = vld [vmem:[%s289 + $0x90] sm:$0xff]
        %v309 = vld [vmem:[%s289 + $0x98] sm:$0xff]
        %v310 = vld [vmem:[%s289 + $0xa0] sm:$0xff]
        %v311 = vld [vmem:[%s289 + $0xa8] sm:$0xff]
        %v312 = vld [vmem:[%s289 + $0xb0] sm:$0xff]
        %v313 = vld [vmem:[%s289 + $0xb8] sm:$0xff]
        %v314 = vld [vmem:[%s289 + $0xc0] sm:$0xff]
        %v315 = vld [vmem:[%s289 + $0xc8] sm:$0xff]
        %v316 = vpack.c.bf16 %v291, %v290
        %v317 = vpack.c.bf16 %v293, %v292
        %v318 = vpack.c.bf16 %v295, %v294
        %v319 = vpack.c.bf16 %v297, %v296
        %v320 = vpack.c.bf16 %v299, %v298
        %v321 = vpack.c.bf16 %v301, %v300
        %v322 = vpack.c.bf16 %v303, %v302
        %v323 = vpack.c.bf16 %v305, %v304
        %v324 = vpack.c.bf16 %v307, %v306
        %v325 = vpack.c.bf16 %v309, %v308
        %v326 = vpack.c.bf16 %v311, %v310
        %v327 = vpack.c.bf16 %v313, %v312
        %v328 = vpack.c.bf16 %v314, %v314
        %v342 = vunpack.c.l.b16 %v316
        %v343 = vunpack.c.h.b16 %v316
        %v344 = vunpack.c.l.b16 %v317
        %v345 = vunpack.c.h.b16 %v317
        %v346 = vunpack.c.l.b16 %v318
        %v347 = vunpack.c.h.b16 %v318
        %v348 = vunpack.c.l.b16 %v319
        %v349 = vunpack.c.h.b16 %v319
        %v350 = vunpack.c.l.b16 %v320
        %v351 = vunpack.c.h.b16 %v320
        %v352 = vunpack.c.l.b16 %v321
        %v353 = vunpack.c.h.b16 %v321
        %v354 = vunpack.c.l.b16 %v322
        %v355 = vunpack.c.h.b16 %v322
        %v356 = vunpack.c.l.b16 %v323
        %v357 = vunpack.c.h.b16 %v323
        %v358 = vunpack.c.l.b16 %v324
        %v359 = vunpack.c.h.b16 %v324
        %v360 = vunpack.c.l.b16 %v325
        %v361 = vunpack.c.h.b16 %v325
        %v362 = vunpack.c.l.b16 %v326
        %v363 = vunpack.c.h.b16 %v326
        %v364 = vunpack.c.l.b16 %v327
        %v365 = vunpack.c.h.b16 %v327
        %v366 = vunpack.c.l.b16 %v328
        %v367 = vpack.c.b16 %v342, %v342
        %v368 = vpack.c.b16 %v343, %v343
        %v369 = vpack.c.b16 %v344, %v344
        %v370 = vpack.c.b16 %v345, %v345
        %v371 = vpack.c.b16 %v346, %v346
        %v372 = vpack.c.b16 %v347, %v347
        %v373 = vpack.c.b16 %v348, %v348
        %v374 = vpack.c.b16 %v349, %v349
        %v375 = vpack.c.b16 %v350, %v350
        %v376 = vpack.c.b16 %v351, %v351
        %v377 = vpack.c.b16 %v352, %v352
        %v378 = vpack.c.b16 %v353, %v353
        %v379 = vpack.c.b16 %v354, %v354
        %v380 = vpack.c.b16 %v355, %v355
        %v381 = vpack.c.b16 %v356, %v356
        %v382 = vpack.c.b16 %v357, %v357
        %v383 = vpack.c.b16 %v358, %v358
        %v384 = vpack.c.b16 %v359, %v359
        %v385 = vpack.c.b16 %v360, %v360
        %v386 = vpack.c.b16 %v361, %v361
        %v387 = vpack.c.b16 %v362, %v362
        %v388 = vpack.c.b16 %v363, %v363
        %v389 = vpack.c.b16 %v364, %v364
        %v390 = vpack.c.b16 %v365, %v365
        %v391 = vpack.c.b16 %v366, %v366
        %417 = vst [vmem:[#allocation2] sm:$0xf] %v367
        %418 = vst [vmem:[#allocation2 + $0x24] sm:$0xf] %v368
        %419 = vst [vmem:[#allocation2 + $0x48] sm:$0xf] %v369
        %420 = vst [vmem:[#allocation2 + $0x6c] sm:$0xf] %v370
        %421 = vst [vmem:[#allocation2 + $0x90] sm:$0xf] %v371
        %422 = vst [vmem:[#allocation2 + $0xb4] sm:$0xf] %v372
        %423 = vst [vmem:[#allocation2 + $0xd8] sm:$0xf] %v373
        %424 = vst [vmem:[#allocation2 + $0xfc] sm:$0xf] %v374
        %425 = vst [vmem:[#allocation2 + $0x120] sm:$0xf] %v375
        %426 = vst [vmem:[#allocation2 + $0x144] sm:$0xf] %v376
        %427 = vst [vmem:[#allocation2 + $0x168] sm:$0xf] %v377
        %428 = vst [vmem:[#allocation2 + $0x18c] sm:$0xf] %v378
        %429 = vst [vmem:[#allocation2 + $0x1b0] sm:$0xf] %v379
        %430 = vst [vmem:[#allocation2 + $0x1d4] sm:$0xf] %v380
        %431 = vst [vmem:[#allocation2 + $0x1f8] sm:$0xf] %v381
        %432 = vst [vmem:[#allocation2 + $0x21c] sm:$0xf] %v382
        %433 = vst [vmem:[#allocation2 + $0x240] sm:$0xf] %v383
        %434 = vst [vmem:[#allocation2 + $0x264] sm:$0xf] %v384
        %435 = vst [vmem:[#allocation2 + $0x288] sm:$0xf] %v385
        %436 = vst [vmem:[#allocation2 + $0x2ac] sm:$0xf] %v386
        %437 = vst [vmem:[#allocation2 + $0x2d0] sm:$0xf] %v387
        %438 = vst [vmem:[#allocation2 + $0x2f4] sm:$0xf] %v388
        %439 = vst [vmem:[#allocation2 + $0x318] sm:$0xf] %v389
        %440 = vst [vmem:[#allocation2 + $0x33c] sm:$0xf] %v390
        %441 = vst [vmem:[#allocation2 + $0x360] sm:$0xf] %v391
        %v442 = vpack.c.bf16 %v315, %v314
        %v444 = vunpack.c.l.b16 %v442
        %v445 = vunpack.c.h.b16 %v442
        %v446 = vpack.c.b16 %v444, %v444
        %v447 = vpack.c.b16 %v445, %v445
        %vm448 = vsmask.f32 3328
        %vm449 = vsmask.f32 7440
        %vm450 = vmor %vm448, %vm449
        %v452 = vshrl.u32 %v367, 16
        %v454 = vrot.slane %v452, 4
        %v455 = vshll.u32 %v367, 16
        %v457 = vrot.slane %v455, 5
        %v458 = vor.u32 %v454, %v457
        %v459 = vrot.slane %v458, 4
        %v461 = vshll.u32 %v368, 16
        %v463 = vrot.slane %v461, 5
        %v464 = vsel %vm450, %v459, %v463
        %v465 = vshrl.u32 %v368, 16
        %v467 = vrot.slane %v465, 4
        %v468 = vor.u32 %v467, %v463
        %v469 = vrot.slane %v468, 4
        %v471 = vshll.u32 %v369, 16
        %v473 = vrot.slane %v471, 5
        %v474 = vsel %vm450, %v469, %v473
        %v475 = vshrl.u32 %v369, 16
        %v477 = vrot.slane %v475, 4
        %v478 = vor.u32 %v477, %v473
        %v479 = vrot.slane %v478, 4
        %v481 = vshll.u32 %v370, 16
        %v483 = vrot.slane %v481, 5
        %v484 = vsel %vm450, %v479, %v483
        %v485 = vshrl.u32 %v370, 16
        %v487 = vrot.slane %v485, 4
        %v488 = vor.u32 %v487, %v483
        %v489 = vrot.slane %v488, 4
        %v491 = vshll.u32 %v371, 16
        %v493 = vrot.slane %v491, 5
        %v494 = vsel %vm450, %v489, %v493
        %v495 = vshrl.u32 %v371, 16
        %v497 = vrot.slane %v495, 4
        %v498 = vor.u32 %v497, %v493
        %v499 = vrot.slane %v498, 4
        %v501 = vshll.u32 %v372, 16
        %v503 = vrot.slane %v501, 5
        %v504 = vsel %vm450, %v499, %v503
        %v505 = vshrl.u32 %v372, 16
        %v507 = vrot.slane %v505, 4
        %v508 = vor.u32 %v507, %v503
        %v509 = vrot.slane %v508, 4
        %v511 = vshll.u32 %v373, 16
        %v513 = vrot.slane %v511, 5
        %v514 = vsel %vm450, %v509, %v513
        %v515 = vshrl.u32 %v373, 16
        %v517 = vrot.slane %v515, 4
        %v518 = vor.u32 %v517, %v513
        %v519 = vrot.slane %v518, 4
        %v521 = vshll.u32 %v374, 16
        %v523 = vrot.slane %v521, 5
        %v524 = vsel %vm450, %v519, %v523
        %v525 = vshrl.u32 %v374, 16
        %v527 = vrot.slane %v525, 4
        %v528 = vor.u32 %v527, %v523
        %v529 = vrot.slane %v528, 4
        %v531 = vshll.u32 %v375, 16
        %v533 = vrot.slane %v531, 5
        %v534 = vsel %vm450, %v529, %v533
        %v535 = vshrl.u32 %v375, 16
        %v537 = vrot.slane %v535, 4
        %v538 = vor.u32 %v537, %v533
        %v539 = vrot.slane %v538, 4
        %v541 = vshll.u32 %v376, 16
        %v543 = vrot.slane %v541, 5
        %v544 = vsel %vm450, %v539, %v543
        %v545 = vshrl.u32 %v376, 16
        %v547 = vrot.slane %v545, 4
        %v548 = vor.u32 %v547, %v543
        %v549 = vrot.slane %v548, 4
        %v551 = vshll.u32 %v377, 16
        %v553 = vrot.slane %v551, 5
        %v554 = vsel %vm450, %v549, %v553
        %v555 = vshrl.u32 %v377, 16
        %v557 = vrot.slane %v555, 4
        %v558 = vor.u32 %v557, %v553
        %v559 = vrot.slane %v558, 4
        %v561 = vshll.u32 %v378, 16
        %v563 = vrot.slane %v561, 5
        %v564 = vsel %vm450, %v559, %v563
        %v565 = vshrl.u32 %v378, 16
        %v567 = vrot.slane %v565, 4
        %v568 = vor.u32 %v567, %v563
        %v569 = vrot.slane %v568, 4
        %v571 = vshll.u32 %v379, 16
        %v573 = vrot.slane %v571, 5
        %v574 = vsel %vm450, %v569, %v573
        %v575 = vshrl.u32 %v379, 16
        %v577 = vrot.slane %v575, 4
        %v578 = vor.u32 %v577, %v573
        %v579 = vrot.slane %v578, 4
        %v581 = vshll.u32 %v380, 16
        %v583 = vrot.slane %v581, 5
        %v584 = vsel %vm450, %v579, %v583
        %v585 = vshrl.u32 %v380, 16
        %v587 = vrot.slane %v585, 4
        %v588 = vor.u32 %v587, %v583
        %v589 = vrot.slane %v588, 4
        %v591 = vshll.u32 %v381, 16
        %v593 = vrot.slane %v591, 5
        %v594 = vsel %vm450, %v589, %v593
        %v595 = vshrl.u32 %v381, 16
        %v597 = vrot.slane %v595, 4
        %v598 = vor.u32 %v597, %v593
        %v599 = vrot.slane %v598, 4
        %v601 = vshll.u32 %v382, 16
        %v603 = vrot.slane %v601, 5
        %v604 = vsel %vm450, %v599, %v603
        %v605 = vshrl.u32 %v382, 16
        %v607 = vrot.slane %v605, 4
        %v608 = vor.u32 %v607, %v603
        %v609 = vrot.slane %v608, 4
        %v611 = vshll.u32 %v383, 16
        %v613 = vrot.slane %v611, 5
        %v614 = vsel %vm450, %v609, %v613
        %v615 = vshrl.u32 %v383, 16
        %v617 = vrot.slane %v615, 4
        %v618 = vor.u32 %v617, %v613
        %v619 = vrot.slane %v618, 4
        %v621 = vshll.u32 %v384, 16
        %v623 = vrot.slane %v621, 5
        %v624 = vsel %vm450, %v619, %v623
        %v625 = vshrl.u32 %v384, 16
        %v627 = vrot.slane %v625, 4
        %v628 = vor.u32 %v627, %v623
        %v629 = vrot.slane %v628, 4
        %v631 = vshll.u32 %v385, 16
        %v633 = vrot.slane %v631, 5
        %v634 = vsel %vm450, %v629, %v633
        %v635 = vshrl.u32 %v385, 16
        %v637 = vrot.slane %v635, 4
        %v638 = vor.u32 %v637, %v633
        %v639 = vrot.slane %v638, 4
        %v641 = vshll.u32 %v386, 16
        %v643 = vrot.slane %v641, 5
        %v644 = vsel %vm450, %v639, %v643
        %v645 = vshrl.u32 %v386, 16
        %v647 = vrot.slane %v645, 4
        %v648 = vor.u32 %v647, %v643
        %v649 = vrot.slane %v648, 4
        %v651 = vshll.u32 %v387, 16
        %v653 = vrot.slane %v651, 5
        %v654 = vsel %vm450, %v649, %v653
        %v655 = vshrl.u32 %v387, 16
        %v657 = vrot.slane %v655, 4
        %v658 = vor.u32 %v657, %v653
        %v659 = vrot.slane %v658, 4
        %v661 = vshll.u32 %v388, 16
        %v663 = vrot.slane %v661, 5
        %v664 = vsel %vm450, %v659, %v663
        %v665 = vshrl.u32 %v388, 16
        %v667 = vrot.slane %v665, 4
        %v668 = vor.u32 %v667, %v663
        %v669 = vrot.slane %v668, 4
        %v671 = vshll.u32 %v389, 16
        %v673 = vrot.slane %v671, 5
        %v674 = vsel %vm450, %v669, %v673
        %v675 = vshrl.u32 %v389, 16
        %v677 = vrot.slane %v675, 4
        %v678 = vor.u32 %v677, %v673
        %v679 = vrot.slane %v678, 4
        %v681 = vshll.u32 %v390, 16
        %v683 = vrot.slane %v681, 5
        %v684 = vsel %vm450, %v679, %v683
        %v685 = vshrl.u32 %v390, 16
        %v687 = vrot.slane %v685, 4
        %v688 = vor.u32 %v687, %v683
        %v689 = vrot.slane %v688, 4
        %v691 = vshll.u32 %v446, 16
        %v693 = vrot.slane %v691, 5
        %v694 = vsel %vm450, %v689, %v693
        %v695 = vshrl.u32 %v446, 16
        %v697 = vrot.slane %v695, 4
        %v698 = vor.u32 %v697, %v693
        %v699 = vrot.slane %v698, 4
        %v701 = vshll.u32 %v447, 16
        %v703 = vrot.slane %v701, 5
        %v704 = vsel %vm450, %v699, %v703
        %730 = vst [vmem:[#allocation2 + $0x4] sm:$0xf] %v464
        %731 = vst [vmem:[#allocation2 + $0x28] sm:$0xf] %v474
        %732 = vst [vmem:[#allocation2 + $0x4c] sm:$0xf] %v484
        %733 = vst [vmem:[#allocation2 + $0x70] sm:$0xf] %v494
        %734 = vst [vmem:[#allocation2 + $0x94] sm:$0xf] %v504
        %735 = vst [vmem:[#allocation2 + $0xb8] sm:$0xf] %v514
        %736 = vst [vmem:[#allocation2 + $0xdc] sm:$0xf] %v524
        %737 = vst [vmem:[#allocation2 + $0x100] sm:$0xf] %v534
        %738 = vst [vmem:[#allocation2 + $0x124] sm:$0xf] %v544
        %739 = vst [vmem:[#allocation2 + $0x148] sm:$0xf] %v554
        %740 = vst [vmem:[#allocation2 + $0x16c] sm:$0xf] %v564
        %741 = vst [vmem:[#allocation2 + $0x190] sm:$0xf] %v574
        %742 = vst [vmem:[#allocation2 + $0x1b4] sm:$0xf] %v584
        %743 = vst [vmem:[#allocation2 + $0x1d8] sm:$0xf] %v594
        %744 = vst [vmem:[#allocation2 + $0x1fc] sm:$0xf] %v604
        %745 = vst [vmem:[#allocation2 + $0x220] sm:$0xf] %v614
        %746 = vst [vmem:[#allocation2 + $0x244] sm:$0xf] %v624
        %747 = vst [vmem:[#allocation2 + $0x268] sm:$0xf] %v634
        %748 = vst [vmem:[#allocation2 + $0x28c] sm:$0xf] %v644
        %749 = vst [vmem:[#allocation2 + $0x2b0] sm:$0xf] %v654
        %750 = vst [vmem:[#allocation2 + $0x2d4] sm:$0xf] %v664
        %751 = vst [vmem:[#allocation2 + $0x2f8] sm:$0xf] %v674
        %752 = vst [vmem:[#allocation2 + $0x31c] sm:$0xf] %v684
        %753 = vst [vmem:[#allocation2 + $0x340] sm:$0xf] %v694
        %754 = vst [vmem:[#allocation2 + $0x364] sm:$0xf] %v704
        %vm755 = vcmask 1042432
        %vm756 = vcmask 1046532
        %vm757 = vmor %vm755, %vm756
        %v758 = vrot.slane %v367, 5
        %v759 = vrot.slane %v758, 4
        %v760 = vrot.slane %v368, 5
        %v761 = vsel %vm757, %v759, %v760
        %v762 = vrot.slane %v760, 4
        %v763 = vrot.slane %v369, 5
        %v764 = vsel %vm757, %v762, %v763
        %v765 = vrot.slane %v763, 4
        %v766 = vrot.slane %v370, 5
        %v767 = vsel %vm757, %v765, %v766
        %v768 = vrot.slane %v766, 4
        %v769 = vrot.slane %v371, 5
        %v770 = vsel %vm757, %v768, %v769
        %v771 = vrot.slane %v769, 4
        %v772 = vrot.slane %v372, 5
        %v773 = vsel %vm757, %v771, %v772
        %v774 = vrot.slane %v772, 4
        %v775 = vrot.slane %v373, 5
        %v776 = vsel %vm757, %v774, %v775
        %v777 = vrot.slane %v775, 4
        %v778 = vrot.slane %v374, 5
        %v779 = vsel %vm757, %v777, %v778
        %v780 = vrot.slane %v778, 4
        %v781 = vrot.slane %v375, 5
        %v782 = vsel %vm757, %v780, %v781
        %v783 = vrot.slane %v781, 4
        %v784 = vrot.slane %v376, 5
        %v785 = vsel %vm757, %v783, %v784
        %v786 = vrot.slane %v784, 4
        %v787 = vrot.slane %v377, 5
        %v788 = vsel %vm757, %v786, %v787
        %v789 = vrot.slane %v787, 4
        %v790 = vrot.slane %v378, 5
        %v791 = vsel %vm757, %v789, %v790
        %v792 = vrot.slane %v790, 4
        %v793 = vrot.slane %v379, 5
        %v794 = vsel %vm757, %v792, %v793
        %v795 = vrot.slane %v793, 4
        %v796 = vrot.slane %v380, 5
        %v797 = vsel %vm757, %v795, %v796
        %v798 = vrot.slane %v796, 4
        %v799 = vrot.slane %v381, 5
        %v800 = vsel %vm757, %v798, %v799
        %v801 = vrot.slane %v799, 4
        %v802 = vrot.slane %v382, 5
        %v803 = vsel %vm757, %v801, %v802
        %v804 = vrot.slane %v802, 4
        %v805 = vrot.slane %v383, 5
        %v806 = vsel %vm757, %v804, %v805
        %v807 = vrot.slane %v805, 4
        %v808 = vrot.slane %v384, 5
        %v809 = vsel %vm757, %v807, %v808
        %v810 = vrot.slane %v808, 4
        %v811 = vrot.slane %v385, 5
        %v812 = vsel %vm757, %v810, %v811
        %v813 = vrot.slane %v811, 4
        %v814 = vrot.slane %v386, 5
        %v815 = vsel %vm757, %v813, %v814
        %v816 = vrot.slane %v814, 4
        %v817 = vrot.slane %v387, 5
        %v818 = vsel %vm757, %v816, %v817
        %v819 = vrot.slane %v817, 4
        %v820 = vrot.slane %v388, 5
        %v821 = vsel %vm757, %v819, %v820
        %v822 = vrot.slane %v820, 4
        %v823 = vrot.slane %v389, 5
        %v824 = vsel %vm757, %v822, %v823
        %v825 = vrot.slane %v823, 4
        %v826 = vrot.slane %v390, 5
        %v827 = vsel %vm757, %v825, %v826
        %v828 = vrot.slane %v826, 4
        %v829 = vrot.slane %v446, 5
        %v830 = vsel %vm757, %v828, %v829
        %v831 = vrot.slane %v829, 4
        %v832 = vrot.slane %v447, 5
        %v833 = vsel %vm757, %v831, %v832
        %859 = vst [vmem:[#allocation2 + $0x8] sm:$0xf] %v761
        %860 = vst [vmem:[#allocation2 + $0x2c] sm:$0xf] %v764
        %861 = vst [vmem:[#allocation2 + $0x50] sm:$0xf] %v767
        %862 = vst [vmem:[#allocation2 + $0x74] sm:$0xf] %v770
        %863 = vst [vmem:[#allocation2 + $0x98] sm:$0xf] %v773
        %864 = vst [vmem:[#allocation2 + $0xbc] sm:$0xf] %v776
        %865 = vst [vmem:[#allocation2 + $0xe0] sm:$0xf] %v779
        %866 = vst [vmem:[#allocation2 + $0x104] sm:$0xf] %v782
        %867 = vst [vmem:[#allocation2 + $0x128] sm:$0xf] %v785
        %868 = vst [vmem:[#allocation2 + $0x14c] sm:$0xf] %v788
        %869 = vst [vmem:[#allocation2 + $0x170] sm:$0xf] %v791
        %870 = vst [vmem:[#allocation2 + $0x194] sm:$0xf] %v794
        %871 = vst [vmem:[#allocation2 + $0x1b8] sm:$0xf] %v797
        %872 = vst [vmem:[#allocation2 + $0x1dc] sm:$0xf] %v800
        %873 = vst [vmem:[#allocation2 + $0x200] sm:$0xf] %v803
        %874 = vst [vmem:[#allocation2 + $0x224] sm:$0xf] %v806
        %875 = vst [vmem:[#allocation2 + $0x248] sm:$0xf] %v809
        %876 = vst [vmem:[#allocation2 + $0x26c] sm:$0xf] %v812
        %877 = vst [vmem:[#allocation2 + $0x290] sm:$0xf] %v815
        %878 = vst [vmem:[#allocation2 + $0x2b4] sm:$0xf] %v818
        %879 = vst [vmem:[#allocation2 + $0x2d8] sm:$0xf] %v821
        %880 = vst [vmem:[#allocation2 + $0x2fc] sm:$0xf] %v824
        %881 = vst [vmem:[#allocation2 + $0x320] sm:$0xf] %v827
        %882 = vst [vmem:[#allocation2 + $0x344] sm:$0xf] %v830
        %883 = vst [vmem:[#allocation2 + $0x368] sm:$0xf] %v833
        %vm884 = vsmask.f32 2304
        %vm885 = vsmask.f32 6416
        %vm886 = vmor %vm884, %vm885
        %v887 = vrot.slane %v452, 5
        %v888 = vrot.slane %v455, 6
        %v889 = vor.u32 %v887, %v888
        %v890 = vrot.slane %v889, 4
        %v891 = vrot.slane %v465, 5
        %v892 = vrot.slane %v461, 6
        %v893 = vor.u32 %v891, %v892
        %v894 = vsel %vm886, %v890, %v893
        %v895 = vrot.slane %v893, 4
        %v896 = vrot.slane %v475, 5
        %v897 = vrot.slane %v471, 6
        %v898 = vor.u32 %v896, %v897
        %v899 = vsel %vm886, %v895, %v898
        %v900 = vrot.slane %v898, 4
        %v901 = vrot.slane %v485, 5
        %v902 = vrot.slane %v481, 6
        %v903 = vor.u32 %v901, %v902
        %v904 = vsel %vm886, %v900, %v903
        %v905 = vrot.slane %v903, 4
        %v906 = vrot.slane %v495, 5
        %v907 = vrot.slane %v491, 6
        %v908 = vor.u32 %v906, %v907
        %v909 = vsel %vm886, %v905, %v908
        %v910 = vrot.slane %v908, 4
        %v911 = vrot.slane %v505, 5
        %v912 = vrot.slane %v501, 6
        %v913 = vor.u32 %v911, %v912
        %v914 = vsel %vm886, %v910, %v913
        %v915 = vrot.slane %v913, 4
        %v916 = vrot.slane %v515, 5
        %v917 = vrot.slane %v511, 6
        %v918 = vor.u32 %v916, %v917
        %v919 = vsel %vm886, %v915, %v918
        %v920 = vrot.slane %v918, 4
        %v921 = vrot.slane %v525, 5
        %v922 = vrot.slane %v521, 6
        %v923 = vor.u32 %v921, %v922
        %v924 = vsel %vm886, %v920, %v923
        %v925 = vrot.slane %v923, 4
        %v926 = vrot.slane %v535, 5
        %v927 = vrot.slane %v531, 6
        %v928 = vor.u32 %v926, %v927
        %v929 = vsel %vm886, %v925, %v928
        %v930 = vrot.slane %v928, 4
        %v931 = vrot.slane %v545, 5
        %v932 = vrot.slane %v541, 6
        %v933 = vor.u32 %v931, %v932
        %v934 = vsel %vm886, %v930, %v933
        %v935 = vrot.slane %v933, 4
        %v936 = vrot.slane %v555, 5
        %v937 = vrot.slane %v551, 6
        %v938 = vor.u32 %v936, %v937
        %v939 = vsel %vm886, %v935, %v938
        %v940 = vrot.slane %v938, 4
        %v941 = vrot.slane %v565, 5
        %v942 = vrot.slane %v561, 6
        %v943 = vor.u32 %v941, %v942
        %v944 = vsel %vm886, %v940, %v943
        %v945 = vrot.slane %v943, 4
        %v946 = vrot.slane %v575, 5
        %v947 = vrot.slane %v571, 6
        %v948 = vor.u32 %v946, %v947
        %v949 = vsel %vm886, %v945, %v948
        %v950 = vrot.slane %v948, 4
        %v951 = vrot.slane %v585, 5
        %v952 = vrot.slane %v581, 6
        %v953 = vor.u32 %v951, %v952
        %v954 = vsel %vm886, %v950, %v953
        %v955 = vrot.slane %v953, 4
        %v956 = vrot.slane %v595, 5
        %v957 = vrot.slane %v591, 6
        %v958 = vor.u32 %v956, %v957
        %v959 = vsel %vm886, %v955, %v958
        %v960 = vrot.slane %v958, 4
        %v961 = vrot.slane %v605, 5
        %v962 = vrot.slane %v601, 6
        %v963 = vor.u32 %v961, %v962
        %v964 = vsel %vm886, %v960, %v963
        %v965 = vrot.slane %v963, 4
        %v966 = vrot.slane %v615, 5
        %v967 = vrot.slane %v611, 6
        %v968 = vor.u32 %v966, %v967
        %v969 = vsel %vm886, %v965, %v968
        %v970 = vrot.slane %v968, 4
        %v971 = vrot.slane %v625, 5
        %v972 = vrot.slane %v621, 6
        %v973 = vor.u32 %v971, %v972
        %v974 = vsel %vm886, %v970, %v973
        %v975 = vrot.slane %v973, 4
        %v976 = vrot.slane %v635, 5
        %v977 = vrot.slane %v631, 6
        %v978 = vor.u32 %v976, %v977
        %v979 = vsel %vm886, %v975, %v978
        %v980 = vrot.slane %v978, 4
        %v981 = vrot.slane %v645, 5
        %v982 = vrot.slane %v641, 6
        %v983 = vor.u32 %v981, %v982
        %v984 = vsel %vm886, %v980, %v983
        %v985 = vrot.slane %v983, 4
        %v986 = vrot.slane %v655, 5
        %v987 = vrot.slane %v651, 6
        %v988 = vor.u32 %v986, %v987
        %v989 = vsel %vm886, %v985, %v988
        %v990 = vrot.slane %v988, 4
        %v991 = vrot.slane %v665, 5
        %v992 = vrot.slane %v661, 6
        %v993 = vor.u32 %v991, %v992
        %v994 = vsel %vm886, %v990, %v993
        %v995 = vrot.slane %v993, 4
        %v996 = vrot.slane %v675, 5
        %v997 = vrot.slane %v671, 6
        %v998 = vor.u32 %v996, %v997
        %v999 = vsel %vm886, %v995, %v998
        %v1000 = vrot.slane %v998, 4
        %v1001 = vrot.slane %v685, 5
        %v1002 = vrot.slane %v681, 6
        %v1003 = vor.u32 %v1001, %v1002
        %v1004 = vsel %vm886, %v1000, %v1003
        %v1005 = vrot.slane %v1003, 4
        %v1006 = vrot.slane %v695, 5
        %v1007 = vrot.slane %v691, 6
        %v1008 = vor.u32 %v1006, %v1007
        %v1009 = vsel %vm886, %v1005, %v1008
        %v1010 = vrot.slane %v1008, 4
        %v1011 = vshrl.u32 %v447, 16
        %v1013 = vrot.slane %v1011, 5
        %v1014 = vrot.slane %v701, 6
        %v1015 = vor.u32 %v1013, %v1014
        %v1016 = vsel %vm886, %v1010, %v1015
        %1042 = vst [vmem:[#allocation2 + $0xc] sm:$0xf] %v894
        %1043 = vst [vmem:[#allocation2 + $0x30] sm:$0xf] %v899
        %1044 = vst [vmem:[#allocation2 + $0x54] sm:$0xf] %v904
        %1045 = vst [vmem:[#allocation2 + $0x78] sm:$0xf] %v909
        %1046 = vst [vmem:[#allocation2 + $0x9c] sm:$0xf] %v914
        %1047 = vst [vmem:[#allocation2 + $0xc0] sm:$0xf] %v919
        %1048 = vst [vmem:[#allocation2 + $0xe4] sm:$0xf] %v924
        %1049 = vst [vmem:[#allocation2 + $0x108] sm:$0xf] %v929
        %1050 = vst [vmem:[#allocation2 + $0x12c] sm:$0xf] %v934
        %1051 = vst [vmem:[#allocation2 + $0x150] sm:$0xf] %v939
        %1052 = vst [vmem:[#allocation2 + $0x174] sm:$0xf] %v944
        %1053 = vst [vmem:[#allocation2 + $0x198] sm:$0xf] %v949
        %1054 = vst [vmem:[#allocation2 + $0x1bc] sm:$0xf] %v954
        %1055 = vst [vmem:[#allocation2 + $0x1e0] sm:$0xf] %v959
        %1056 = vst [vmem:[#allocation2 + $0x204] sm:$0xf] %v964
        %1057 = vst [vmem:[#allocation2 + $0x228] sm:$0xf] %v969
        %1058 = vst [vmem:[#allocation2 + $0x24c] sm:$0xf] %v974
        %1059 = vst [vmem:[#allocation2 + $0x270] sm:$0xf] %v979
        %1060 = vst [vmem:[#allocation2 + $0x294] sm:$0xf] %v984
        %1061 = vst [vmem:[#allocation2 + $0x2b8] sm:$0xf] %v989
        %1062 = vst [vmem:[#allocation2 + $0x2dc] sm:$0xf] %v994
        %1063 = vst [vmem:[#allocation2 + $0x300] sm:$0xf] %v999
        %1064 = vst [vmem:[#allocation2 + $0x324] sm:$0xf] %v1004
        %1065 = vst [vmem:[#allocation2 + $0x348] sm:$0xf] %v1009
        %1066 = vst [vmem:[#allocation2 + $0x36c] sm:$0xf] %v1016
        %vm1067 = vcmask 1041408
        %vm1068 = vcmask 1045508
        %vm1069 = vmor %vm1067, %vm1068
        %v1070 = vrot.slane %v367, 6
        %v1071 = vrot.slane %v1070, 4
        %v1072 = vrot.slane %v368, 6
        %v1073 = vsel %vm1069, %v1071, %v1072
        %v1074 = vrot.slane %v1072, 4
        %v1075 = vrot.slane %v369, 6
        %v1076 = vsel %vm1069, %v1074, %v1075
        %v1077 = vrot.slane %v1075, 4
        %v1078 = vrot.slane %v370, 6
        %v1079 = vsel %vm1069, %v1077, %v1078
        %v1080 = vrot.slane %v1078, 4
        %v1081 = vrot.slane %v371, 6
        %v1082 = vsel %vm1069, %v1080, %v1081
        %v1083 = vrot.slane %v1081, 4
        %v1084 = vrot.slane %v372, 6
        %v1085 = vsel %vm1069, %v1083, %v1084
        %v1086 = vrot.slane %v1084, 4
        %v1087 = vrot.slane %v373, 6
        %v1088 = vsel %vm1069, %v1086, %v1087
        %v1089 = vrot.slane %v1087, 4
        %v1090 = vrot.slane %v374, 6
        %v1091 = vsel %vm1069, %v1089, %v1090
        %v1092 = vrot.slane %v1090, 4
        %v1093 = vrot.slane %v375, 6
        %v1094 = vsel %vm1069, %v1092, %v1093
        %v1095 = vrot.slane %v1093, 4
        %v1096 = vrot.slane %v376, 6
        %v1097 = vsel %vm1069, %v1095, %v1096
        %v1098 = vrot.slane %v1096, 4
        %v1099 = vrot.slane %v377, 6
        %v1100 = vsel %vm1069, %v1098, %v1099
        %v1101 = vrot.slane %v1099, 4
        %v1102 = vrot.slane %v378, 6
        %v1103 = vsel %vm1069, %v1101, %v1102
        %v1104 = vrot.slane %v1102, 4
        %v1105 = vrot.slane %v379, 6
        %v1106 = vsel %vm1069, %v1104, %v1105
        %v1107 = vrot.slane %v1105, 4
        %v1108 = vrot.slane %v380, 6
        %v1109 = vsel %vm1069, %v1107, %v1108
        %v1110 = vrot.slane %v1108, 4
        %v1111 = vrot.slane %v381, 6
        %v1112 = vsel %vm1069, %v1110, %v1111
        %v1113 = vrot.slane %v1111, 4
        %v1114 = vrot.slane %v382, 6
        %v1115 = vsel %vm1069, %v1113, %v1114
        %v1116 = vrot.slane %v1114, 4
        %v1117 = vrot.slane %v383, 6
        %v1118 = vsel %vm1069, %v1116, %v1117
        %v1119 = vrot.slane %v1117, 4
        %v1120 = vrot.slane %v384, 6
        %v1121 = vsel %vm1069, %v1119, %v1120
        %v1122 = vrot.slane %v1120, 4
        %v1123 = vrot.slane %v385, 6
        %v1124 = vsel %vm1069, %v1122, %v1123
        %v1125 = vrot.slane %v1123, 4
        %v1126 = vrot.slane %v386, 6
        %v1127 = vsel %vm1069, %v1125, %v1126
        %v1128 = vrot.slane %v1126, 4
        %v1129 = vrot.slane %v387, 6
        %v1130 = vsel %vm1069, %v1128, %v1129
        %v1131 = vrot.slane %v1129, 4
        %v1132 = vrot.slane %v388, 6
        %v1133 = vsel %vm1069, %v1131, %v1132
        %v1134 = vrot.slane %v1132, 4
        %v1135 = vrot.slane %v389, 6
        %v1136 = vsel %vm1069, %v1134, %v1135
        %v1137 = vrot.slane %v1135, 4
        %v1138 = vrot.slane %v390, 6
        %v1139 = vsel %vm1069, %v1137, %v1138
        %v1140 = vrot.slane %v1138, 4
        %v1141 = vrot.slane %v446, 6
        %v1142 = vsel %vm1069, %v1140, %v1141
        %v1143 = vrot.slane %v1141, 4
        %v1144 = vrot.slane %v447, 6
        %v1145 = vsel %vm1069, %v1143, %v1144
        %1171 = vst [vmem:[#allocation2 + $0x10] sm:$0xf] %v1073
        %1172 = vst [vmem:[#allocation2 + $0x34] sm:$0xf] %v1076
        %1173 = vst [vmem:[#allocation2 + $0x58] sm:$0xf] %v1079
        %1174 = vst [vmem:[#allocation2 + $0x7c] sm:$0xf] %v1082
        %1175 = vst [vmem:[#allocation2 + $0xa0] sm:$0xf] %v1085
        %1176 = vst [vmem:[#allocation2 + $0xc4] sm:$0xf] %v1088
        %1177 = vst [vmem:[#allocation2 + $0xe8] sm:$0xf] %v1091
        %1178 = vst [vmem:[#allocation2 + $0x10c] sm:$0xf] %v1094
        %1179 = vst [vmem:[#allocation2 + $0x130] sm:$0xf] %v1097
        %1180 = vst [vmem:[#allocation2 + $0x154] sm:$0xf] %v1100
        %1181 = vst [vmem:[#allocation2 + $0x178] sm:$0xf] %v1103
        %1182 = vst [vmem:[#allocation2 + $0x19c] sm:$0xf] %v1106
        %1183 = vst [vmem:[#allocation2 + $0x1c0] sm:$0xf] %v1109
        %1184 = vst [vmem:[#allocation2 + $0x1e4] sm:$0xf] %v1112
        %1185 = vst [vmem:[#allocation2 + $0x208] sm:$0xf] %v1115
        %1186 = vst [vmem:[#allocation2 + $0x22c] sm:$0xf] %v1118
        %1187 = vst [vmem:[#allocation2 + $0x250] sm:$0xf] %v1121
        %1188 = vst [vmem:[#allocation2 + $0x274] sm:$0xf] %v1124
        %1189 = vst [vmem:[#allocation2 + $0x298] sm:$0xf] %v1127
        %1190 = vst [vmem:[#allocation2 + $0x2bc] sm:$0xf] %v1130
        %1191 = vst [vmem:[#allocation2 + $0x2e0] sm:$0xf] %v1133
        %1192 = vst [vmem:[#allocation2 + $0x304] sm:$0xf] %v1136
        %1193 = vst [vmem:[#allocation2 + $0x328] sm:$0xf] %v1139
        %1194 = vst [vmem:[#allocation2 + $0x34c] sm:$0xf] %v1142
        %1195 = vst [vmem:[#allocation2 + $0x370] sm:$0xf] %v1145
        %vm1196 = vsmask.f32 1280
        %vm1197 = vsmask.f32 5392
        %vm1198 = vmor %vm1196, %vm1197
        %v1199 = vrot.slane %v452, 6
        %v1200 = vrot.slane %v455, 7
        %v1201 = vor.u32 %v1199, %v1200
        %v1202 = vrot.slane %v1201, 4
        %v1203 = vrot.slane %v465, 6
        %v1204 = vrot.slane %v461, 7
        %v1205 = vor.u32 %v1203, %v1204
        %v1206 = vsel %vm1198, %v1202, %v1205
        %v1207 = vrot.slane %v1205, 4
        %v1208 = vrot.slane %v475, 6
        %v1209 = vrot.slane %v471, 7
        %v1210 = vor.u32 %v1208, %v1209
        %v1211 = vsel %vm1198, %v1207, %v1210
        %v1212 = vrot.slane %v1210, 4
        %v1213 = vrot.slane %v485, 6
        %v1214 = vrot.slane %v481, 7
        %v1215 = vor.u32 %v1213, %v1214
        %v1216 = vsel %vm1198, %v1212, %v1215
        %v1217 = vrot.slane %v1215, 4
        %v1218 = vrot.slane %v495, 6
        %v1219 = vrot.slane %v491, 7
        %v1220 = vor.u32 %v1218, %v1219
        %v1221 = vsel %vm1198, %v1217, %v1220
        %v1222 = vrot.slane %v1220, 4
        %v1223 = vrot.slane %v505, 6
        %v1224 = vrot.slane %v501, 7
        %v1225 = vor.u32 %v1223, %v1224
        %v1226 = vsel %vm1198, %v1222, %v1225
        %v1227 = vrot.slane %v1225, 4
        %v1228 = vrot.slane %v515, 6
        %v1229 = vrot.slane %v511, 7
        %v1230 = vor.u32 %v1228, %v1229
        %v1231 = vsel %vm1198, %v1227, %v1230
        %v1232 = vrot.slane %v1230, 4
        %v1233 = vrot.slane %v525, 6
        %v1234 = vrot.slane %v521, 7
        %v1235 = vor.u32 %v1233, %v1234
        %v1236 = vsel %vm1198, %v1232, %v1235
        %v1237 = vrot.slane %v1235, 4
        %v1238 = vrot.slane %v535, 6
        %v1239 = vrot.slane %v531, 7
        %v1240 = vor.u32 %v1238, %v1239
        %v1241 = vsel %vm1198, %v1237, %v1240
        %v1242 = vrot.slane %v1240, 4
        %v1243 = vrot.slane %v545, 6
        %v1244 = vrot.slane %v541, 7
        %v1245 = vor.u32 %v1243, %v1244
        %v1246 = vsel %vm1198, %v1242, %v1245
        %v1247 = vrot.slane %v1245, 4
        %v1248 = vrot.slane %v555, 6
        %v1249 = vrot.slane %v551, 7
        %v1250 = vor.u32 %v1248, %v1249
        %v1251 = vsel %vm1198, %v1247, %v1250
        %v1252 = vrot.slane %v1250, 4
        %v1253 = vrot.slane %v565, 6
        %v1254 = vrot.slane %v561, 7
        %v1255 = vor.u32 %v1253, %v1254
        %v1256 = vsel %vm1198, %v1252, %v1255
        %v1257 = vrot.slane %v1255, 4
        %v1258 = vrot.slane %v575, 6
        %v1259 = vrot.slane %v571, 7
        %v1260 = vor.u32 %v1258, %v1259
        %v1261 = vsel %vm1198, %v1257, %v1260
        %v1262 = vrot.slane %v1260, 4
        %v1263 = vrot.slane %v585, 6
        %v1264 = vrot.slane %v581, 7
        %v1265 = vor.u32 %v1263, %v1264
        %v1266 = vsel %vm1198, %v1262, %v1265
        %v1267 = vrot.slane %v1265, 4
        %v1268 = vrot.slane %v595, 6
        %v1269 = vrot.slane %v591, 7
        %v1270 = vor.u32 %v1268, %v1269
        %v1271 = vsel %vm1198, %v1267, %v1270
        %v1272 = vrot.slane %v1270, 4
        %v1273 = vrot.slane %v605, 6
        %v1274 = vrot.slane %v601, 7
        %v1275 = vor.u32 %v1273, %v1274
        %v1276 = vsel %vm1198, %v1272, %v1275
        %v1277 = vrot.slane %v1275, 4
        %v1278 = vrot.slane %v615, 6
        %v1279 = vrot.slane %v611, 7
        %v1280 = vor.u32 %v1278, %v1279
        %v1281 = vsel %vm1198, %v1277, %v1280
        %v1282 = vrot.slane %v1280, 4
        %v1283 = vrot.slane %v625, 6
        %v1284 = vrot.slane %v621, 7
        %v1285 = vor.u32 %v1283, %v1284
        %v1286 = vsel %vm1198, %v1282, %v1285
        %v1287 = vrot.slane %v1285, 4
        %v1288 = vrot.slane %v635, 6
        %v1289 = vrot.slane %v631, 7
        %v1290 = vor.u32 %v1288, %v1289
        %v1291 = vsel %vm1198, %v1287, %v1290
        %v1292 = vrot.slane %v1290, 4
        %v1293 = vrot.slane %v645, 6
        %v1294 = vrot.slane %v641, 7
        %v1295 = vor.u32 %v1293, %v1294
        %v1296 = vsel %vm1198, %v1292, %v1295
        %v1297 = vrot.slane %v1295, 4
        %v1298 = vrot.slane %v655, 6
        %v1299 = vrot.slane %v651, 7
        %v1300 = vor.u32 %v1298, %v1299
        %v1301 = vsel %vm1198, %v1297, %v1300
        %v1302 = vrot.slane %v1300, 4
        %v1303 = vrot.slane %v665, 6
        %v1304 = vrot.slane %v661, 7
        %v1305 = vor.u32 %v1303, %v1304
        %v1306 = vsel %vm1198, %v1302, %v1305
        %v1307 = vrot.slane %v1305, 4
        %v1308 = vrot.slane %v675, 6
        %v1309 = vrot.slane %v671, 7
        %v1310 = vor.u32 %v1308, %v1309
        %v1311 = vsel %vm1198, %v1307, %v1310
        %v1312 = vrot.slane %v1310, 4
        %v1313 = vrot.slane %v685, 6
        %v1314 = vrot.slane %v681, 7
        %v1315 = vor.u32 %v1313, %v1314
        %v1316 = vsel %vm1198, %v1312, %v1315
        %v1317 = vrot.slane %v1315, 4
        %v1318 = vrot.slane %v695, 6
        %v1319 = vrot.slane %v691, 7
        %v1320 = vor.u32 %v1318, %v1319
        %v1321 = vsel %vm1198, %v1317, %v1320
        %v1322 = vrot.slane %v1320, 4
        %v1323 = vrot.slane %v1011, 6
        %v1324 = vrot.slane %v701, 7
        %v1325 = vor.u32 %v1323, %v1324
        %v1326 = vsel %vm1198, %v1322, %v1325
        %1352 = vst [vmem:[#allocation2 + $0x14] sm:$0xf] %v1206
        %1353 = vst [vmem:[#allocation2 + $0x38] sm:$0xf] %v1211
        %1354 = vst [vmem:[#allocation2 + $0x5c] sm:$0xf] %v1216
        %1355 = vst [vmem:[#allocation2 + $0x80] sm:$0xf] %v1221
        %1356 = vst [vmem:[#allocation2 + $0xa4] sm:$0xf] %v1226
        %1357 = vst [vmem:[#allocation2 + $0xc8] sm:$0xf] %v1231
        %1358 = vst [vmem:[#allocation2 + $0xec] sm:$0xf] %v1236
        %1359 = vst [vmem:[#allocation2 + $0x110] sm:$0xf] %v1241
        %1360 = vst [vmem:[#allocation2 + $0x134] sm:$0xf] %v1246
        %1361 = vst [vmem:[#allocation2 + $0x158] sm:$0xf] %v1251
        %1362 = vst [vmem:[#allocation2 + $0x17c] sm:$0xf] %v1256
        %1363 = vst [vmem:[#allocation2 + $0x1a0] sm:$0xf] %v1261
        %1364 = vst [vmem:[#allocation2 + $0x1c4] sm:$0xf] %v1266
        %1365 = vst [vmem:[#allocation2 + $0x1e8] sm:$0xf] %v1271
        %1366 = vst [vmem:[#allocation2 + $0x20c] sm:$0xf] %v1276
        %1367 = vst [vmem:[#allocation2 + $0x230] sm:$0xf] %v1281
        %1368 = vst [vmem:[#allocation2 + $0x254] sm:$0xf] %v1286
        %1369 = vst [vmem:[#allocation2 + $0x278] sm:$0xf] %v1291
        %1370 = vst [vmem:[#allocation2 + $0x29c] sm:$0xf] %v1296
        %1371 = vst [vmem:[#allocation2 + $0x2c0] sm:$0xf] %v1301
        %1372 = vst [vmem:[#allocation2 + $0x2e4] sm:$0xf] %v1306
        %1373 = vst [vmem:[#allocation2 + $0x308] sm:$0xf] %v1311
        %1374 = vst [vmem:[#allocation2 + $0x32c] sm:$0xf] %v1316
        %1375 = vst [vmem:[#allocation2 + $0x350] sm:$0xf] %v1321
        %1376 = vst [vmem:[#allocation2 + $0x374] sm:$0xf] %v1326
        %vm1377 = vcmask 1040384
        %vm1378 = vcmask 1044484
        %vm1379 = vmor %vm1377, %vm1378
        %v1380 = vrot.slane %v367, 7
        %v1381 = vrot.slane %v1380, 4
        %v1382 = vrot.slane %v368, 7
        %v1383 = vsel %vm1379, %v1381, %v1382
        %v1384 = vrot.slane %v1382, 4
        %v1385 = vrot.slane %v369, 7
        %v1386 = vsel %vm1379, %v1384, %v1385
        %v1387 = vrot.slane %v1385, 4
        %v1388 = vrot.slane %v370, 7
        %v1389 = vsel %vm1379, %v1387, %v1388
        %v1390 = vrot.slane %v1388, 4
        %v1391 = vrot.slane %v371, 7
        %v1392 = vsel %vm1379, %v1390, %v1391
        %v1393 = vrot.slane %v1391, 4
        %v1394 = vrot.slane %v372, 7
        %v1395 = vsel %vm1379, %v1393, %v1394
        %v1396 = vrot.slane %v1394, 4
        %v1397 = vrot.slane %v373, 7
        %v1398 = vsel %vm1379, %v1396, %v1397
        %v1399 = vrot.slane %v1397, 4
        %v1400 = vrot.slane %v374, 7
        %v1401 = vsel %vm1379, %v1399, %v1400
        %v1402 = vrot.slane %v1400, 4
        %v1403 = vrot.slane %v375, 7
        %v1404 = vsel %vm1379, %v1402, %v1403
        %v1405 = vrot.slane %v1403, 4
        %v1406 = vrot.slane %v376, 7
        %v1407 = vsel %vm1379, %v1405, %v1406
        %v1408 = vrot.slane %v1406, 4
        %v1409 = vrot.slane %v377, 7
        %v1410 = vsel %vm1379, %v1408, %v1409
        %v1411 = vrot.slane %v1409, 4
        %v1412 = vrot.slane %v378, 7
        %v1413 = vsel %vm1379, %v1411, %v1412
        %v1414 = vrot.slane %v1412, 4
        %v1415 = vrot.slane %v379, 7
        %v1416 = vsel %vm1379, %v1414, %v1415
        %v1417 = vrot.slane %v1415, 4
        %v1418 = vrot.slane %v380, 7
        %v1419 = vsel %vm1379, %v1417, %v1418
        %v1420 = vrot.slane %v1418, 4
        %v1421 = vrot.slane %v381, 7
        %v1422 = vsel %vm1379, %v1420, %v1421
        %v1423 = vrot.slane %v1421, 4
        %v1424 = vrot.slane %v382, 7
        %v1425 = vsel %vm1379, %v1423, %v1424
        %v1426 = vrot.slane %v1424, 4
        %v1427 = vrot.slane %v383, 7
        %v1428 = vsel %vm1379, %v1426, %v1427
        %v1429 = vrot.slane %v1427, 4
        %v1430 = vrot.slane %v384, 7
        %v1431 = vsel %vm1379, %v1429, %v1430
        %v1432 = vrot.slane %v1430, 4
        %v1433 = vrot.slane %v385, 7
        %v1434 = vsel %vm1379, %v1432, %v1433
        %v1435 = vrot.slane %v1433, 4
        %v1436 = vrot.slane %v386, 7
        %v1437 = vsel %vm1379, %v1435, %v1436
        %v1438 = vrot.slane %v1436, 4
        %v1439 = vrot.slane %v387, 7
        %v1440 = vsel %vm1379, %v1438, %v1439
        %v1441 = vrot.slane %v1439, 4
        %v1442 = vrot.slane %v388, 7
        %v1443 = vsel %vm1379, %v1441, %v1442
        %v1444 = vrot.slane %v1442, 4
        %v1445 = vrot.slane %v389, 7
        %v1446 = vsel %vm1379, %v1444, %v1445
        %v1447 = vrot.slane %v1445, 4
        %v1448 = vrot.slane %v390, 7
        %v1449 = vsel %vm1379, %v1447, %v1448
        %v1450 = vrot.slane %v1448, 4
        %v1451 = vrot.slane %v446, 7
        %v1452 = vsel %vm1379, %v1450, %v1451
        %v1453 = vrot.slane %v1451, 4
        %v1454 = vrot.slane %v447, 7
        %v1455 = vsel %vm1379, %v1453, %v1454
        %1481 = vst [vmem:[#allocation2 + $0x18] sm:$0xf] %v1383
        %1482 = vst [vmem:[#allocation2 + $0x3c] sm:$0xf] %v1386
        %1483 = vst [vmem:[#allocation2 + $0x60] sm:$0xf] %v1389
        %1484 = vst [vmem:[#allocation2 + $0x84] sm:$0xf] %v1392
        %1485 = vst [vmem:[#allocation2 + $0xa8] sm:$0xf] %v1395
        %1486 = vst [vmem:[#allocation2 + $0xcc] sm:$0xf] %v1398
        %1487 = vst [vmem:[#allocation2 + $0xf0] sm:$0xf] %v1401
        %1488 = vst [vmem:[#allocation2 + $0x114] sm:$0xf] %v1404
        %1489 = vst [vmem:[#allocation2 + $0x138] sm:$0xf] %v1407
        %1490 = vst [vmem:[#allocation2 + $0x15c] sm:$0xf] %v1410
        %1491 = vst [vmem:[#allocation2 + $0x180] sm:$0xf] %v1413
        %1492 = vst [vmem:[#allocation2 + $0x1a4] sm:$0xf] %v1416
        %1493 = vst [vmem:[#allocation2 + $0x1c8] sm:$0xf] %v1419
        %1494 = vst [vmem:[#allocation2 + $0x1ec] sm:$0xf] %v1422
        %1495 = vst [vmem:[#allocation2 + $0x210] sm:$0xf] %v1425
        %1496 = vst [vmem:[#allocation2 + $0x234] sm:$0xf] %v1428
        %1497 = vst [vmem:[#allocation2 + $0x258] sm:$0xf] %v1431
        %1498 = vst [vmem:[#allocation2 + $0x27c] sm:$0xf] %v1434
        %1499 = vst [vmem:[#allocation2 + $0x2a0] sm:$0xf] %v1437
        %1500 = vst [vmem:[#allocation2 + $0x2c4] sm:$0xf] %v1440
        %1501 = vst [vmem:[#allocation2 + $0x2e8] sm:$0xf] %v1443
        %1502 = vst [vmem:[#allocation2 + $0x30c] sm:$0xf] %v1446
        %1503 = vst [vmem:[#allocation2 + $0x330] sm:$0xf] %v1449
        %1504 = vst [vmem:[#allocation2 + $0x354] sm:$0xf] %v1452
        %1505 = vst [vmem:[#allocation2 + $0x378] sm:$0xf] %v1455
        %vm1506 = vsmask.f32 256
        %vm1507 = vsmask.f32 4368
        %vm1508 = vmor %vm1506, %vm1507
        %v1509 = vrot.slane %v452, 7
        %v1510 = vrot.slane %v1509, 4
        %v1511 = vrot.slane %v465, 7
        %v1512 = vor.u32 %v1511, %v461
        %v1513 = vsel %vm1508, %v1510, %v1512
        %v1514 = vrot.slane %v1511, 4
        %v1515 = vrot.slane %v475, 7
        %v1516 = vor.u32 %v1515, %v471
        %v1517 = vsel %vm1508, %v1514, %v1516
        %v1518 = vrot.slane %v1515, 4
        %v1519 = vrot.slane %v485, 7
        %v1520 = vor.u32 %v1519, %v481
        %v1521 = vsel %vm1508, %v1518, %v1520
        %v1522 = vrot.slane %v1519, 4
        %v1523 = vrot.slane %v495, 7
        %v1524 = vor.u32 %v1523, %v491
        %v1525 = vsel %vm1508, %v1522, %v1524
        %v1526 = vrot.slane %v1523, 4
        %v1527 = vrot.slane %v505, 7
        %v1528 = vor.u32 %v1527, %v501
        %v1529 = vsel %vm1508, %v1526, %v1528
        %v1530 = vrot.slane %v1527, 4
        %v1531 = vrot.slane %v515, 7
        %v1532 = vor.u32 %v1531, %v511
        %v1533 = vsel %vm1508, %v1530, %v1532
        %v1534 = vrot.slane %v1531, 4
        %v1535 = vrot.slane %v525, 7
        %v1536 = vor.u32 %v1535, %v521
        %v1537 = vsel %vm1508, %v1534, %v1536
        %v1538 = vrot.slane %v1535, 4
        %v1539 = vrot.slane %v535, 7
        %v1540 = vor.u32 %v1539, %v531
        %v1541 = vsel %vm1508, %v1538, %v1540
        %v1542 = vrot.slane %v1539, 4
        %v1543 = vrot.slane %v545, 7
        %v1544 = vor.u32 %v1543, %v541
        %v1545 = vsel %vm1508, %v1542, %v1544
        %v1546 = vrot.slane %v1543, 4
        %v1547 = vrot.slane %v555, 7
        %v1548 = vor.u32 %v1547, %v551
        %v1549 = vsel %vm1508, %v1546, %v1548
        %v1550 = vrot.slane %v1547, 4
        %v1551 = vrot.slane %v565, 7
        %v1552 = vor.u32 %v1551, %v561
        %v1553 = vsel %vm1508, %v1550, %v1552
        %v1554 = vrot.slane %v1551, 4
        %v1555 = vrot.slane %v575, 7
        %v1556 = vor.u32 %v1555, %v571
        %v1557 = vsel %vm1508, %v1554, %v1556
        %v1558 = vrot.slane %v1555, 4
        %v1559 = vrot.slane %v585, 7
        %v1560 = vor.u32 %v1559, %v581
        %v1561 = vsel %vm1508, %v1558, %v1560
        %v1562 = vrot.slane %v1559, 4
        %v1563 = vrot.slane %v595, 7
        %v1564 = vor.u32 %v1563, %v591
        %v1565 = vsel %vm1508, %v1562, %v1564
        %v1566 = vrot.slane %v1563, 4
        %v1567 = vrot.slane %v605, 7
        %v1568 = vor.u32 %v1567, %v601
        %v1569 = vsel %vm1508, %v1566, %v1568
        %v1570 = vrot.slane %v1567, 4
        %v1571 = vrot.slane %v615, 7
        %v1572 = vor.u32 %v1571, %v611
        %v1573 = vsel %vm1508, %v1570, %v1572
        %v1574 = vrot.slane %v1571, 4
        %v1575 = vrot.slane %v625, 7
        %v1576 = vor.u32 %v1575, %v621
        %v1577 = vsel %vm1508, %v1574, %v1576
        %v1578 = vrot.slane %v1575, 4
        %v1579 = vrot.slane %v635, 7
        %v1580 = vor.u32 %v1579, %v631
        %v1581 = vsel %vm1508, %v1578, %v1580
        %v1582 = vrot.slane %v1579, 4
        %v1583 = vrot.slane %v645, 7
        %v1584 = vor.u32 %v1583, %v641
        %v1585 = vsel %vm1508, %v1582, %v1584
        %v1586 = vrot.slane %v1583, 4
        %v1587 = vrot.slane %v655, 7
        %v1588 = vor.u32 %v1587, %v651
        %v1589 = vsel %vm1508, %v1586, %v1588
        %v1590 = vrot.slane %v1587, 4
        %v1591 = vrot.slane %v665, 7
        %v1592 = vor.u32 %v1591, %v661
        %v1593 = vsel %vm1508, %v1590, %v1592
        %v1594 = vrot.slane %v1591, 4
        %v1595 = vrot.slane %v675, 7
        %v1596 = vor.u32 %v1595, %v671
        %v1597 = vsel %vm1508, %v1594, %v1596
        %v1598 = vrot.slane %v1595, 4
        %v1599 = vrot.slane %v685, 7
        %v1600 = vor.u32 %v1599, %v681
        %v1601 = vsel %vm1508, %v1598, %v1600
        %v1602 = vrot.slane %v1599, 4
        %v1603 = vrot.slane %v695, 7
        %v1604 = vor.u32 %v1603, %v691
        %v1605 = vsel %vm1508, %v1602, %v1604
        %v1606 = vrot.slane %v1603, 4
        %v1607 = vrot.slane %v1011, 7
        %v1608 = vor.u32 %v1607, %v701
        %v1609 = vsel %vm1508, %v1606, %v1608
        %1635 = vst [vmem:[#allocation2 + $0x1c] sm:$0xf] %v1513
        %1636 = vst [vmem:[#allocation2 + $0x40] sm:$0xf] %v1517
        %1637 = vst [vmem:[#allocation2 + $0x64] sm:$0xf] %v1521
        %1638 = vst [vmem:[#allocation2 + $0x88] sm:$0xf] %v1525
        %1639 = vst [vmem:[#allocation2 + $0xac] sm:$0xf] %v1529
        %1640 = vst [vmem:[#allocation2 + $0xd0] sm:$0xf] %v1533
        %1641 = vst [vmem:[#allocation2 + $0xf4] sm:$0xf] %v1537
        %1642 = vst [vmem:[#allocation2 + $0x118] sm:$0xf] %v1541
        %1643 = vst [vmem:[#allocation2 + $0x13c] sm:$0xf] %v1545
        %1644 = vst [vmem:[#allocation2 + $0x160] sm:$0xf] %v1549
        %1645 = vst [vmem:[#allocation2 + $0x184] sm:$0xf] %v1553
        %1646 = vst [vmem:[#allocation2 + $0x1a8] sm:$0xf] %v1557
        %1647 = vst [vmem:[#allocation2 + $0x1cc] sm:$0xf] %v1561
        %1648 = vst [vmem:[#allocation2 + $0x1f0] sm:$0xf] %v1565
        %1649 = vst [vmem:[#allocation2 + $0x214] sm:$0xf] %v1569
        %1650 = vst [vmem:[#allocation2 + $0x238] sm:$0xf] %v1573
        %1651 = vst [vmem:[#allocation2 + $0x25c] sm:$0xf] %v1577
        %1652 = vst [vmem:[#allocation2 + $0x280] sm:$0xf] %v1581
        %1653 = vst [vmem:[#allocation2 + $0x2a4] sm:$0xf] %v1585
        %1654 = vst [vmem:[#allocation2 + $0x2c8] sm:$0xf] %v1589
        %1655 = vst [vmem:[#allocation2 + $0x2ec] sm:$0xf] %v1593
        %1656 = vst [vmem:[#allocation2 + $0x310] sm:$0xf] %v1597
        %1657 = vst [vmem:[#allocation2 + $0x334] sm:$0xf] %v1601
        %1658 = vst [vmem:[#allocation2 + $0x358] sm:$0xf] %v1605
        %1659 = vst [vmem:[#allocation2 + $0x37c] sm:$0xf] %v1609
        %v1660 = vpack.c.bf16 %v292, %v291
        %v1661 = vpack.c.bf16 %v294, %v293
        %v1662 = vpack.c.bf16 %v296, %v295
        %v1663 = vpack.c.bf16 %v298, %v297
        %v1664 = vpack.c.bf16 %v300, %v299
        %v1665 = vpack.c.bf16 %v302, %v301
        %v1666 = vpack.c.bf16 %v304, %v303
        %v1667 = vpack.c.bf16 %v306, %v305
        %v1668 = vpack.c.bf16 %v308, %v307
        %v1669 = vpack.c.bf16 %v310, %v309
        %v1670 = vpack.c.bf16 %v312, %v311
        %v1671 = vpack.c.bf16 %v314, %v313
        %v1672 = vpack.c.bf16 %v315, %v315
        %v1686 = vunpack.c.l.b16 %v1660
        %v1687 = vunpack.c.h.b16 %v1660
        %v1688 = vunpack.c.l.b16 %v1661
        %v1689 = vunpack.c.h.b16 %v1661
        %v1690 = vunpack.c.l.b16 %v1662
        %v1691 = vunpack.c.h.b16 %v1662
        %v1692 = vunpack.c.l.b16 %v1663
        %v1693 = vunpack.c.h.b16 %v1663
        %v1694 = vunpack.c.l.b16 %v1664
        %v1695 = vunpack.c.h.b16 %v1664
        %v1696 = vunpack.c.l.b16 %v1665
        %v1697 = vunpack.c.h.b16 %v1665
        %v1698 = vunpack.c.l.b16 %v1666
        %v1699 = vunpack.c.h.b16 %v1666
        %v1700 = vunpack.c.l.b16 %v1667
        %v1701 = vunpack.c.h.b16 %v1667
        %v1702 = vunpack.c.l.b16 %v1668
        %v1703 = vunpack.c.h.b16 %v1668
        %v1704 = vunpack.c.l.b16 %v1669
        %v1705 = vunpack.c.h.b16 %v1669
        %v1706 = vunpack.c.l.b16 %v1670
        %v1707 = vunpack.c.h.b16 %v1670
        %v1708 = vunpack.c.l.b16 %v1671
        %v1709 = vunpack.c.h.b16 %v1671
        %v1710 = vunpack.c.l.b16 %v1672
        %v1711 = vpack.c.b16 %v1686, %v1686
        %v1712 = vpack.c.b16 %v1687, %v1687
        %v1713 = vpack.c.b16 %v1688, %v1688
        %v1714 = vpack.c.b16 %v1689, %v1689
        %v1715 = vpack.c.b16 %v1690, %v1690
        %v1716 = vpack.c.b16 %v1691, %v1691
        %v1717 = vpack.c.b16 %v1692, %v1692
        %v1718 = vpack.c.b16 %v1693, %v1693
        %v1719 = vpack.c.b16 %v1694, %v1694
        %v1720 = vpack.c.b16 %v1695, %v1695
        %v1721 = vpack.c.b16 %v1696, %v1696
        %v1722 = vpack.c.b16 %v1697, %v1697
        %v1723 = vpack.c.b16 %v1698, %v1698
        %v1724 = vpack.c.b16 %v1699, %v1699
        %v1725 = vpack.c.b16 %v1700, %v1700
        %v1726 = vpack.c.b16 %v1701, %v1701
        %v1727 = vpack.c.b16 %v1702, %v1702
        %v1728 = vpack.c.b16 %v1703, %v1703
        %v1729 = vpack.c.b16 %v1704, %v1704
        %v1730 = vpack.c.b16 %v1705, %v1705
        %v1731 = vpack.c.b16 %v1706, %v1706
        %v1732 = vpack.c.b16 %v1707, %v1707
        %v1733 = vpack.c.b16 %v1708, %v1708
        %v1734 = vpack.c.b16 %v1709, %v1709
        %v1735 = vpack.c.b16 %v1710, %v1710
        %1761 = vst [vmem:[#allocation2 + $0x20] sm:$0xf] %v1711
        %1762 = vst [vmem:[#allocation2 + $0x44] sm:$0xf] %v1712
        %1763 = vst [vmem:[#allocation2 + $0x68] sm:$0xf] %v1713
        %1764 = vst [vmem:[#allocation2 + $0x8c] sm:$0xf] %v1714
        %1765 = vst [vmem:[#allocation2 + $0xb0] sm:$0xf] %v1715
        %1766 = vst [vmem:[#allocation2 + $0xd4] sm:$0xf] %v1716
        %1767 = vst [vmem:[#allocation2 + $0xf8] sm:$0xf] %v1717
        %1768 = vst [vmem:[#allocation2 + $0x11c] sm:$0xf] %v1718
        %1769 = vst [vmem:[#allocation2 + $0x140] sm:$0xf] %v1719
        %1770 = vst [vmem:[#allocation2 + $0x164] sm:$0xf] %v1720
        %1771 = vst [vmem:[#allocation2 + $0x188] sm:$0xf] %v1721
        %1772 = vst [vmem:[#allocation2 + $0x1ac] sm:$0xf] %v1722
        %1773 = vst [vmem:[#allocation2 + $0x1d0] sm:$0xf] %v1723
        %1774 = vst [vmem:[#allocation2 + $0x1f4] sm:$0xf] %v1724
        %1775 = vst [vmem:[#allocation2 + $0x218] sm:$0xf] %v1725
        %1776 = vst [vmem:[#allocation2 + $0x23c] sm:$0xf] %v1726
        %1777 = vst [vmem:[#allocation2 + $0x260] sm:$0xf] %v1727
        %1778 = vst [vmem:[#allocation2 + $0x284] sm:$0xf] %v1728
        %1779 = vst [vmem:[#allocation2 + $0x2a8] sm:$0xf] %v1729
        %1780 = vst [vmem:[#allocation2 + $0x2cc] sm:$0xf] %v1730
        %1781 = vst [vmem:[#allocation2 + $0x2f0] sm:$0xf] %v1731
        %1782 = vst [vmem:[#allocation2 + $0x314] sm:$0xf] %v1732
        %1783 = vst [vmem:[#allocation2 + $0x338] sm:$0xf] %v1733
        %1784 = vst [vmem:[#allocation2 + $0x35c] sm:$0xf] %v1734
        %1785 = vst [vmem:[#allocation2 + $0x380] sm:$0xf] %v1735
        %v1786 = vld [vmem:[#allocation2] sm:$0xff]
        %v1787 = vld [vmem:[#allocation2 + $0x8] sm:$0xff]
        %v1788 = vld [vmem:[#allocation2 + $0x10] sm:$0xff]
        %v1789 = vld [vmem:[#allocation2 + $0x18] sm:$0xff]
        %v1790 = vld [vmem:[#allocation2 + $0x20] sm:$0xf]
        %v1791 = vld [vmem:[#allocation2 + $0x24] sm:$0xff]
        %v1792 = vld [vmem:[#allocation2 + $0x2c] sm:$0xff]
        %v1793 = vld [vmem:[#allocation2 + $0x34] sm:$0xff]
        %v1794 = vld [vmem:[#allocation2 + $0x3c] sm:$0xff]
        %v1795 = vld [vmem:[#allocation2 + $0x44] sm:$0xf]
        %v1796 = vld [vmem:[#allocation2 + $0x48] sm:$0xff]
        %v1797 = vld [vmem:[#allocation2 + $0x50] sm:$0xff]
        %v1798 = vld [vmem:[#allocation2 + $0x58] sm:$0xff]
        %v1799 = vld [vmem:[#allocation2 + $0x60] sm:$0xff]
        %v1800 = vld [vmem:[#allocation2 + $0x68] sm:$0xf]
        %v1801 = vld [vmem:[#allocation2 + $0x6c] sm:$0xff]
        %v1802 = vld [vmem:[#allocation2 + $0x74] sm:$0xff]
        %v1803 = vld [vmem:[#allocation2 + $0x7c] sm:$0xff]
        %v1804 = vld [vmem:[#allocation2 + $0x84] sm:$0xff]
        %v1805 = vld [vmem:[#allocation2 + $0x8c] sm:$0xf]
        %v1806 = vld [vmem:[#allocation2 + $0x90] sm:$0xff]
        %v1807 = vld [vmem:[#allocation2 + $0x98] sm:$0xff]
        %v1808 = vld [vmem:[#allocation2 + $0xa0] sm:$0xff]
        %v1809 = vld [vmem:[#allocation2 + $0xa8] sm:$0xff]
        %v1810 = vld [vmem:[#allocation2 + $0xb0] sm:$0xf]
        %v1811 = vld [vmem:[#allocation2 + $0xb4] sm:$0xff]
        %v1812 = vld [vmem:[#allocation2 + $0xbc] sm:$0xff]
        %v1813 = vld [vmem:[#allocation2 + $0xc4] sm:$0xff]
        %v1814 = vld [vmem:[#allocation2 + $0xcc] sm:$0xff]
        %v1815 = vld [vmem:[#allocation2 + $0xd4] sm:$0xf]
        %v1816 = vld [vmem:[#allocation2 + $0xd8] sm:$0xff]
        %v1817 = vld [vmem:[#allocation2 + $0xe0] sm:$0xff]
        %v1818 = vld [vmem:[#allocation2 + $0xe8] sm:$0xff]
        %v1819 = vld [vmem:[#allocation2 + $0xf0] sm:$0xff]
        %v1820 = vld [vmem:[#allocation2 + $0xf8] sm:$0xf]
        %v1821 = vld [vmem:[#allocation2 + $0xfc] sm:$0xff]
        %v1822 = vld [vmem:[#allocation2 + $0x104] sm:$0xff]
        %v1823 = vld [vmem:[#allocation2 + $0x10c] sm:$0xff]
        %v1824 = vld [vmem:[#allocation2 + $0x114] sm:$0xff]
        %v1825 = vld [vmem:[#allocation2 + $0x11c] sm:$0xf]
        %v1826 = vld [vmem:[#allocation2 + $0x120] sm:$0xff]
        %v1827 = vld [vmem:[#allocation2 + $0x128] sm:$0xff]
        %v1828 = vld [vmem:[#allocation2 + $0x130] sm:$0xff]
        %v1829 = vld [vmem:[#allocation2 + $0x138] sm:$0xff]
        %v1830 = vld [vmem:[#allocation2 + $0x140] sm:$0xf]
        %v1831 = vld [vmem:[#allocation2 + $0x144] sm:$0xff]
        %v1832 = vld [vmem:[#allocation2 + $0x14c] sm:$0xff]
        %v1833 = vld [vmem:[#allocation2 + $0x154] sm:$0xff]
        %v1834 = vld [vmem:[#allocation2 + $0x15c] sm:$0xff]
        %v1835 = vld [vmem:[#allocation2 + $0x164] sm:$0xf]
        %v1836 = vld [vmem:[#allocation2 + $0x168] sm:$0xff]
        %v1837 = vld [vmem:[#allocation2 + $0x170] sm:$0xff]
        %v1838 = vld [vmem:[#allocation2 + $0x178] sm:$0xff]
        %v1839 = vld [vmem:[#allocation2 + $0x180] sm:$0xff]
        %v1840 = vld [vmem:[#allocation2 + $0x188] sm:$0xf]
        %v1841 = vld [vmem:[#allocation2 + $0x18c] sm:$0xff]
        %v1842 = vld [vmem:[#allocation2 + $0x194] sm:$0xff]
        %v1843 = vld [vmem:[#allocation2 + $0x19c] sm:$0xff]
        %v1844 = vld [vmem:[#allocation2 + $0x1a4] sm:$0xff]
        %v1845 = vld [vmem:[#allocation2 + $0x1ac] sm:$0xf]
        %v1846 = vld [vmem:[#allocation2 + $0x1b0] sm:$0xff]
        %v1847 = vld [vmem:[#allocation2 + $0x1b8] sm:$0xff]
        %v1848 = vld [vmem:[#allocation2 + $0x1c0] sm:$0xff]
        %v1849 = vld [vmem:[#allocation2 + $0x1c8] sm:$0xff]
        %v1850 = vld [vmem:[#allocation2 + $0x1d0] sm:$0xf]
        %v1851 = vld [vmem:[#allocation2 + $0x1d4] sm:$0xff]
        %v1852 = vld [vmem:[#allocation2 + $0x1dc] sm:$0xff]
        %v1853 = vld [vmem:[#allocation2 + $0x1e4] sm:$0xff]
        %v1854 = vld [vmem:[#allocation2 + $0x1ec] sm:$0xff]
        %v1855 = vld [vmem:[#allocation2 + $0x1f4] sm:$0xf]
        %v1856 = vld [vmem:[#allocation2 + $0x1f8] sm:$0xff]
        %v1857 = vld [vmem:[#allocation2 + $0x200] sm:$0xff]
        %v1858 = vld [vmem:[#allocation2 + $0x208] sm:$0xff]
        %v1859 = vld [vmem:[#allocation2 + $0x210] sm:$0xff]
        %v1860 = vld [vmem:[#allocation2 + $0x218] sm:$0xf]
        %v1861 = vld [vmem:[#allocation2 + $0x21c] sm:$0xff]
        %v1862 = vld [vmem:[#allocation2 + $0x224] sm:$0xff]
        %v1863 = vld [vmem:[#allocation2 + $0x22c] sm:$0xff]
        %v1864 = vld [vmem:[#allocation2 + $0x234] sm:$0xff]
        %v1865 = vld [vmem:[#allocation2 + $0x23c] sm:$0xf]
        %v1866 = vld [vmem:[#allocation2 + $0x240] sm:$0xff]
        %v1867 = vld [vmem:[#allocation2 + $0x248] sm:$0xff]
        %v1868 = vld [vmem:[#allocation2 + $0x250] sm:$0xff]
        %v1869 = vld [vmem:[#allocation2 + $0x258] sm:$0xff]
        %v1870 = vld [vmem:[#allocation2 + $0x260] sm:$0xf]
        %v1871 = vld [vmem:[#allocation2 + $0x264] sm:$0xff]
        %v1872 = vld [vmem:[#allocation2 + $0x26c] sm:$0xff]
        %v1873 = vld [vmem:[#allocation2 + $0x274] sm:$0xff]
        %v1874 = vld [vmem:[#allocation2 + $0x27c] sm:$0xff]
        %v1875 = vld [vmem:[#allocation2 + $0x284] sm:$0xf]
        %v1876 = vld [vmem:[#allocation2 + $0x288] sm:$0xff]
        %v1877 = vld [vmem:[#allocation2 + $0x290] sm:$0xff]
        %v1878 = vld [vmem:[#allocation2 + $0x298] sm:$0xff]
        %v1879 = vld [vmem:[#allocation2 + $0x2a0] sm:$0xff]
        %v1880 = vld [vmem:[#allocation2 + $0x2a8] sm:$0xf]
        %v1881 = vld [vmem:[#allocation2 + $0x2ac] sm:$0xff]
        %v1882 = vld [vmem:[#allocation2 + $0x2b4] sm:$0xff]
        %v1883 = vld [vmem:[#allocation2 + $0x2bc] sm:$0xff]
        %v1884 = vld [vmem:[#allocation2 + $0x2c4] sm:$0xff]
        %v1885 = vld [vmem:[#allocation2 + $0x2cc] sm:$0xf]
        %v1886 = vld [vmem:[#allocation2 + $0x2d0] sm:$0xff]
        %v1887 = vld [vmem:[#allocation2 + $0x2d8] sm:$0xff]
        %v1888 = vld [vmem:[#allocation2 + $0x2e0] sm:$0xff]
        %v1889 = vld [vmem:[#allocation2 + $0x2e8] sm:$0xff]
        %v1890 = vld [vmem:[#allocation2 + $0x2f0] sm:$0xf]
        %v1891 = vld [vmem:[#allocation2 + $0x2f4] sm:$0xff]
        %v1892 = vld [vmem:[#allocation2 + $0x2fc] sm:$0xff]
        %v1893 = vld [vmem:[#allocation2 + $0x304] sm:$0xff]
        %v1894 = vld [vmem:[#allocation2 + $0x30c] sm:$0xff]
        %v1895 = vld [vmem:[#allocation2 + $0x314] sm:$0xf]
        %v1896 = vld [vmem:[#allocation2 + $0x318] sm:$0xff]
        %v1897 = vld [vmem:[#allocation2 + $0x320] sm:$0xff]
        %v1898 = vld [vmem:[#allocation2 + $0x328] sm:$0xff]
        %v1899 = vld [vmem:[#allocation2 + $0x330] sm:$0xff]
        %v1900 = vld [vmem:[#allocation2 + $0x338] sm:$0xf]
        %v1901 = vld [vmem:[#allocation2 + $0x33c] sm:$0xff]
        %v1902 = vld [vmem:[#allocation2 + $0x344] sm:$0xff]
        %v1903 = vld [vmem:[#allocation2 + $0x34c] sm:$0xff]
        %v1904 = vld [vmem:[#allocation2 + $0x354] sm:$0xff]
        %v1905 = vld [vmem:[#allocation2 + $0x35c] sm:$0xf]
        %v1906 = vld [vmem:[#allocation2 + $0x360] sm:$0xff]
        %v1907 = vld [vmem:[#allocation2 + $0x368] sm:$0xff]
        %v1908 = vld [vmem:[#allocation2 + $0x370] sm:$0xff]
        %v1909 = vld [vmem:[#allocation2 + $0x378] sm:$0xff]
        %v1910 = vld [vmem:[#allocation2 + $0x380] sm:$0xf]
        %v1911 = vld [vmem:[#allocation6] sm:$0xff]
        %v1912 = vld [vmem:[#allocation6 + $0x8] sm:$0xff]
        %v1913 = vld [vmem:[#allocation6 + $0x10] sm:$0xff]
        %v1914 = vld [vmem:[#allocation6 + $0x18] sm:$0xff]
        %v1915 = vld [vmem:[#allocation6 + $0x20] sm:$0xff]
        %v1916 = vld [vmem:[#allocation6 + $0x28] sm:$0xff]
        %v1917 = vld [vmem:[#allocation6 + $0x30] sm:$0xff]
        %v1918 = vld [vmem:[#allocation6 + $0x38] sm:$0xff]
        %v1919 = vld [vmem:[#allocation6 + $0x40] sm:$0xff]
        %v1920 = vld [vmem:[#allocation6 + $0x48] sm:$0xff]
        %v1921 = vld [vmem:[#allocation6 + $0x50] sm:$0xff]
        %v1922 = vld [vmem:[#allocation6 + $0x58] sm:$0xff]
        %v1923 = vld [vmem:[#allocation6 + $0x60] sm:$0xff]
        %v1924 = vld [vmem:[#allocation6 + $0x68] sm:$0xff]
        %v1925 = vld [vmem:[#allocation6 + $0x70] sm:$0xff]
        %v1926 = vld [vmem:[#allocation6 + $0x78] sm:$0xff]
        %v1927 = vld [vmem:[#allocation6 + $0x80] sm:$0xff]
        %v1928 = vld [vmem:[#allocation6 + $0x88] sm:$0xff]
        %v1929 = vld [vmem:[#allocation6 + $0x90] sm:$0xff]
        %v1930 = vld [vmem:[#allocation6 + $0x98] sm:$0xff]
        %v1931 = vld [vmem:[#allocation6 + $0xa0] sm:$0xff]
        %v1932 = vld [vmem:[#allocation6 + $0xa8] sm:$0xff]
        %v1933 = vld [vmem:[#allocation6 + $0xb0] sm:$0xff]
        %v1934 = vld [vmem:[#allocation6 + $0xb8] sm:$0xff]
        %v1935 = vld [vmem:[#allocation6 + $0xc0] sm:$0xff]
        %v1936 = vld [vmem:[#allocation6 + $0xc8] sm:$0xff]
        %v1937 = vld [vmem:[#allocation6 + $0xd0] sm:$0xff]
        %v1938 = vld [vmem:[#allocation6 + $0xd8] sm:$0xff]
        %v1939 = vld [vmem:[#allocation6 + $0xe0] sm:$0xff]
        %v1940 = vld [vmem:[#allocation6 + $0xe8] sm:$0xff]
        %v1941 = vld [vmem:[#allocation6 + $0xf0] sm:$0xff]
        %v1942 = vld [vmem:[#allocation6 + $0xf8] sm:$0xff]
        %v1943 = vld [vmem:[#allocation6 + $0x100] sm:$0xff]
        %v1944 = vld [vmem:[#allocation6 + $0x108] sm:$0xff]
        %v1945 = vld [vmem:[#allocation6 + $0x110] sm:$0xff]
        %v1946 = vld [vmem:[#allocation6 + $0x118] sm:$0xff]
        %v1947 = vld [vmem:[#allocation6 + $0x120] sm:$0xff]
        %v1948 = vld [vmem:[#allocation6 + $0x128] sm:$0xff]
        %v1949 = vld [vmem:[#allocation6 + $0x130] sm:$0xff]
        %v1950 = vld [vmem:[#allocation6 + $0x138] sm:$0xff]
        %v1951 = vld [vmem:[#allocation6 + $0x140] sm:$0xff]
        %v1952 = vld [vmem:[#allocation6 + $0x148] sm:$0xff]
        %v1953 = vld [vmem:[#allocation6 + $0x150] sm:$0xff]
        %v1954 = vld [vmem:[#allocation6 + $0x158] sm:$0xff]
        %v1955 = vld [vmem:[#allocation6 + $0x160] sm:$0xff]
        %v1956 = vld [vmem:[#allocation6 + $0x168] sm:$0xff]
        %v1957 = vld [vmem:[#allocation6 + $0x170] sm:$0xff]
        %v1958 = vld [vmem:[#allocation6 + $0x178] sm:$0xff]
        %v1959 = vld [vmem:[#allocation6 + $0x180] sm:$0xff]
        %v1960 = vld [vmem:[#allocation6 + $0x188] sm:$0xff]
        %v1961 = vld [vmem:[#allocation6 + $0x190] sm:$0xff]
        %v1962 = vld [vmem:[#allocation6 + $0x198] sm:$0xff]
        %v1963 = vld [vmem:[#allocation6 + $0x1a0] sm:$0xff]
        %v1964 = vld [vmem:[#allocation6 + $0x1a8] sm:$0xff]
        %v1965 = vld [vmem:[#allocation6 + $0x1b0] sm:$0xff]
        %v1966 = vld [vmem:[#allocation6 + $0x1b8] sm:$0xff]
        %v1967 = vld [vmem:[#allocation6 + $0x1c0] sm:$0xff]
        %v1968 = vld [vmem:[#allocation6 + $0x1c8] sm:$0xff]
        %v1969 = vld [vmem:[#allocation6 + $0x1d0] sm:$0xff]
        %v1970 = vld [vmem:[#allocation6 + $0x1d8] sm:$0xff]
        %v1971 = vld [vmem:[#allocation6 + $0x1e0] sm:$0xff]
        %v1972 = vld [vmem:[#allocation6 + $0x1e8] sm:$0xff]
        %v1973 = vld [vmem:[#allocation6 + $0x1f0] sm:$0xff]
        %v1974 = vld [vmem:[#allocation6 + $0x1f8] sm:$0xff]
        %v1975 = vld [vmem:[#allocation6 + $0x200] sm:$0xff]
        %v1976 = vld [vmem:[#allocation6 + $0x208] sm:$0xff]
        %v1977 = vld [vmem:[#allocation6 + $0x210] sm:$0xff]
        %v1978 = vld [vmem:[#allocation6 + $0x218] sm:$0xff]
        %v1979 = vld [vmem:[#allocation6 + $0x220] sm:$0xff]
        %v1980 = vld [vmem:[#allocation6 + $0x228] sm:$0xff]
        %v1981 = vld [vmem:[#allocation6 + $0x230] sm:$0xff]
        %v1982 = vld [vmem:[#allocation6 + $0x238] sm:$0xff]
        %v1983 = vld [vmem:[#allocation6 + $0x240] sm:$0xff]
        %v1984 = vld [vmem:[#allocation6 + $0x248] sm:$0xff]
        %v1985 = vld [vmem:[#allocation6 + $0x250] sm:$0xff]
        %v1986 = vld [vmem:[#allocation6 + $0x258] sm:$0xff]
        %v1987 = vld [vmem:[#allocation6 + $0x260] sm:$0xff]
        %v1988 = vld [vmem:[#allocation6 + $0x268] sm:$0xff]
        %v1989 = vld [vmem:[#allocation6 + $0x270] sm:$0xff]
        %v1990 = vld [vmem:[#allocation6 + $0x278] sm:$0xff]
        %v1991 = vld [vmem:[#allocation6 + $0x280] sm:$0xff]
        %v1992 = vld [vmem:[#allocation6 + $0x288] sm:$0xff]
        %v1993 = vld [vmem:[#allocation6 + $0x290] sm:$0xff]
        %v1994 = vld [vmem:[#allocation6 + $0x298] sm:$0xff]
        %v1995 = vld [vmem:[#allocation6 + $0x2a0] sm:$0xff]
        %v1996 = vld [vmem:[#allocation6 + $0x2a8] sm:$0xff]
        %v1997 = vld [vmem:[#allocation6 + $0x2b0] sm:$0xff]
        %v1998 = vld [vmem:[#allocation6 + $0x2b8] sm:$0xff]
        %v1999 = vld [vmem:[#allocation6 + $0x2c0] sm:$0xff]
        %v2000 = vld [vmem:[#allocation6 + $0x2c8] sm:$0xff]
        %v2001 = vld [vmem:[#allocation6 + $0x2d0] sm:$0xff]
        %v2002 = vld [vmem:[#allocation6 + $0x2d8] sm:$0xff]
        %v2003 = vld [vmem:[#allocation6 + $0x2e0] sm:$0xff]
        %v2004 = vld [vmem:[#allocation6 + $0x2e8] sm:$0xff]
        %v2005 = vld [vmem:[#allocation6 + $0x2f0] sm:$0xff]
        %v2006 = vld [vmem:[#allocation6 + $0x2f8] sm:$0xff]
        %v2007 = vld [vmem:[#allocation6 + $0x300] sm:$0xff]
        %v2008 = vld [vmem:[#allocation6 + $0x308] sm:$0xff]
        %v2009 = vld [vmem:[#allocation6 + $0x310] sm:$0xff]
        %v2010 = vld [vmem:[#allocation6 + $0x318] sm:$0xff]
        %v2011 = vld [vmem:[#allocation6 + $0x320] sm:$0xff]
        %v2012 = vld [vmem:[#allocation6 + $0x328] sm:$0xff]
        %v2013 = vld [vmem:[#allocation6 + $0x330] sm:$0xff]
        %v2014 = vld [vmem:[#allocation6 + $0x338] sm:$0xff]
        %v2015 = vld [vmem:[#allocation6 + $0x340] sm:$0xff]
        %v2016 = vld [vmem:[#allocation6 + $0x348] sm:$0xff]
        %v2017 = vld [vmem:[#allocation6 + $0x350] sm:$0xff]
        %v2018 = vld [vmem:[#allocation6 + $0x358] sm:$0xff]
        %v2019 = vld [vmem:[#allocation6 + $0x360] sm:$0xff]
        %v2020 = vld [vmem:[#allocation6 + $0x368] sm:$0xff]
        %v2021 = vld [vmem:[#allocation6 + $0x370] sm:$0xff]
        %v2022 = vld [vmem:[#allocation6 + $0x378] sm:$0xff]
        %v2023 = vld [vmem:[#allocation6 + $0x380] sm:$0xff]
        %v2024 = vld [vmem:[#allocation6 + $0x388] sm:$0xff]
        %v2025 = vld [vmem:[#allocation6 + $0x390] sm:$0xff]
        %v2026 = vld [vmem:[#allocation6 + $0x398] sm:$0xff]
        %v2027 = vld [vmem:[#allocation6 + $0x3a0] sm:$0xff]
        %v2028 = vld [vmem:[#allocation6 + $0x3a8] sm:$0xff]
        %v2029 = vld [vmem:[#allocation6 + $0x3b0] sm:$0xff]
        %v2030 = vld [vmem:[#allocation6 + $0x3b8] sm:$0xff]
        %v2031 = vld [vmem:[#allocation6 + $0x3c0] sm:$0xff]
        %v2032 = vld [vmem:[#allocation6 + $0x3c8] sm:$0xff]
        %v2033 = vld [vmem:[#allocation6 + $0x3d0] sm:$0xff]
        %v2034 = vld [vmem:[#allocation6 + $0x3d8] sm:$0xff]
        %v2035 = vld [vmem:[#allocation6 + $0x3e0] sm:$0xff]
        %v2036 = vld [vmem:[#allocation6 + $0x3e8] sm:$0xff]
        %v2037 = vld [vmem:[#allocation6 + $0x3f0] sm:$0xff]
        %v2038 = vld [vmem:[#allocation6 + $0x3f8] sm:$0xff]
        %v2039 = vld [vmem:[#allocation6 + $0x400] sm:$0xff]
        %v2040 = vld [vmem:[#allocation6 + $0x408] sm:$0xff]
        %v2041 = vld [vmem:[#allocation6 + $0x410] sm:$0xff]
        %v2042 = vld [vmem:[#allocation6 + $0x418] sm:$0xff]
        %v2043 = vld [vmem:[#allocation6 + $0x420] sm:$0xff]
        %v2044 = vld [vmem:[#allocation6 + $0x428] sm:$0xff]
        %v2045 = vld [vmem:[#allocation6 + $0x430] sm:$0xff]
        %v2046 = vld [vmem:[#allocation6 + $0x438] sm:$0xff]
        %v2047 = vld [vmem:[#allocation6 + $0x440] sm:$0xff]
        %v2048 = vld [vmem:[#allocation6 + $0x448] sm:$0xff]
        %v2049 = vld [vmem:[#allocation6 + $0x450] sm:$0xff]
        %v2050 = vld [vmem:[#allocation6 + $0x458] sm:$0xff]
        %v2051 = vld [vmem:[#allocation6 + $0x460] sm:$0xff]
        %v2052 = vld [vmem:[#allocation6 + $0x468] sm:$0xff]
        %v2053 = vld [vmem:[#allocation6 + $0x470] sm:$0xff]
        %v2054 = vld [vmem:[#allocation6 + $0x478] sm:$0xff]
        %v2055 = vld [vmem:[%s2] sm:$0x3]
        %v2057 = vlaneseq
        %v2058 = vshrl.u32 %v2057, 7
        %v2059 = vsub.s32 0, %v2058
        %v2060 = vrot.slane %v2055, %v2059
        %v2061 = vlaneseq
        %v2062 = vshrl.u32 %v2061, 7
        %v2063 = vsub.s32 1, %v2062
        %v2064 = vrot.slane %v2055, %v2063
        %v2192 = vunpack.c.l.b16 %v1786
        %v2193 = vunpack.c.h.b16 %v1786
        %v2194 = vunpack.c.l.b16 %v1787
        %v2195 = vunpack.c.h.b16 %v1787
        %v2196 = vunpack.c.l.b16 %v1788
        %v2197 = vunpack.c.h.b16 %v1788
        %v2198 = vunpack.c.l.b16 %v1789
        %v2199 = vunpack.c.h.b16 %v1789
        %v2200 = vunpack.c.l.b16 %v1790
        %v2201 = vunpack.c.l.b16 %v1791
        %v2202 = vunpack.c.h.b16 %v1791
        %v2203 = vunpack.c.l.b16 %v1792
        %v2204 = vunpack.c.h.b16 %v1792
        %v2205 = vunpack.c.l.b16 %v1793
        %v2206 = vunpack.c.h.b16 %v1793
        %v2207 = vunpack.c.l.b16 %v1794
        %v2208 = vunpack.c.h.b16 %v1794
        %v2209 = vunpack.c.l.b16 %v1795
        %v2210 = vunpack.c.l.b16 %v1796
        %v2211 = vunpack.c.h.b16 %v1796
        %v2212 = vunpack.c.l.b16 %v1797
        %v2213 = vunpack.c.h.b16 %v1797
        %v2214 = vunpack.c.l.b16 %v1798
        %v2215 = vunpack.c.h.b16 %v1798
        %v2216 = vunpack.c.l.b16 %v1799
        %v2217 = vunpack.c.h.b16 %v1799
        %v2218 = vunpack.c.l.b16 %v1800
        %v2219 = vunpack.c.l.b16 %v1801
        %v2220 = vunpack.c.h.b16 %v1801
        %v2221 = vunpack.c.l.b16 %v1802
        %v2222 = vunpack.c.h.b16 %v1802
        %v2223 = vunpack.c.l.b16 %v1803
        %v2224 = vunpack.c.h.b16 %v1803
        %v2225 = vunpack.c.l.b16 %v1804
        %v2226 = vunpack.c.h.b16 %v1804
        %v2227 = vunpack.c.l.b16 %v1805
        %v2228 = vunpack.c.l.b16 %v1806
        %v2229 = vunpack.c.h.b16 %v1806
        %v2230 = vunpack.c.l.b16 %v1807
        %v2231 = vunpack.c.h.b16 %v1807
        %v2232 = vunpack.c.l.b16 %v1808
        %v2233 = vunpack.c.h.b16 %v1808
        %v2234 = vunpack.c.l.b16 %v1809
        %v2235 = vunpack.c.h.b16 %v1809
        %v2236 = vunpack.c.l.b16 %v1810
        %v2237 = vunpack.c.l.b16 %v1811
        %v2238 = vunpack.c.h.b16 %v1811
        %v2239 = vunpack.c.l.b16 %v1812
        %v2240 = vunpack.c.h.b16 %v1812
        %v2241 = vunpack.c.l.b16 %v1813
        %v2242 = vunpack.c.h.b16 %v1813
        %v2243 = vunpack.c.l.b16 %v1814
        %v2244 = vunpack.c.h.b16 %v1814
        %v2245 = vunpack.c.l.b16 %v1815
        %v2246 = vunpack.c.l.b16 %v1816
        %v2247 = vunpack.c.h.b16 %v1816
        %v2248 = vunpack.c.l.b16 %v1817
        %v2249 = vunpack.c.h.b16 %v1817
        %v2250 = vunpack.c.l.b16 %v1818
        %v2251 = vunpack.c.h.b16 %v1818
        %v2252 = vunpack.c.l.b16 %v1819
        %v2253 = vunpack.c.h.b16 %v1819
        %v2254 = vunpack.c.l.b16 %v1820
        %v2255 = vunpack.c.l.b16 %v1821
        %v2256 = vunpack.c.h.b16 %v1821
        %v2257 = vunpack.c.l.b16 %v1822
        %v2258 = vunpack.c.h.b16 %v1822
        %v2259 = vunpack.c.l.b16 %v1823
        %v2260 = vunpack.c.h.b16 %v1823
        %v2261 = vunpack.c.l.b16 %v1824
        %v2262 = vunpack.c.h.b16 %v1824
        %v2263 = vunpack.c.l.b16 %v1825
        %v2264 = vunpack.c.l.b16 %v1826
        %v2265 = vunpack.c.h.b16 %v1826
        %v2266 = vunpack.c.l.b16 %v1827
        %v2267 = vunpack.c.h.b16 %v1827
        %v2268 = vunpack.c.l.b16 %v1828
        %v2269 = vunpack.c.h.b16 %v1828
        %v2270 = vunpack.c.l.b16 %v1829
        %v2271 = vunpack.c.h.b16 %v1829
        %v2272 = vunpack.c.l.b16 %v1830
        %v2273 = vunpack.c.l.b16 %v1831
        %v2274 = vunpack.c.h.b16 %v1831
        %v2275 = vunpack.c.l.b16 %v1832
        %v2276 = vunpack.c.h.b16 %v1832
        %v2277 = vunpack.c.l.b16 %v1833
        %v2278 = vunpack.c.h.b16 %v1833
        %v2279 = vunpack.c.l.b16 %v1834
        %v2280 = vunpack.c.h.b16 %v1834
        %v2281 = vunpack.c.l.b16 %v1835
        %v2282 = vunpack.c.l.b16 %v1836
        %v2283 = vunpack.c.h.b16 %v1836
        %v2284 = vunpack.c.l.b16 %v1837
        %v2285 = vunpack.c.h.b16 %v1837
        %v2286 = vunpack.c.l.b16 %v1838
        %v2287 = vunpack.c.h.b16 %v1838
        %v2288 = vunpack.c.l.b16 %v1839
        %v2289 = vunpack.c.h.b16 %v1839
        %v2290 = vunpack.c.l.b16 %v1840
        %v2291 = vunpack.c.l.b16 %v1841
        %v2292 = vunpack.c.h.b16 %v1841
        %v2293 = vunpack.c.l.b16 %v1842
        %v2294 = vunpack.c.h.b16 %v1842
        %v2295 = vunpack.c.l.b16 %v1843
        %v2296 = vunpack.c.h.b16 %v1843
        %v2297 = vunpack.c.l.b16 %v1844
        %v2298 = vunpack.c.h.b16 %v1844
        %v2299 = vunpack.c.l.b16 %v1845
        %v2300 = vunpack.c.l.b16 %v1846
        %v2301 = vunpack.c.h.b16 %v1846
        %v2302 = vunpack.c.l.b16 %v1847
        %v2303 = vunpack.c.h.b16 %v1847
        %v2304 = vunpack.c.l.b16 %v1848
        %v2305 = vunpack.c.h.b16 %v1848
        %v2306 = vunpack.c.l.b16 %v1849
        %v2307 = vunpack.c.h.b16 %v1849
        %v2308 = vunpack.c.l.b16 %v1850
        %v2309 = vunpack.c.l.b16 %v1851
        %v2310 = vunpack.c.h.b16 %v1851
        %v2311 = vunpack.c.l.b16 %v1852
        %v2312 = vunpack.c.h.b16 %v1852
        %v2313 = vunpack.c.l.b16 %v1853
        %v2314 = vunpack.c.h.b16 %v1853
        %v2315 = vunpack.c.l.b16 %v1854
        %v2316 = vunpack.c.h.b16 %v1854
        %v2317 = vunpack.c.l.b16 %v1855
        %v2318 = vunpack.c.l.b16 %v1856
        %v2319 = vunpack.c.h.b16 %v1856
        %v2320 = vunpack.c.l.b16 %v1857
        %v2321 = vunpack.c.h.b16 %v1857
        %v2322 = vunpack.c.l.b16 %v1858
        %v2323 = vunpack.c.h.b16 %v1858
        %v2324 = vunpack.c.l.b16 %v1859
        %v2325 = vunpack.c.h.b16 %v1859
        %v2326 = vunpack.c.l.b16 %v1860
        %v2327 = vunpack.c.l.b16 %v1861
        %v2328 = vunpack.c.h.b16 %v1861
        %v2329 = vunpack.c.l.b16 %v1862
        %v2330 = vunpack.c.h.b16 %v1862
        %v2331 = vunpack.c.l.b16 %v1863
        %v2332 = vunpack.c.h.b16 %v1863
        %v2333 = vunpack.c.l.b16 %v1864
        %v2334 = vunpack.c.h.b16 %v1864
        %v2335 = vunpack.c.l.b16 %v1865
        %v2336 = vunpack.c.l.b16 %v1866
        %v2337 = vunpack.c.h.b16 %v1866
        %v2338 = vunpack.c.l.b16 %v1867
        %v2339 = vunpack.c.h.b16 %v1867
        %v2340 = vunpack.c.l.b16 %v1868
        %v2341 = vunpack.c.h.b16 %v1868
        %v2342 = vunpack.c.l.b16 %v1869
        %v2343 = vunpack.c.h.b16 %v1869
        %v2344 = vunpack.c.l.b16 %v1870
        %v2345 = vunpack.c.l.b16 %v1871
        %v2346 = vunpack.c.h.b16 %v1871
        %v2347 = vunpack.c.l.b16 %v1872
        %v2348 = vunpack.c.h.b16 %v1872
        %v2349 = vunpack.c.l.b16 %v1873
        %v2350 = vunpack.c.h.b16 %v1873
        %v2351 = vunpack.c.l.b16 %v1874
        %v2352 = vunpack.c.h.b16 %v1874
        %v2353 = vunpack.c.l.b16 %v1875
        %v2354 = vunpack.c.l.b16 %v1876
        %v2355 = vunpack.c.h.b16 %v1876
        %v2356 = vunpack.c.l.b16 %v1877
        %v2357 = vunpack.c.h.b16 %v1877
        %v2358 = vunpack.c.l.b16 %v1878
        %v2359 = vunpack.c.h.b16 %v1878
        %v2360 = vunpack.c.l.b16 %v1879
        %v2361 = vunpack.c.h.b16 %v1879
        %v2362 = vunpack.c.l.b16 %v1880
        %v2363 = vunpack.c.l.b16 %v1881
        %v2364 = vunpack.c.h.b16 %v1881
        %v2365 = vunpack.c.l.b16 %v1882
        %v2366 = vunpack.c.h.b16 %v1882
        %v2367 = vunpack.c.l.b16 %v1883
        %v2368 = vunpack.c.h.b16 %v1883
        %v2369 = vunpack.c.l.b16 %v1884
        %v2370 = vunpack.c.h.b16 %v1884
        %v2371 = vunpack.c.l.b16 %v1885
        %v2372 = vunpack.c.l.b16 %v1886
        %v2373 = vunpack.c.h.b16 %v1886
        %v2374 = vunpack.c.l.b16 %v1887
        %v2375 = vunpack.c.h.b16 %v1887
        %v2376 = vunpack.c.l.b16 %v1888
        %v2377 = vunpack.c.h.b16 %v1888
        %v2378 = vunpack.c.l.b16 %v1889
        %v2379 = vunpack.c.h.b16 %v1889
        %v2380 = vunpack.c.l.b16 %v1890
        %v2381 = vunpack.c.l.b16 %v1891
        %v2382 = vunpack.c.h.b16 %v1891
        %v2383 = vunpack.c.l.b16 %v1892
        %v2384 = vunpack.c.h.b16 %v1892
        %v2385 = vunpack.c.l.b16 %v1893
        %v2386 = vunpack.c.h.b16 %v1893
        %v2387 = vunpack.c.l.b16 %v1894
        %v2388 = vunpack.c.h.b16 %v1894
        %v2389 = vunpack.c.l.b16 %v1895
        %v2390 = vunpack.c.l.b16 %v1896
        %v2391 = vunpack.c.h.b16 %v1896
        %v2392 = vunpack.c.l.b16 %v1897
        %v2393 = vunpack.c.h.b16 %v1897
        %v2394 = vunpack.c.l.b16 %v1898
        %v2395 = vunpack.c.h.b16 %v1898
        %v2396 = vunpack.c.l.b16 %v1899
        %v2397 = vunpack.c.h.b16 %v1899
        %v2398 = vunpack.c.l.b16 %v1900
        %v2399 = vunpack.c.l.b16 %v1901
        %v2400 = vunpack.c.h.b16 %v1901
        %v2401 = vunpack.c.l.b16 %v1902
        %v2402 = vunpack.c.h.b16 %v1902
        %v2403 = vunpack.c.l.b16 %v1903
        %v2404 = vunpack.c.h.b16 %v1903
        %v2405 = vunpack.c.l.b16 %v1904
        %v2406 = vunpack.c.h.b16 %v1904
        %v2407 = vunpack.c.l.b16 %v1905
        %v2408 = vunpack.c.l.b16 %v1906
        %v2409 = vunpack.c.h.b16 %v1906
        %v2410 = vunpack.c.l.b16 %v1907
        %v2411 = vunpack.c.h.b16 %v1907
        %v2412 = vunpack.c.l.b16 %v1908
        %v2413 = vunpack.c.h.b16 %v1908
        %v2414 = vunpack.c.l.b16 %v1909
        %v2415 = vunpack.c.h.b16 %v1909
        %v2416 = vunpack.c.l.b16 %v1910
        %v2417 = vpack.c.b16 %v2201, %v2192
        %v2418 = vpack.c.b16 %v2202, %v2193
        %v2419 = vpack.c.b16 %v2203, %v2194
        %v2420 = vpack.c.b16 %v2204, %v2195
        %v2421 = vpack.c.b16 %v2205, %v2196
        %v2422 = vpack.c.b16 %v2206, %v2197
        %v2423 = vpack.c.b16 %v2207, %v2198
        %v2424 = vpack.c.b16 %v2208, %v2199
        %v2425 = vpack.c.b16 %v2209, %v2200
        %v2426 = vpack.c.b16 %v2219, %v2210
        %v2427 = vpack.c.b16 %v2220, %v2211
        %v2428 = vpack.c.b16 %v2221, %v2212
        %v2429 = vpack.c.b16 %v2222, %v2213
        %v2430 = vpack.c.b16 %v2223, %v2214
        %v2431 = vpack.c.b16 %v2224, %v2215
        %v2432 = vpack.c.b16 %v2225, %v2216
        %v2433 = vpack.c.b16 %v2226, %v2217
        %v2434 = vpack.c.b16 %v2227, %v2218
        %v2435 = vpack.c.b16 %v2237, %v2228
        %v2436 = vpack.c.b16 %v2238, %v2229
        %v2437 = vpack.c.b16 %v2239, %v2230
        %v2438 = vpack.c.b16 %v2240, %v2231
        %v2439 = vpack.c.b16 %v2241, %v2232
        %v2440 = vpack.c.b16 %v2242, %v2233
        %v2441 = vpack.c.b16 %v2243, %v2234
        %v2442 = vpack.c.b16 %v2244, %v2235
        %v2443 = vpack.c.b16 %v2245, %v2236
        %v2444 = vpack.c.b16 %v2255, %v2246
        %v2445 = vpack.c.b16 %v2256, %v2247
        %v2446 = vpack.c.b16 %v2257, %v2248
        %v2447 = vpack.c.b16 %v2258, %v2249
        %v2448 = vpack.c.b16 %v2259, %v2250
        %v2449 = vpack.c.b16 %v2260, %v2251
        %v2450 = vpack.c.b16 %v2261, %v2252
        %v2451 = vpack.c.b16 %v2262, %v2253
        %v2452 = vpack.c.b16 %v2263, %v2254
        %v2453 = vpack.c.b16 %v2273, %v2264
        %v2454 = vpack.c.b16 %v2274, %v2265
        %v2455 = vpack.c.b16 %v2275, %v2266
        %v2456 = vpack.c.b16 %v2276, %v2267
        %v2457 = vpack.c.b16 %v2277, %v2268
        %v2458 = vpack.c.b16 %v2278, %v2269
        %v2459 = vpack.c.b16 %v2279, %v2270
        %v2460 = vpack.c.b16 %v2280, %v2271
        %v2461 = vpack.c.b16 %v2281, %v2272
        %v2462 = vpack.c.b16 %v2291, %v2282
        %v2463 = vpack.c.b16 %v2292, %v2283
        %v2464 = vpack.c.b16 %v2293, %v2284
        %v2465 = vpack.c.b16 %v2294, %v2285
        %v2466 = vpack.c.b16 %v2295, %v2286
        %v2467 = vpack.c.b16 %v2296, %v2287
        %v2468 = vpack.c.b16 %v2297, %v2288
        %v2469 = vpack.c.b16 %v2298, %v2289
        %v2470 = vpack.c.b16 %v2299, %v2290
        %v2471 = vpack.c.b16 %v2309, %v2300
        %v2472 = vpack.c.b16 %v2310, %v2301
        %v2473 = vpack.c.b16 %v2311, %v2302
        %v2474 = vpack.c.b16 %v2312, %v2303
        %v2475 = vpack.c.b16 %v2313, %v2304
        %v2476 = vpack.c.b16 %v2314, %v2305
        %v2477 = vpack.c.b16 %v2315, %v2306
        %v2478 = vpack.c.b16 %v2316, %v2307
        %v2479 = vpack.c.b16 %v2317, %v2308
        %v2480 = vpack.c.b16 %v2327, %v2318
        %v2481 = vpack.c.b16 %v2328, %v2319
        %v2482 = vpack.c.b16 %v2329, %v2320
        %v2483 = vpack.c.b16 %v2330, %v2321
        %v2484 = vpack.c.b16 %v2331, %v2322
        %v2485 = vpack.c.b16 %v2332, %v2323
        %v2486 = vpack.c.b16 %v2333, %v2324
        %v2487 = vpack.c.b16 %v2334, %v2325
        %v2488 = vpack.c.b16 %v2335, %v2326
        %v2489 = vpack.c.b16 %v2345, %v2336
        %v2490 = vpack.c.b16 %v2346, %v2337
        %v2491 = vpack.c.b16 %v2347, %v2338
        %v2492 = vpack.c.b16 %v2348, %v2339
        %v2493 = vpack.c.b16 %v2349, %v2340
        %v2494 = vpack.c.b16 %v2350, %v2341
        %v2495 = vpack.c.b16 %v2351, %v2342
        %v2496 = vpack.c.b16 %v2352, %v2343
        %v2497 = vpack.c.b16 %v2353, %v2344
        %v2498 = vpack.c.b16 %v2363, %v2354
        %v2499 = vpack.c.b16 %v2364, %v2355
        %v2500 = vpack.c.b16 %v2365, %v2356
        %v2501 = vpack.c.b16 %v2366, %v2357
        %v2502 = vpack.c.b16 %v2367, %v2358
        %v2503 = vpack.c.b16 %v2368, %v2359
        %v2504 = vpack.c.b16 %v2369, %v2360
        %v2505 = vpack.c.b16 %v2370, %v2361
        %v2506 = vpack.c.b16 %v2371, %v2362
        %v2507 = vpack.c.b16 %v2381, %v2372
        %v2508 = vpack.c.b16 %v2382, %v2373
        %v2509 = vpack.c.b16 %v2383, %v2374
        %v2510 = vpack.c.b16 %v2384, %v2375
        %v2511 = vpack.c.b16 %v2385, %v2376
        %v2512 = vpack.c.b16 %v2386, %v2377
        %v2513 = vpack.c.b16 %v2387, %v2378
        %v2514 = vpack.c.b16 %v2388, %v2379
        %v2515 = vpack.c.b16 %v2389, %v2380
        %v2516 = vpack.c.b16 %v2399, %v2390
        %v2517 = vpack.c.b16 %v2400, %v2391
        %v2518 = vpack.c.b16 %v2401, %v2392
        %v2519 = vpack.c.b16 %v2402, %v2393
        %v2520 = vpack.c.b16 %v2403, %v2394
        %v2521 = vpack.c.b16 %v2404, %v2395
        %v2522 = vpack.c.b16 %v2405, %v2396
        %v2523 = vpack.c.b16 %v2406, %v2397
        %v2524 = vpack.c.b16 %v2407, %v2398
        %v2525 = vpack.c.b16 %v2408, %v2408
        %v2526 = vpack.c.b16 %v2409, %v2409
        %v2527 = vpack.c.b16 %v2410, %v2410
        %v2528 = vpack.c.b16 %v2411, %v2411
        %v2529 = vpack.c.b16 %v2412, %v2412
        %v2530 = vpack.c.b16 %v2413, %v2413
        %v2531 = vpack.c.b16 %v2414, %v2414
        %v2532 = vpack.c.b16 %v2415, %v2415
        %v2533 = vpack.c.b16 %v2416, %v2416
        %v2795 = vunpack.c.l.b16 %v1911
        %v2796 = vunpack.c.h.b16 %v1911
        %v2797 = vunpack.c.l.b16 %v1912
        %v2798 = vunpack.c.h.b16 %v1912
        %v2799 = vunpack.c.l.b16 %v1913
        %v2800 = vunpack.c.h.b16 %v1913
        %v2801 = vunpack.c.l.b16 %v1914
        %v2802 = vunpack.c.h.b16 %v1914
        %v2803 = vunpack.c.l.b16 %v1915
        %v2804 = vunpack.c.h.b16 %v1915
        %v2805 = vunpack.c.l.b16 %v1916
        %v2806 = vunpack.c.h.b16 %v1916
        %v2807 = vunpack.c.l.b16 %v1917
        %v2808 = vunpack.c.h.b16 %v1917
        %v2809 = vunpack.c.l.b16 %v1918
        %v2810 = vunpack.c.h.b16 %v1918
        %v2811 = vunpack.c.l.b16 %v1919
        %v2812 = vunpack.c.h.b16 %v1919
        %v2813 = vunpack.c.l.b16 %v1920
        %v2814 = vunpack.c.h.b16 %v1920
        %v2815 = vunpack.c.l.b16 %v1921
        %v2816 = vunpack.c.h.b16 %v1921
        %v2817 = vunpack.c.l.b16 %v1922
        %v2818 = vunpack.c.h.b16 %v1922
        %v2819 = vunpack.c.l.b16 %v1923
        %v2820 = vunpack.c.h.b16 %v1923
        %v2821 = vunpack.c.l.b16 %v1924
        %v2822 = vunpack.c.h.b16 %v1924
        %v2823 = vunpack.c.l.b16 %v1925
        %v2824 = vunpack.c.h.b16 %v1925
        %v2825 = vunpack.c.l.b16 %v1926
        %v2826 = vunpack.c.h.b16 %v1926
        %v2827 = vunpack.c.l.b16 %v1927
        %v2828 = vunpack.c.h.b16 %v1927
        %v2829 = vunpack.c.l.b16 %v1928
        %v2830 = vunpack.c.h.b16 %v1928
        %v2831 = vunpack.c.l.b16 %v1929
        %v2832 = vunpack.c.h.b16 %v1929
        %v2833 = vunpack.c.l.b16 %v1930
        %v2834 = vunpack.c.h.b16 %v1930
        %v2835 = vunpack.c.l.b16 %v1931
        %v2836 = vunpack.c.h.b16 %v1931
        %v2837 = vunpack.c.l.b16 %v1932
        %v2838 = vunpack.c.h.b16 %v1932
        %v2839 = vunpack.c.l.b16 %v1933
        %v2840 = vunpack.c.h.b16 %v1933
        %v2841 = vunpack.c.l.b16 %v1934
        %v2842 = vunpack.c.h.b16 %v1934
        %v2843 = vunpack.c.l.b16 %v1935
        %v2844 = vunpack.c.h.b16 %v1935
        %v2845 = vunpack.c.l.b16 %v1936
        %v2846 = vunpack.c.h.b16 %v1936
        %v2847 = vunpack.c.l.b16 %v1937
        %v2848 = vunpack.c.h.b16 %v1937
        %v2849 = vunpack.c.l.b16 %v1938
        %v2850 = vunpack.c.h.b16 %v1938
        %v2851 = vunpack.c.l.b16 %v1939
        %v2852 = vunpack.c.h.b16 %v1939
        %v2853 = vunpack.c.l.b16 %v1940
        %v2854 = vunpack.c.h.b16 %v1940
        %v2855 = vunpack.c.l.b16 %v1941
        %v2856 = vunpack.c.h.b16 %v1941
        %v2857 = vunpack.c.l.b16 %v1942
        %v2858 = vunpack.c.h.b16 %v1942
        %v2859 = vunpack.c.l.b16 %v1943
        %v2860 = vunpack.c.h.b16 %v1943
        %v2861 = vunpack.c.l.b16 %v1944
        %v2862 = vunpack.c.h.b16 %v1944
        %v2863 = vunpack.c.l.b16 %v1945
        %v2864 = vunpack.c.h.b16 %v1945
        %v2865 = vunpack.c.l.b16 %v1946
        %v2866 = vunpack.c.h.b16 %v1946
        %v2867 = vunpack.c.l.b16 %v1947
        %v2868 = vunpack.c.h.b16 %v1947
        %v2869 = vunpack.c.l.b16 %v1948
        %v2870 = vunpack.c.h.b16 %v1948
        %v2871 = vunpack.c.l.b16 %v1949
        %v2872 = vunpack.c.h.b16 %v1949
        %v2873 = vunpack.c.l.b16 %v1950
        %v2874 = vunpack.c.h.b16 %v1950
        %v2875 = vunpack.c.l.b16 %v1951
        %v2876 = vunpack.c.h.b16 %v1951
        %v2877 = vunpack.c.l.b16 %v1952
        %v2878 = vunpack.c.h.b16 %v1952
        %v2879 = vunpack.c.l.b16 %v1953
        %v2880 = vunpack.c.h.b16 %v1953
        %v2881 = vunpack.c.l.b16 %v1954
        %v2882 = vunpack.c.h.b16 %v1954
        %v2883 = vunpack.c.l.b16 %v1955
        %v2884 = vunpack.c.h.b16 %v1955
        %v2885 = vunpack.c.l.b16 %v1956
        %v2886 = vunpack.c.h.b16 %v1956
        %v2887 = vunpack.c.l.b16 %v1957
        %v2888 = vunpack.c.h.b16 %v1957
        %v2889 = vunpack.c.l.b16 %v1958
        %v2890 = vunpack.c.h.b16 %v1958
        %v2891 = vunpack.c.l.b16 %v1959
        %v2892 = vunpack.c.h.b16 %v1959
        %v2893 = vunpack.c.l.b16 %v1960
        %v2894 = vunpack.c.h.b16 %v1960
        %v2895 = vunpack.c.l.b16 %v1961
        %v2896 = vunpack.c.h.b16 %v1961
        %v2897 = vunpack.c.l.b16 %v1962
        %v2898 = vunpack.c.h.b16 %v1962
        %v2899 = vunpack.c.l.b16 %v1963
        %v2900 = vunpack.c.h.b16 %v1963
        %v2901 = vunpack.c.l.b16 %v1964
        %v2902 = vunpack.c.h.b16 %v1964
        %v2903 = vunpack.c.l.b16 %v1965
        %v2904 = vunpack.c.h.b16 %v1965
        %v2905 = vunpack.c.l.b16 %v1966
        %v2906 = vunpack.c.h.b16 %v1966
        %v2907 = vunpack.c.l.b16 %v1967
        %v2908 = vunpack.c.h.b16 %v1967
        %v2909 = vunpack.c.l.b16 %v1968
        %v2910 = vunpack.c.h.b16 %v1968
        %v2911 = vunpack.c.l.b16 %v1969
        %v2912 = vunpack.c.h.b16 %v1969
        %v2913 = vunpack.c.l.b16 %v1970
        %v2914 = vunpack.c.h.b16 %v1970
        %v2915 = vunpack.c.l.b16 %v1971
        %v2916 = vunpack.c.h.b16 %v1971
        %v2917 = vunpack.c.l.b16 %v1972
        %v2918 = vunpack.c.h.b16 %v1972
        %v2919 = vunpack.c.l.b16 %v1973
        %v2920 = vunpack.c.h.b16 %v1973
        %v2921 = vunpack.c.l.b16 %v1974
        %v2922 = vunpack.c.h.b16 %v1974
        %v2923 = vunpack.c.l.b16 %v1975
        %v2924 = vunpack.c.h.b16 %v1975
        %v2925 = vunpack.c.l.b16 %v1976
        %v2926 = vunpack.c.h.b16 %v1976
        %v2927 = vunpack.c.l.b16 %v1977
        %v2928 = vunpack.c.h.b16 %v1977
        %v2929 = vunpack.c.l.b16 %v1978
        %v2930 = vunpack.c.h.b16 %v1978
        %v2931 = vunpack.c.l.b16 %v1979
        %v2932 = vunpack.c.h.b16 %v1979
        %v2933 = vunpack.c.l.b16 %v1980
        %v2934 = vunpack.c.h.b16 %v1980
        %v2935 = vunpack.c.l.b16 %v1981
        %v2936 = vunpack.c.h.b16 %v1981
        %v2937 = vunpack.c.l.b16 %v1982
        %v2938 = vunpack.c.h.b16 %v1982
        %v2939 = vunpack.c.l.b16 %v1983
        %v2940 = vunpack.c.h.b16 %v1983
        %v2941 = vunpack.c.l.b16 %v1984
        %v2942 = vunpack.c.h.b16 %v1984
        %v2943 = vunpack.c.l.b16 %v1985
        %v2944 = vunpack.c.h.b16 %v1985
        %v2945 = vunpack.c.l.b16 %v1986
        %v2946 = vunpack.c.h.b16 %v1986
        %v2947 = vunpack.c.l.b16 %v1987
        %v2948 = vunpack.c.h.b16 %v1987
        %v2949 = vunpack.c.l.b16 %v1988
        %v2950 = vunpack.c.h.b16 %v1988
        %v2951 = vunpack.c.l.b16 %v1989
        %v2952 = vunpack.c.h.b16 %v1989
        %v2953 = vunpack.c.l.b16 %v1990
        %v2954 = vunpack.c.h.b16 %v1990
        %v2955 = vunpack.c.l.b16 %v1991
        %v2956 = vunpack.c.h.b16 %v1991
        %v2957 = vunpack.c.l.b16 %v1992
        %v2958 = vunpack.c.h.b16 %v1992
        %v2959 = vunpack.c.l.b16 %v1993
        %v2960 = vunpack.c.h.b16 %v1993
        %v2961 = vunpack.c.l.b16 %v1994
        %v2962 = vunpack.c.h.b16 %v1994
        %v2963 = vunpack.c.l.b16 %v1995
        %v2964 = vunpack.c.h.b16 %v1995
        %v2965 = vunpack.c.l.b16 %v1996
        %v2966 = vunpack.c.h.b16 %v1996
        %v2967 = vunpack.c.l.b16 %v1997
        %v2968 = vunpack.c.h.b16 %v1997
        %v2969 = vunpack.c.l.b16 %v1998
        %v2970 = vunpack.c.h.b16 %v1998
        %v2971 = vunpack.c.l.b16 %v1999
        %v2972 = vunpack.c.h.b16 %v1999
        %v2973 = vunpack.c.l.b16 %v2000
        %v2974 = vunpack.c.h.b16 %v2000
        %v2975 = vunpack.c.l.b16 %v2001
        %v2976 = vunpack.c.h.b16 %v2001
        %v2977 = vunpack.c.l.b16 %v2002
        %v2978 = vunpack.c.h.b16 %v2002
        %v2979 = vunpack.c.l.b16 %v2003
        %v2980 = vunpack.c.h.b16 %v2003
        %v2981 = vunpack.c.l.b16 %v2004
        %v2982 = vunpack.c.h.b16 %v2004
        %v2983 = vunpack.c.l.b16 %v2005
        %v2984 = vunpack.c.h.b16 %v2005
        %v2985 = vunpack.c.l.b16 %v2006
        %v2986 = vunpack.c.h.b16 %v2006
        %v2987 = vunpack.c.l.b16 %v2007
        %v2988 = vunpack.c.h.b16 %v2007
        %v2989 = vunpack.c.l.b16 %v2008
        %v2990 = vunpack.c.h.b16 %v2008
        %v2991 = vunpack.c.l.b16 %v2009
        %v2992 = vunpack.c.h.b16 %v2009
        %v2993 = vunpack.c.l.b16 %v2010
        %v2994 = vunpack.c.h.b16 %v2010
        %v2995 = vunpack.c.l.b16 %v2011
        %v2996 = vunpack.c.h.b16 %v2011
        %v2997 = vunpack.c.l.b16 %v2012
        %v2998 = vunpack.c.h.b16 %v2012
        %v2999 = vunpack.c.l.b16 %v2013
        %v3000 = vunpack.c.h.b16 %v2013
        %v3001 = vunpack.c.l.b16 %v2014
        %v3002 = vunpack.c.h.b16 %v2014
        %v3003 = vunpack.c.l.b16 %v2015
        %v3004 = vunpack.c.h.b16 %v2015
        %v3005 = vunpack.c.l.b16 %v2016
        %v3006 = vunpack.c.h.b16 %v2016
        %v3007 = vunpack.c.l.b16 %v2017
        %v3008 = vunpack.c.h.b16 %v2017
        %v3009 = vunpack.c.l.b16 %v2018
        %v3010 = vunpack.c.h.b16 %v2018
        %v3011 = vunpack.c.l.b16 %v2019
        %v3012 = vunpack.c.h.b16 %v2019
        %v3013 = vunpack.c.l.b16 %v2020
        %v3014 = vunpack.c.h.b16 %v2020
        %v3015 = vunpack.c.l.b16 %v2021
        %v3016 = vunpack.c.h.b16 %v2021
        %v3017 = vunpack.c.l.b16 %v2022
        %v3018 = vunpack.c.h.b16 %v2022
        %v3019 = vunpack.c.l.b16 %v2023
        %v3020 = vunpack.c.h.b16 %v2023
        %v3021 = vunpack.c.l.b16 %v2024
        %v3022 = vunpack.c.h.b16 %v2024
        %v3023 = vunpack.c.l.b16 %v2025
        %v3024 = vunpack.c.h.b16 %v2025
        %v3025 = vunpack.c.l.b16 %v2026
        %v3026 = vunpack.c.h.b16 %v2026
        %v3027 = vunpack.c.l.b16 %v2027
        %v3028 = vunpack.c.h.b16 %v2027
        %v3029 = vunpack.c.l.b16 %v2028
        %v3030 = vunpack.c.h.b16 %v2028
        %v3031 = vunpack.c.l.b16 %v2029
        %v3032 = vunpack.c.h.b16 %v2029
        %v3033 = vunpack.c.l.b16 %v2030
        %v3034 = vunpack.c.h.b16 %v2030
        %v3035 = vunpack.c.l.b16 %v2031
        %v3036 = vunpack.c.h.b16 %v2031
        %v3037 = vunpack.c.l.b16 %v2032
        %v3038 = vunpack.c.h.b16 %v2032
        %v3039 = vunpack.c.l.b16 %v2033
        %v3040 = vunpack.c.h.b16 %v2033
        %v3041 = vunpack.c.l.b16 %v2034
        %v3042 = vunpack.c.h.b16 %v2034
        %v3043 = vunpack.c.l.b16 %v2035
        %v3044 = vunpack.c.h.b16 %v2035
        %v3045 = vunpack.c.l.b16 %v2036
        %v3046 = vunpack.c.h.b16 %v2036
        %v3047 = vunpack.c.l.b16 %v2037
        %v3048 = vunpack.c.h.b16 %v2037
        %v3049 = vunpack.c.l.b16 %v2038
        %v3050 = vunpack.c.h.b16 %v2038
        %v3051 = vunpack.c.l.b16 %v2039
        %v3052 = vunpack.c.h.b16 %v2039
        %v3053 = vunpack.c.l.b16 %v2040
        %v3054 = vunpack.c.h.b16 %v2040
        %v3055 = vunpack.c.l.b16 %v2041
        %v3056 = vunpack.c.h.b16 %v2041
        %v3057 = vunpack.c.l.b16 %v2042
        %v3058 = vunpack.c.h.b16 %v2042
        %v3059 = vunpack.c.l.b16 %v2043
        %v3060 = vunpack.c.h.b16 %v2043
        %v3061 = vunpack.c.l.b16 %v2044
        %v3062 = vunpack.c.h.b16 %v2044
        %v3063 = vunpack.c.l.b16 %v2045
        %v3064 = vunpack.c.h.b16 %v2045
        %v3065 = vunpack.c.l.b16 %v2046
        %v3066 = vunpack.c.h.b16 %v2046
        %v3067 = vunpack.c.l.b16 %v2047
        %v3068 = vunpack.c.h.b16 %v2047
        %v3069 = vunpack.c.l.b16 %v2048
        %v3070 = vunpack.c.h.b16 %v2048
        %v3071 = vunpack.c.l.b16 %v2049
        %v3072 = vunpack.c.h.b16 %v2049
        %v3073 = vunpack.c.l.b16 %v2050
        %v3074 = vunpack.c.h.b16 %v2050
        %v3075 = vunpack.c.l.b16 %v2051
        %v3076 = vunpack.c.h.b16 %v2051
        %v3077 = vunpack.c.l.b16 %v2052
        %v3078 = vunpack.c.h.b16 %v2052
        %v3079 = vunpack.c.l.b16 %v2053
        %v3080 = vunpack.c.h.b16 %v2053
        %v3081 = vunpack.c.l.b16 %v2054
        %v3082 = vunpack.c.h.b16 %v2054
        %v3083 = vpack.c.b16 %v2797, %v2795
        %v3084 = vpack.c.b16 %v2798, %v2796
        %v3085 = vpack.c.b16 %v2801, %v2799
        %v3086 = vpack.c.b16 %v2802, %v2800
        %v3087 = vpack.c.b16 %v2805, %v2803
        %v3088 = vpack.c.b16 %v2806, %v2804
        %v3089 = vpack.c.b16 %v2809, %v2807
        %v3090 = vpack.c.b16 %v2810, %v2808
        %v3091 = vpack.c.b16 %v2813, %v2811
        %v3092 = vpack.c.b16 %v2814, %v2812
        %v3093 = vpack.c.b16 %v2817, %v2815
        %v3094 = vpack.c.b16 %v2818, %v2816
        %v3095 = vpack.c.b16 %v2821, %v2819
        %v3096 = vpack.c.b16 %v2822, %v2820
        %v3097 = vpack.c.b16 %v2825, %v2823
        %v3098 = vpack.c.b16 %v2826, %v2824
        %v3099 = vpack.c.b16 %v2829, %v2827
        %v3100 = vpack.c.b16 %v2830, %v2828
        %v3101 = vpack.c.b16 %v2833, %v2831
        %v3102 = vpack.c.b16 %v2834, %v2832
        %v3103 = vpack.c.b16 %v2837, %v2835
        %v3104 = vpack.c.b16 %v2838, %v2836
        %v3105 = vpack.c.b16 %v2841, %v2839
        %v3106 = vpack.c.b16 %v2842, %v2840
        %v3107 = vpack.c.b16 %v2845, %v2843
        %v3108 = vpack.c.b16 %v2846, %v2844
        %v3109 = vpack.c.b16 %v2849, %v2847
        %v3110 = vpack.c.b16 %v2850, %v2848
        %v3111 = vpack.c.b16 %v2853, %v2851
        %v3112 = vpack.c.b16 %v2854, %v2852
        %v3113 = vpack.c.b16 %v2857, %v2855
        %v3114 = vpack.c.b16 %v2858, %v2856
        %v3115 = vpack.c.b16 %v2861, %v2859
        %v3116 = vpack.c.b16 %v2862, %v2860
        %v3117 = vpack.c.b16 %v2865, %v2863
        %v3118 = vpack.c.b16 %v2866, %v2864
        %v3119 = vpack.c.b16 %v2869, %v2867
        %v3120 = vpack.c.b16 %v2870, %v2868
        %v3121 = vpack.c.b16 %v2873, %v2871
        %v3122 = vpack.c.b16 %v2874, %v2872
        %v3123 = vpack.c.b16 %v2877, %v2875
        %v3124 = vpack.c.b16 %v2878, %v2876
        %v3125 = vpack.c.b16 %v2881, %v2879
        %v3126 = vpack.c.b16 %v2882, %v2880
        %v3127 = vpack.c.b16 %v2885, %v2883
        %v3128 = vpack.c.b16 %v2886, %v2884
        %v3129 = vpack.c.b16 %v2889, %v2887
        %v3130 = vpack.c.b16 %v2890, %v2888
        %v3131 = vpack.c.b16 %v2893, %v2891
        %v3132 = vpack.c.b16 %v2894, %v2892
        %v3133 = vpack.c.b16 %v2897, %v2895
        %v3134 = vpack.c.b16 %v2898, %v2896
        %v3135 = vpack.c.b16 %v2901, %v2899
        %v3136 = vpack.c.b16 %v2902, %v2900
        %v3137 = vpack.c.b16 %v2905, %v2903
        %v3138 = vpack.c.b16 %v2906, %v2904
        %v3139 = vpack.c.b16 %v2909, %v2907
        %v3140 = vpack.c.b16 %v2910, %v2908
        %v3141 = vpack.c.b16 %v2913, %v2911
        %v3142 = vpack.c.b16 %v2914, %v2912
        %v3143 = vpack.c.b16 %v2917, %v2915
        %v3144 = vpack.c.b16 %v2918, %v2916
        %v3145 = vpack.c.b16 %v2921, %v2919
        %v3146 = vpack.c.b16 %v2922, %v2920
        %v3147 = vpack.c.b16 %v2925, %v2923
        %v3148 = vpack.c.b16 %v2926, %v2924
        %v3149 = vpack.c.b16 %v2929, %v2927
        %v3150 = vpack.c.b16 %v2930, %v2928
        %v3151 = vpack.c.b16 %v2933, %v2931
        %v3152 = vpack.c.b16 %v2934, %v2932
        %v3153 = vpack.c.b16 %v2937, %v2935
        %v3154 = vpack.c.b16 %v2938, %v2936
        %v3155 = vpack.c.b16 %v2941, %v2939
        %v3156 = vpack.c.b16 %v2942, %v2940
        %v3157 = vpack.c.b16 %v2945, %v2943
        %v3158 = vpack.c.b16 %v2946, %v2944
        %v3159 = vpack.c.b16 %v2949, %v2947
        %v3160 = vpack.c.b16 %v2950, %v2948
        %v3161 = vpack.c.b16 %v2953, %v2951
        %v3162 = vpack.c.b16 %v2954, %v2952
        %v3163 = vpack.c.b16 %v2957, %v2955
        %v3164 = vpack.c.b16 %v2958, %v2956
        %v3165 = vpack.c.b16 %v2961, %v2959
        %v3166 = vpack.c.b16 %v2962, %v2960
        %v3167 = vpack.c.b16 %v2965, %v2963
        %v3168 = vpack.c.b16 %v2966, %v2964
        %v3169 = vpack.c.b16 %v2969, %v2967
        %v3170 = vpack.c.b16 %v2970, %v2968
        %v3171 = vpack.c.b16 %v2973, %v2971
        %v3172 = vpack.c.b16 %v2974, %v2972
        %v3173 = vpack.c.b16 %v2977, %v2975
        %v3174 = vpack.c.b16 %v2978, %v2976
        %v3175 = vpack.c.b16 %v2981, %v2979
        %v3176 = vpack.c.b16 %v2982, %v2980
        %v3177 = vpack.c.b16 %v2985, %v2983
        %v3178 = vpack.c.b16 %v2986, %v2984
        %v3179 = vpack.c.b16 %v2989, %v2987
        %v3180 = vpack.c.b16 %v2990, %v2988
        %v3181 = vpack.c.b16 %v2993, %v2991
        %v3182 = vpack.c.b16 %v2994, %v2992
        %v3183 = vpack.c.b16 %v2997, %v2995
        %v3184 = vpack.c.b16 %v2998, %v2996
        %v3185 = vpack.c.b16 %v3001, %v2999
        %v3186 = vpack.c.b16 %v3002, %v3000
        %v3187 = vpack.c.b16 %v3005, %v3003
        %v3188 = vpack.c.b16 %v3006, %v3004
        %v3189 = vpack.c.b16 %v3009, %v3007
        %v3190 = vpack.c.b16 %v3010, %v3008
        %v3191 = vpack.c.b16 %v3013, %v3011
        %v3192 = vpack.c.b16 %v3014, %v3012
        %v3193 = vpack.c.b16 %v3017, %v3015
        %v3194 = vpack.c.b16 %v3018, %v3016
        %v3195 = vpack.c.b16 %v3021, %v3019
        %v3196 = vpack.c.b16 %v3022, %v3020
        %v3197 = vpack.c.b16 %v3025, %v3023
        %v3198 = vpack.c.b16 %v3026, %v3024
        %v3199 = vpack.c.b16 %v3029, %v3027
        %v3200 = vpack.c.b16 %v3030, %v3028
        %v3201 = vpack.c.b16 %v3033, %v3031
        %v3202 = vpack.c.b16 %v3034, %v3032
        %v3203 = vpack.c.b16 %v3037, %v3035
        %v3204 = vpack.c.b16 %v3038, %v3036
        %v3205 = vpack.c.b16 %v3041, %v3039
        %v3206 = vpack.c.b16 %v3042, %v3040
        %v3207 = vpack.c.b16 %v3045, %v3043
        %v3208 = vpack.c.b16 %v3046, %v3044
        %v3209 = vpack.c.b16 %v3049, %v3047
        %v3210 = vpack.c.b16 %v3050, %v3048
        %v3211 = vpack.c.b16 %v3053, %v3051
        %v3212 = vpack.c.b16 %v3054, %v3052
        %v3213 = vpack.c.b16 %v3057, %v3055
        %v3214 = vpack.c.b16 %v3058, %v3056
        %v3215 = vpack.c.b16 %v3061, %v3059
        %v3216 = vpack.c.b16 %v3062, %v3060
        %v3217 = vpack.c.b16 %v3065, %v3063
        %v3218 = vpack.c.b16 %v3066, %v3064
        %v3219 = vpack.c.b16 %v3069, %v3067
        %v3220 = vpack.c.b16 %v3070, %v3068
        %v3221 = vpack.c.b16 %v3073, %v3071
        %v3222 = vpack.c.b16 %v3074, %v3072
        %v3223 = vpack.c.b16 %v3077, %v3075
        %v3224 = vpack.c.b16 %v3078, %v3076
        %v3225 = vpack.c.b16 %v3081, %v3079
        %v3226 = vpack.c.b16 %v3082, %v3080
        %3371 = vmatprep.subr.bf16.mxu0 %v3084
        %3372 = vmatpush1.bf16.msra.mxu0 %v3083
        %3373 = vmatprep.subr.bf16.mxu0 %v3086
        %3374 = vmatpush1.bf16.msra.mxu0 %v3085
        %3375 = vmatprep.subr.bf16.mxu0 %v3088
        %3376 = vmatpush1.bf16.msra.mxu0 %v3087
        %3377 = vmatprep.subr.bf16.mxu0 %v3090
        %3378 = vmatpush1.bf16.msra.mxu0 %v3089
        %3379 = vmatprep.subr.bf16.mxu0 %v3092
        %3380 = vmatpush1.bf16.msra.mxu0 %v3091
        %3381 = vmatprep.subr.bf16.mxu0 %v3094
        %3382 = vmatpush1.bf16.msra.mxu0 %v3093
        %3383 = vmatprep.subr.bf16.mxu0 %v3096
        %3384 = vmatpush1.bf16.msra.mxu0 %v3095
        %3385 = vmatprep.subr.bf16.mxu0 %v3098
        %3386 = vmatpush1.bf16.msra.mxu0 %v3097
        %3387 = vmatprep.subr.bf16.mxu0 %v3100
        %3388 = vmatpush1.bf16.msra.mxu0 %v3099
        %3389 = vmatprep.subr.bf16.mxu0 %v3102
        %3390 = vmatpush1.bf16.msra.mxu0 %v3101
        %3391 = vmatprep.subr.bf16.mxu0 %v3104
        %3392 = vmatpush1.bf16.msra.mxu0 %v3103
        %3393 = vmatprep.subr.bf16.mxu0 %v3106
        %3394 = vmatpush1.bf16.msra.mxu0 %v3105
        %3395 = vmatprep.subr.bf16.mxu0 %v3108
        %3396 = vmatpush1.bf16.msra.mxu0 %v3107
        %3397 = vmatprep.subr.bf16.mxu0 %v3110
        %3398 = vmatpush1.bf16.msra.mxu0 %v3109
        %3399 = vmatprep.subr.bf16.mxu0 %v3112
        %3400 = vmatpush1.bf16.msra.mxu0 %v3111
        %3401 = vmatprep.subr.bf16.mxu0 %v3114
        %3402 = vmatpush1.bf16.msra.mxu0 %v3113
        %3403 = vmatprep.mubr.bf16.mxu0 %v2418
        %3404 = vmatmul.mubr.bf16.gmra.mrb[0].mxu0 %v2417
        %v3405 = vpop.f32.mrb[0].mxu0
        %v3406 = vadd.f32 %v2060, %v3405
        %v3407 = vpop.f32.mrb[0].mxu0
        %v3408 = vadd.f32 %v2064, %v3407
        %v3409 = vpop.f32.mrb[0].mxu0
        %v3410 = vadd.f32 %v2060, %v3409
        %v3411 = vpop.f32.mrb[0].mxu0
        %v3412 = vadd.f32 %v2064, %v3411
        %3413 = vmatprep.mubr.bf16.mxu0 %v2427
        %3414 = vmatmul.mubr.bf16.gmra.mrb[0].mxu0 %v2426
        %v3415 = vpop.f32.mrb[0].mxu0
        %v3416 = vadd.f32 %v2060, %v3415
        %v3417 = vpop.f32.mrb[0].mxu0
        %v3418 = vadd.f32 %v2064, %v3417
        %v3419 = vpop.f32.mrb[0].mxu0
        %v3420 = vadd.f32 %v2060, %v3419
        %v3421 = vpop.f32.mrb[0].mxu0
        %v3422 = vadd.f32 %v2064, %v3421
        %3423 = vmatprep.mubr.bf16.mxu0 %v2436
        %3424 = vmatmul.mubr.bf16.gmra.mrb[0].mxu0 %v2435
        %v3425 = vpop.f32.mrb[0].mxu0
        %v3426 = vadd.f32 %v2060, %v3425
        %v3427 = vpop.f32.mrb[0].mxu0
        %v3428 = vadd.f32 %v2064, %v3427
        %v3429 = vpop.f32.mrb[0].mxu0
        %v3430 = vadd.f32 %v2060, %v3429
        %v3431 = vpop.f32.mrb[0].mxu0
        %v3432 = vadd.f32 %v2064, %v3431
        %3433 = vmatprep.mubr.bf16.mxu0 %v2445
        %3434 = vmatmul.mubr.bf16.gmra.mrb[0].mxu0 %v2444
        %v3435 = vpop.f32.mrb[0].mxu0
        %v3436 = vadd.f32 %v2060, %v3435
        %v3437 = vpop.f32.mrb[0].mxu0
        %v3438 = vadd.f32 %v2064, %v3437
        %v3439 = vpop.f32.mrb[0].mxu0
        %v3440 = vadd.f32 %v2060, %v3439
        %v3441 = vpop.f32.mrb[0].mxu0
        %v3442 = vadd.f32 %v2064, %v3441
        %3443 = vmatprep.mubr.bf16.mxu0 %v2454
        %3444 = vmatmul.mubr.bf16.gmra.mrb[0].mxu0 %v2453
        %v3445 = vpop.f32.mrb[0].mxu0
        %v3446 = vadd.f32 %v2060, %v3445
        %v3447 = vpop.f32.mrb[0].mxu0
        %v3448 = vadd.f32 %v2064, %v3447
        %v3449 = vpop.f32.mrb[0].mxu0
        %v3450 = vadd.f32 %v2060, %v3449
        %v3451 = vpop.f32.mrb[0].mxu0
        %v3452 = vadd.f32 %v2064, %v3451
        %3453 = vmatprep.mubr.bf16.mxu0 %v2463
        %3454 = vmatmul.mubr.bf16.gmra.mrb[0].mxu0 %v2462
        %v3455 = vpop.f32.mrb[0].mxu0
        %v3456 = vadd.f32 %v2060, %v3455
        %v3457 = vpop.f32.mrb[0].mxu0
        %v3458 = vadd.f32 %v2064, %v3457
        %v3459 = vpop.f32.mrb[0].mxu0
        %v3460 = vadd.f32 %v2060, %v3459
        %v3461 = vpop.f32.mrb[0].mxu0
        %v3462 = vadd.f32 %v2064, %v3461
        %3463 = vmatprep.mubr.bf16.mxu0 %v2472
        %3464 = vmatmul.mubr.bf16.gmra.mrb[0].mxu0 %v2471
        %v3465 = vpop.f32.mrb[0].mxu0
        %v3466 = vadd.f32 %v2060, %v3465
        %v3467 = vpop.f32.mrb[0].mxu0
        %v3468 = vadd.f32 %v2064, %v3467
        %v3469 = vpop.f32.mrb[0].mxu0
        %v3470 = vadd.f32 %v2060, %v3469
        %v3471 = vpop.f32.mrb[0].mxu0
        %v3472 = vadd.f32 %v2064, %v3471
        %3473 = vmatprep.mubr.bf16.mxu0 %v2481
        %3474 = vmatmul.mubr.bf16.gmra.mrb[0].mxu0 %v2480
        %v3475 = vpop.f32.mrb[0].mxu0
        %v3476 = vadd.f32 %v2060, %v3475
        %v3477 = vpop.f32.mrb[0].mxu0
        %v3478 = vadd.f32 %v2064, %v3477
        %v3479 = vpop.f32.mrb[0].mxu0
        %v3480 = vadd.f32 %v2060, %v3479
        %v3481 = vpop.f32.mrb[0].mxu0
        %v3482 = vadd.f32 %v2064, %v3481
        %3483 = vmatprep.mubr.bf16.mxu0 %v2490
        %3484 = vmatmul.mubr.bf16.gmra.mrb[0].mxu0 %v2489
        %v3485 = vpop.f32.mrb[0].mxu0
        %v3486 = vadd.f32 %v2060, %v3485
        %v3487 = vpop.f32.mrb[0].mxu0
        %v3488 = vadd.f32 %v2064, %v3487
        %v3489 = vpop.f32.mrb[0].mxu0
        %v3490 = vadd.f32 %v2060, %v3489
        %v3491 = vpop.f32.mrb[0].mxu0
        %v3492 = vadd.f32 %v2064, %v3491
        %3493 = vmatprep.mubr.bf16.mxu0 %v2499
        %3494 = vmatmul.mubr.bf16.gmra.mrb[0].mxu0 %v2498
        %v3495 = vpop.f32.mrb[0].mxu0
        %v3496 = vadd.f32 %v2060, %v3495
        %v3497 = vpop.f32.mrb[0].mxu0
        %v3498 = vadd.f32 %v2064, %v3497
        %v3499 = vpop.f32.mrb[0].mxu0
        %v3500 = vadd.f32 %v2060, %v3499
        %v3501 = vpop.f32.mrb[0].mxu0
        %v3502 = vadd.f32 %v2064, %v3501
        %3503 = vmatprep.mubr.bf16.mxu0 %v2508
        %3504 = vmatmul.mubr.bf16.gmra.mrb[0].mxu0 %v2507
        %v3505 = vpop.f32.mrb[0].mxu0
        %v3506 = vadd.f32 %v2060, %v3505
        %v3507 = vpop.f32.mrb[0].mxu0
        %v3508 = vadd.f32 %v2064, %v3507
        %v3509 = vpop.f32.mrb[0].mxu0
        %v3510 = vadd.f32 %v2060, %v3509
        %v3511 = vpop.f32.mrb[0].mxu0
        %v3512 = vadd.f32 %v2064, %v3511
        %3513 = vmatprep.mubr.bf16.mxu0 %v2517
        %3514 = vmatmul.mubr.bf16.gmra.mrb[0].mxu0 %v2516
        %v3515 = vpop.f32.mrb[0].mxu0
        %v3516 = vadd.f32 %v2060, %v3515
        %v3517 = vpop.f32.mrb[0].mxu0
        %v3518 = vadd.f32 %v2064, %v3517
        %v3519 = vpop.f32.mrb[0].mxu0
        %v3520 = vadd.f32 %v2060, %v3519
        %v3521 = vpop.f32.mrb[0].mxu0
        %v3522 = vadd.f32 %v2064, %v3521
        %3523 = vmatprep.mubr.bf16.mxu0 %v2526
        %3524 = vmatmul.mubr.bf16.gmra.mrb[0].mxu0 %v2525
        %v3525 = vpop.f32.mrb[0].mxu0
        %v3526 = vadd.f32 %v2060, %v3525
        %v3527 = vpop.f32.mrb[0].mxu0
        %v3528 = vadd.f32 %v2064, %v3527
        %v3529 = vpop.f32.mrb[0].mxu0
        %v3530 = vpop.f32.mrb[0].mxu0
        %3531 = vdwg.mxu0
        %3532 = vmatprep.subr.bf16.mxu0 %v3116
        %3533 = vmatpush1.bf16.msra.mxu0 %v3115
        %3534 = vmatprep.subr.bf16.mxu0 %v3118
        %3535 = vmatpush1.bf16.msra.mxu0 %v3117
        %3536 = vmatprep.subr.bf16.mxu0 %v3120
        %3537 = vmatpush1.bf16.msra.mxu0 %v3119
        %3538 = vmatprep.subr.bf16.mxu0 %v3122
        %3539 = vmatpush1.bf16.msra.mxu0 %v3121
        %3540 = vmatprep.subr.bf16.mxu0 %v3124
        %3541 = vmatpush1.bf16.msra.mxu0 %v3123
        %3542 = vmatprep.subr.bf16.mxu0 %v3126
        %3543 = vmatpush1.bf16.msra.mxu0 %v3125
        %3544 = vmatprep.subr.bf16.mxu0 %v3128
        %3545 = vmatpush1.bf16.msra.mxu0 %v3127
        %3546 = vmatprep.subr.bf16.mxu0 %v3130
        %3547 = vmatpush1.bf16.msra.mxu0 %v3129
        %3548 = vmatprep.subr.bf16.mxu0 %v3132
        %3549 = vmatpush1.bf16.msra.mxu0 %v3131
        %3550 = vmatprep.subr.bf16.mxu0 %v3134
        %3551 = vmatpush1.bf16.msra.mxu0 %v3133
        %3552 = vmatprep.subr.bf16.mxu0 %v3136
        %3553 = vmatpush1.bf16.msra.mxu0 %v3135
        %3554 = vmatprep.subr.bf16.mxu0 %v3138
        %3555 = vmatpush1.bf16.msra.mxu0 %v3137
        %3556 = vmatprep.subr.bf16.mxu0 %v3140
        %3557 = vmatpush1.bf16.msra.mxu0 %v3139
        %3558 = vmatprep.subr.bf16.mxu0 %v3142
        %3559 = vmatpush1.bf16.msra.mxu0 %v3141
        %3560 = vmatprep.subr.bf16.mxu0 %v3144
        %3561 = vmatpush1.bf16.msra.mxu0 %v3143
        %3562 = vmatprep.subr.bf16.mxu0 %v3146
        %3563 = vmatpush1.bf16.msra.mxu0 %v3145
        %3564 = vmatprep.mubr.bf16.mxu0 %v2420
        %3565 = vmatmul.mubr.bf16.gmra.mrb[0].mxu0 %v2419
        %v3566 = vpop.f32.mrb[0].mxu0
        %v3567 = vadd.f32 %v3406, %v3566
        %v3568 = vpop.f32.mrb[0].mxu0
        %v3569 = vadd.f32 %v3408, %v3568
        %v3570 = vpop.f32.mrb[0].mxu0
        %v3571 = vadd.f32 %v3410, %v3570
        %v3572 = vpop.f32.mrb[0].mxu0
        %v3573 = vadd.f32 %v3412, %v3572
        %3574 = vmatprep.mubr.bf16.mxu0 %v2429
        %3575 = vmatmul.mubr.bf16.gmra.mrb[0].mxu0 %v2428
        %v3576 = vpop.f32.mrb[0].mxu0
        %v3577 = vadd.f32 %v3416, %v3576
        %v3578 = vpop.f32.mrb[0].mxu0
        %v3579 = vadd.f32 %v3418, %v3578
        %v3580 = vpop.f32.mrb[0].mxu0
        %v3581 = vadd.f32 %v3420, %v3580
        %v3582 = vpop.f32.mrb[0].mxu0
        %v3583 = vadd.f32 %v3422, %v3582
        %3584 = vmatprep.mubr.bf16.mxu0 %v2438
        %3585 = vmatmul.mubr.bf16.gmra.mrb[0].mxu0 %v2437
        %v3586 = vpop.f32.mrb[0].mxu0
        %v3587 = vadd.f32 %v3426, %v3586
        %v3588 = vpop.f32.mrb[0].mxu0
        %v3589 = vadd.f32 %v3428, %v3588
        %v3590 = vpop.f32.mrb[0].mxu0
        %v3591 = vadd.f32 %v3430, %v3590
        %v3592 = vpop.f32.mrb[0].mxu0
        %v3593 = vadd.f32 %v3432, %v3592
        %3594 = vmatprep.mubr.bf16.mxu0 %v2447
        %3595 = vmatmul.mubr.bf16.gmra.mrb[0].mxu0 %v2446
        %v3596 = vpop.f32.mrb[0].mxu0
        %v3597 = vadd.f32 %v3436, %v3596
        %v3598 = vpop.f32.mrb[0].mxu0
        %v3599 = vadd.f32 %v3438, %v3598
        %v3600 = vpop.f32.mrb[0].mxu0
        %v3601 = vadd.f32 %v3440, %v3600
        %v3602 = vpop.f32.mrb[0].mxu0
        %v3603 = vadd.f32 %v3442, %v3602
        %3604 = vmatprep.mubr.bf16.mxu0 %v2456
        %3605 = vmatmul.mubr.bf16.gmra.mrb[0].mxu0 %v2455
        %v3606 = vpop.f32.mrb[0].mxu0
        %v3607 = vadd.f32 %v3446, %v3606
        %v3608 = vpop.f32.mrb[0].mxu0
        %v3609 = vadd.f32 %v3448, %v3608
        %v3610 = vpop.f32.mrb[0].mxu0
        %v3611 = vadd.f32 %v3450, %v3610
        %v3612 = vpop.f32.mrb[0].mxu0
        %v3613 = vadd.f32 %v3452, %v3612
        %3614 = vmatprep.mubr.bf16.mxu0 %v2465
        %3615 = vmatmul.mubr.bf16.gmra.mrb[0].mxu0 %v2464
        %v3616 = vpop.f32.mrb[0].mxu0
        %v3617 = vadd.f32 %v3456, %v3616
        %v3618 = vpop.f32.mrb[0].mxu0
        %v3619 = vadd.f32 %v3458, %v3618
        %v3620 = vpop.f32.mrb[0].mxu0
        %v3621 = vadd.f32 %v3460, %v3620
        %v3622 = vpop.f32.mrb[0].mxu0
        %v3623 = vadd.f32 %v3462, %v3622
        %3624 = vmatprep.mubr.bf16.mxu0 %v2474
        %3625 = vmatmul.mubr.bf16.gmra.mrb[0].mxu0 %v2473
        %v3626 = vpop.f32.mrb[0].mxu0
        %v3627 = vadd.f32 %v3466, %v3626
        %v3628 = vpop.f32.mrb[0].mxu0
        %v3629 = vadd.f32 %v3468, %v3628
        %v3630 = vpop.f32.mrb[0].mxu0
        %v3631 = vadd.f32 %v3470, %v3630
        %v3632 = vpop.f32.mrb[0].mxu0
        %v3633 = vadd.f32 %v3472, %v3632
        %3634 = vmatprep.mubr.bf16.mxu0 %v2483
        %3635 = vmatmul.mubr.bf16.gmra.mrb[0].mxu0 %v2482
        %v3636 = vpop.f32.mrb[0].mxu0
        %v3637 = vadd.f32 %v3476, %v3636
        %v3638 = vpop.f32.mrb[0].mxu0
        %v3639 = vadd.f32 %v3478, %v3638
        %v3640 = vpop.f32.mrb[0].mxu0
        %v3641 = vadd.f32 %v3480, %v3640
        %v3642 = vpop.f32.mrb[0].mxu0
        %v3643 = vadd.f32 %v3482, %v3642
        %3644 = vmatprep.mubr.bf16.mxu0 %v2492
        %3645 = vmatmul.mubr.bf16.gmra.mrb[0].mxu0 %v2491
        %v3646 = vpop.f32.mrb[0].mxu0
        %v3647 = vadd.f32 %v3486, %v3646
        %v3648 = vpop.f32.mrb[0].mxu0
        %v3649 = vadd.f32 %v3488, %v3648
        %v3650 = vpop.f32.mrb[0].mxu0
        %v3651 = vadd.f32 %v3490, %v3650
        %v3652 = vpop.f32.mrb[0].mxu0
        %v3653 = vadd.f32 %v3492, %v3652
        %3654 = vmatprep.mubr.bf16.mxu0 %v2501
        %3655 = vmatmul.mubr.bf16.gmra.mrb[0].mxu0 %v2500
        %v3656 = vpop.f32.mrb[0].mxu0
        %v3657 = vadd.f32 %v3496, %v3656
        %v3658 = vpop.f32.mrb[0].mxu0
        %v3659 = vadd.f32 %v3498, %v3658
        %v3660 = vpop.f32.mrb[0].mxu0
        %v3661 = vadd.f32 %v3500, %v3660
        %v3662 = vpop.f32.mrb[0].mxu0
        %v3663 = vadd.f32 %v3502, %v3662
        %3664 = vmatprep.mubr.bf16.mxu0 %v2510
        %3665 = vmatmul.mubr.bf16.gmra.mrb[0].mxu0 %v2509
        %v3666 = vpop.f32.mrb[0].mxu0
        %v3667 = vadd.f32 %v3506, %v3666
        %v3668 = vpop.f32.mrb[0].mxu0
        %v3669 = vadd.f32 %v3508, %v3668
        %v3670 = vpop.f32.mrb[0].mxu0
        %v3671 = vadd.f32 %v3510, %v3670
        %v3672 = vpop.f32.mrb[0].mxu0
        %v3673 = vadd.f32 %v3512, %v3672
        %3674 = vmatprep.mubr.bf16.mxu0 %v2519
        %3675 = vmatmul.mubr.bf16.gmra.mrb[0].mxu0 %v2518
        %v3676 = vpop.f32.mrb[0].mxu0
        %v3677 = vadd.f32 %v3516, %v3676
        %v3678 = vpop.f32.mrb[0].mxu0
        %v3679 = vadd.f32 %v3518, %v3678
        %v3680 = vpop.f32.mrb[0].mxu0
        %v3681 = vadd.f32 %v3520, %v3680
        %v3682 = vpop.f32.mrb[0].mxu0
        %v3683 = vadd.f32 %v3522, %v3682
        %3684 = vmatprep.mubr.bf16.mxu0 %v2528
        %3685 = vmatmul.mubr.bf16.gmra.mrb[0].mxu0 %v2527
        %v3686 = vpop.f32.mrb[0].mxu0
        %v3687 = vadd.f32 %v3526, %v3686
        %v3688 = vpop.f32.mrb[0].mxu0
        %v3689 = vadd.f32 %v3528, %v3688
        %v3690 = vpop.f32.mrb[0].mxu0
        %v3691 = vpop.f32.mrb[0].mxu0
        %3692 = vdwg.mxu0
        %3693 = vmatprep.subr.bf16.mxu0 %v3148
        %3694 = vmatpush1.bf16.msra.mxu0 %v3147
        %3695 = vmatprep.subr.bf16.mxu0 %v3150
        %3696 = vmatpush1.bf16.msra.mxu0 %v3149
        %3697 = vmatprep.subr.bf16.mxu0 %v3152
        %3698 = vmatpush1.bf16.msra.mxu0 %v3151
        %3699 = vmatprep.subr.bf16.mxu0 %v3154
        %3700 = vmatpush1.bf16.msra.mxu0 %v3153
        %3701 = vmatprep.subr.bf16.mxu0 %v3156
        %3702 = vmatpush1.bf16.msra.mxu0 %v3155
        %3703 = vmatprep.subr.bf16.mxu0 %v3158
        %3704 = vmatpush1.bf16.msra.mxu0 %v3157
        %3705 = vmatprep.subr.bf16.mxu0 %v3160
        %3706 = vmatpush1.bf16.msra.mxu0 %v3159
        %3707 = vmatprep.subr.bf16.mxu0 %v3162
        %3708 = vmatpush1.bf16.msra.mxu0 %v3161
        %3709 = vmatprep.subr.bf16.mxu0 %v3164
        %3710 = vmatpush1.bf16.msra.mxu0 %v3163
        %3711 = vmatprep.subr.bf16.mxu0 %v3166
        %3712 = vmatpush1.bf16.msra.mxu0 %v3165
        %3713 = vmatprep.subr.bf16.mxu0 %v3168
        %3714 = vmatpush1.bf16.msra.mxu0 %v3167
        %3715 = vmatprep.subr.bf16.mxu0 %v3170
        %3716 = vmatpush1.bf16.msra.mxu0 %v3169
        %3717 = vmatprep.subr.bf16.mxu0 %v3172
        %3718 = vmatpush1.bf16.msra.mxu0 %v3171
        %3719 = vmatprep.subr.bf16.mxu0 %v3174
        %3720 = vmatpush1.bf16.msra.mxu0 %v3173
        %3721 = vmatprep.subr.bf16.mxu0 %v3176
        %3722 = vmatpush1.bf16.msra.mxu0 %v3175
        %3723 = vmatprep.subr.bf16.mxu0 %v3178
        %3724 = vmatpush1.bf16.msra.mxu0 %v3177
        %3725 = vmatprep.mubr.bf16.mxu0 %v2422
        %3726 = vmatmul.mubr.bf16.gmra.mrb[0].mxu0 %v2421
        %v3727 = vpop.f32.mrb[0].mxu0
        %v3728 = vadd.f32 %v3567, %v3727
        %v3729 = vpop.f32.mrb[0].mxu0
        %v3730 = vadd.f32 %v3569, %v3729
        %v3731 = vpop.f32.mrb[0].mxu0
        %v3732 = vadd.f32 %v3571, %v3731
        %v3733 = vpop.f32.mrb[0].mxu0
        %v3734 = vadd.f32 %v3573, %v3733
        %3735 = vmatprep.mubr.bf16.mxu0 %v2431
        %3736 = vmatmul.mubr.bf16.gmra.mrb[0].mxu0 %v2430
        %v3737 = vpop.f32.mrb[0].mxu0
        %v3738 = vadd.f32 %v3577, %v3737
        %v3739 = vpop.f32.mrb[0].mxu0
        %v3740 = vadd.f32 %v3579, %v3739
        %v3741 = vpop.f32.mrb[0].mxu0
        %v3742 = vadd.f32 %v3581, %v3741
        %v3743 = vpop.f32.mrb[0].mxu0
        %v3744 = vadd.f32 %v3583, %v3743
        %3745 = vmatprep.mubr.bf16.mxu0 %v2440
        %3746 = vmatmul.mubr.bf16.gmra.mrb[0].mxu0 %v2439
        %v3747 = vpop.f32.mrb[0].mxu0
        %v3748 = vadd.f32 %v3587, %v3747
        %v3749 = vpop.f32.mrb[0].mxu0
        %v3750 = vadd.f32 %v3589, %v3749
        %v3751 = vpop.f32.mrb[0].mxu0
        %v3752 = vadd.f32 %v3591, %v3751
        %v3753 = vpop.f32.mrb[0].mxu0
        %v3754 = vadd.f32 %v3593, %v3753
        %3755 = vmatprep.mubr.bf16.mxu0 %v2449
        %3756 = vmatmul.mubr.bf16.gmra.mrb[0].mxu0 %v2448
        %v3757 = vpop.f32.mrb[0].mxu0
        %v3758 = vadd.f32 %v3597, %v3757
        %v3759 = vpop.f32.mrb[0].mxu0
        %v3760 = vadd.f32 %v3599, %v3759
        %v3761 = vpop.f32.mrb[0].mxu0
        %v3762 = vadd.f32 %v3601, %v3761
        %v3763 = vpop.f32.mrb[0].mxu0
        %v3764 = vadd.f32 %v3603, %v3763
        %3765 = vmatprep.mubr.bf16.mxu0 %v2458
        %3766 = vmatmul.mubr.bf16.gmra.mrb[0].mxu0 %v2457
        %v3767 = vpop.f32.mrb[0].mxu0
        %v3768 = vadd.f32 %v3607, %v3767
        %v3769 = vpop.f32.mrb[0].mxu0
        %v3770 = vadd.f32 %v3609, %v3769
        %v3771 = vpop.f32.mrb[0].mxu0
        %v3772 = vadd.f32 %v3611, %v3771
        %v3773 = vpop.f32.mrb[0].mxu0
        %v3774 = vadd.f32 %v3613, %v3773
        %3775 = vmatprep.mubr.bf16.mxu0 %v2467
        %3776 = vmatmul.mubr.bf16.gmra.mrb[0].mxu0 %v2466
        %v3777 = vpop.f32.mrb[0].mxu0
        %v3778 = vadd.f32 %v3617, %v3777
        %v3779 = vpop.f32.mrb[0].mxu0
        %v3780 = vadd.f32 %v3619, %v3779
        %v3781 = vpop.f32.mrb[0].mxu0
        %v3782 = vadd.f32 %v3621, %v3781
        %v3783 = vpop.f32.mrb[0].mxu0
        %v3784 = vadd.f32 %v3623, %v3783
        %3785 = vmatprep.mubr.bf16.mxu0 %v2476
        %3786 = vmatmul.mubr.bf16.gmra.mrb[0].mxu0 %v2475
        %v3787 = vpop.f32.mrb[0].mxu0
        %v3788 = vadd.f32 %v3627, %v3787
        %v3789 = vpop.f32.mrb[0].mxu0
        %v3790 = vadd.f32 %v3629, %v3789
        %v3791 = vpop.f32.mrb[0].mxu0
        %v3792 = vadd.f32 %v3631, %v3791
        %v3793 = vpop.f32.mrb[0].mxu0
        %v3794 = vadd.f32 %v3633, %v3793
        %3795 = vmatprep.mubr.bf16.mxu0 %v2485
        %3796 = vmatmul.mubr.bf16.gmra.mrb[0].mxu0 %v2484
        %v3797 = vpop.f32.mrb[0].mxu0
        %v3798 = vadd.f32 %v3637, %v3797
        %v3799 = vpop.f32.mrb[0].mxu0
        %v3800 = vadd.f32 %v3639, %v3799
        %v3801 = vpop.f32.mrb[0].mxu0
        %v3802 = vadd.f32 %v3641, %v3801
        %v3803 = vpop.f32.mrb[0].mxu0
        %v3804 = vadd.f32 %v3643, %v3803
        %3805 = vmatprep.mubr.bf16.mxu0 %v2494
        %3806 = vmatmul.mubr.bf16.gmra.mrb[0].mxu0 %v2493
        %v3807 = vpop.f32.mrb[0].mxu0
        %v3808 = vadd.f32 %v3647, %v3807
        %v3809 = vpop.f32.mrb[0].mxu0
        %v3810 = vadd.f32 %v3649, %v3809
        %v3811 = vpop.f32.mrb[0].mxu0
        %v3812 = vadd.f32 %v3651, %v3811
        %v3813 = vpop.f32.mrb[0].mxu0
        %v3814 = vadd.f32 %v3653, %v3813
        %3815 = vmatprep.mubr.bf16.mxu0 %v2503
        %3816 = vmatmul.mubr.bf16.gmra.mrb[0].mxu0 %v2502
        %v3817 = vpop.f32.mrb[0].mxu0
        %v3818 = vadd.f32 %v3657, %v3817
        %v3819 = vpop.f32.mrb[0].mxu0
        %v3820 = vadd.f32 %v3659, %v3819
        %v3821 = vpop.f32.mrb[0].mxu0
        %v3822 = vadd.f32 %v3661, %v3821
        %v3823 = vpop.f32.mrb[0].mxu0
        %v3824 = vadd.f32 %v3663, %v3823
        %3825 = vmatprep.mubr.bf16.mxu0 %v2512
        %3826 = vmatmul.mubr.bf16.gmra.mrb[0].mxu0 %v2511
        %v3827 = vpop.f32.mrb[0].mxu0
        %v3828 = vadd.f32 %v3667, %v3827
        %v3829 = vpop.f32.mrb[0].mxu0
        %v3830 = vadd.f32 %v3669, %v3829
        %v3831 = vpop.f32.mrb[0].mxu0
        %v3832 = vadd.f32 %v3671, %v3831
        %v3833 = vpop.f32.mrb[0].mxu0
        %v3834 = vadd.f32 %v3673, %v3833
        %3835 = vmatprep.mubr.bf16.mxu0 %v2521
        %3836 = vmatmul.mubr.bf16.gmra.mrb[0].mxu0 %v2520
        %v3837 = vpop.f32.mrb[0].mxu0
        %v3838 = vadd.f32 %v3677, %v3837
        %v3839 = vpop.f32.mrb[0].mxu0
        %v3840 = vadd.f32 %v3679, %v3839
        %v3841 = vpop.f32.mrb[0].mxu0
        %v3842 = vadd.f32 %v3681, %v3841
        %v3843 = vpop.f32.mrb[0].mxu0
        %v3844 = vadd.f32 %v3683, %v3843
        %3845 = vmatprep.mubr.bf16.mxu0 %v2530
        %3846 = vmatmul.mubr.bf16.gmra.mrb[0].mxu0 %v2529
        %v3847 = vpop.f32.mrb[0].mxu0
        %v3848 = vadd.f32 %v3687, %v3847
        %v3849 = vpop.f32.mrb[0].mxu0
        %v3850 = vadd.f32 %v3689, %v3849
        %v3851 = vpop.f32.mrb[0].mxu0
        %v3852 = vpop.f32.mrb[0].mxu0
        %3853 = vdwg.mxu0
        %3854 = vmatprep.subr.bf16.mxu0 %v3180
        %3855 = vmatpush1.bf16.msra.mxu0 %v3179
        %3856 = vmatprep.subr.bf16.mxu0 %v3182
        %3857 = vmatpush1.bf16.msra.mxu0 %v3181
        %3858 = vmatprep.subr.bf16.mxu0 %v3184
        %3859 = vmatpush1.bf16.msra.mxu0 %v3183
        %3860 = vmatprep.subr.bf16.mxu0 %v3186
        %3861 = vmatpush1.bf16.msra.mxu0 %v3185
        %3862 = vmatprep.subr.bf16.mxu0 %v3188
        %3863 = vmatpush1.bf16.msra.mxu0 %v3187
        %3864 = vmatprep.subr.bf16.mxu0 %v3190
        %3865 = vmatpush1.bf16.msra.mxu0 %v3189
        %3866 = vmatprep.subr.bf16.mxu0 %v3192
        %3867 = vmatpush1.bf16.msra.mxu0 %v3191
        %3868 = vmatprep.subr.bf16.mxu0 %v3194
        %3869 = vmatpush1.bf16.msra.mxu0 %v3193
        %3870 = vmatprep.subr.bf16.mxu0 %v3196
        %3871 = vmatpush1.bf16.msra.mxu0 %v3195
        %3872 = vmatprep.subr.bf16.mxu0 %v3198
        %3873 = vmatpush1.bf16.msra.mxu0 %v3197
        %3874 = vmatprep.subr.bf16.mxu0 %v3200
        %3875 = vmatpush1.bf16.msra.mxu0 %v3199
        %3876 = vmatprep.subr.bf16.mxu0 %v3202
        %3877 = vmatpush1.bf16.msra.mxu0 %v3201
        %3878 = vmatprep.subr.bf16.mxu0 %v3204
        %3879 = vmatpush1.bf16.msra.mxu0 %v3203
        %3880 = vmatprep.subr.bf16.mxu0 %v3206
        %3881 = vmatpush1.bf16.msra.mxu0 %v3205
        %3882 = vmatprep.subr.bf16.mxu0 %v3208
        %3883 = vmatpush1.bf16.msra.mxu0 %v3207
        %3884 = vmatprep.subr.bf16.mxu0 %v3210
        %3885 = vmatpush1.bf16.msra.mxu0 %v3209
        %3886 = vmatprep.mubr.bf16.mxu0 %v2424
        %3887 = vmatmul.mubr.bf16.gmra.mrb[0].mxu0 %v2423
        %v3888 = vpop.f32.mrb[0].mxu0
        %v3889 = vadd.f32 %v3728, %v3888
        %v3890 = vpop.f32.mrb[0].mxu0
        %v3891 = vadd.f32 %v3730, %v3890
        %v3892 = vpop.f32.mrb[0].mxu0
        %v3893 = vadd.f32 %v3732, %v3892
        %v3894 = vpop.f32.mrb[0].mxu0
        %v3895 = vadd.f32 %v3734, %v3894
        %3896 = vmatprep.mubr.bf16.mxu0 %v2433
        %3897 = vmatmul.mubr.bf16.gmra.mrb[0].mxu0 %v2432
        %v3898 = vpop.f32.mrb[0].mxu0
        %v3899 = vadd.f32 %v3738, %v3898
        %v3900 = vpop.f32.mrb[0].mxu0
        %v3901 = vadd.f32 %v3740, %v3900
        %v3902 = vpop.f32.mrb[0].mxu0
        %v3903 = vadd.f32 %v3742, %v3902
        %v3904 = vpop.f32.mrb[0].mxu0
        %v3905 = vadd.f32 %v3744, %v3904
        %3906 = vmatprep.mubr.bf16.mxu0 %v2442
        %3907 = vmatmul.mubr.bf16.gmra.mrb[0].mxu0 %v2441
        %v3908 = vpop.f32.mrb[0].mxu0
        %v3909 = vadd.f32 %v3748, %v3908
        %v3910 = vpop.f32.mrb[0].mxu0
        %v3911 = vadd.f32 %v3750, %v3910
        %v3912 = vpop.f32.mrb[0].mxu0
        %v3913 = vadd.f32 %v3752, %v3912
        %v3914 = vpop.f32.mrb[0].mxu0
        %v3915 = vadd.f32 %v3754, %v3914
        %3916 = vmatprep.mubr.bf16.mxu0 %v2451
        %3917 = vmatmul.mubr.bf16.gmra.mrb[0].mxu0 %v2450
        %v3918 = vpop.f32.mrb[0].mxu0
        %v3919 = vadd.f32 %v3758, %v3918
        %v3920 = vpop.f32.mrb[0].mxu0
        %v3921 = vadd.f32 %v3760, %v3920
        %v3922 = vpop.f32.mrb[0].mxu0
        %v3923 = vadd.f32 %v3762, %v3922
        %v3924 = vpop.f32.mrb[0].mxu0
        %v3925 = vadd.f32 %v3764, %v3924
        %3926 = vmatprep.mubr.bf16.mxu0 %v2460
        %3927 = vmatmul.mubr.bf16.gmra.mrb[0].mxu0 %v2459
        %v3928 = vpop.f32.mrb[0].mxu0
        %v3929 = vadd.f32 %v3768, %v3928
        %v3930 = vpop.f32.mrb[0].mxu0
        %v3931 = vadd.f32 %v3770, %v3930
        %v3932 = vpop.f32.mrb[0].mxu0
        %v3933 = vadd.f32 %v3772, %v3932
        %v3934 = vpop.f32.mrb[0].mxu0
        %v3935 = vadd.f32 %v3774, %v3934
        %3936 = vmatprep.mubr.bf16.mxu0 %v2469
        %3937 = vmatmul.mubr.bf16.gmra.mrb[0].mxu0 %v2468
        %v3938 = vpop.f32.mrb[0].mxu0
        %v3939 = vadd.f32 %v3778, %v3938
        %v3940 = vpop.f32.mrb[0].mxu0
        %v3941 = vadd.f32 %v3780, %v3940
        %v3942 = vpop.f32.mrb[0].mxu0
        %v3943 = vadd.f32 %v3782, %v3942
        %v3944 = vpop.f32.mrb[0].mxu0
        %v3945 = vadd.f32 %v3784, %v3944
        %3946 = vmatprep.mubr.bf16.mxu0 %v2478
        %3947 = vmatmul.mubr.bf16.gmra.mrb[0].mxu0 %v2477
        %v3948 = vpop.f32.mrb[0].mxu0
        %v3949 = vadd.f32 %v3788, %v3948
        %v3950 = vpop.f32.mrb[0].mxu0
        %v3951 = vadd.f32 %v3790, %v3950
        %v3952 = vpop.f32.mrb[0].mxu0
        %v3953 = vadd.f32 %v3792, %v3952
        %v3954 = vpop.f32.mrb[0].mxu0
        %v3955 = vadd.f32 %v3794, %v3954
        %3956 = vmatprep.mubr.bf16.mxu0 %v2487
        %3957 = vmatmul.mubr.bf16.gmra.mrb[0].mxu0 %v2486
        %v3958 = vpop.f32.mrb[0].mxu0
        %v3959 = vadd.f32 %v3798, %v3958
        %v3960 = vpop.f32.mrb[0].mxu0
        %v3961 = vadd.f32 %v3800, %v3960
        %v3962 = vpop.f32.mrb[0].mxu0
        %v3963 = vadd.f32 %v3802, %v3962
        %v3964 = vpop.f32.mrb[0].mxu0
        %v3965 = vadd.f32 %v3804, %v3964
        %3966 = vmatprep.mubr.bf16.mxu0 %v2496
        %3967 = vmatmul.mubr.bf16.gmra.mrb[0].mxu0 %v2495
        %v3968 = vpop.f32.mrb[0].mxu0
        %v3969 = vadd.f32 %v3808, %v3968
        %v3970 = vpop.f32.mrb[0].mxu0
        %v3971 = vadd.f32 %v3810, %v3970
        %v3972 = vpop.f32.mrb[0].mxu0
        %v3973 = vadd.f32 %v3812, %v3972
        %v3974 = vpop.f32.mrb[0].mxu0
        %v3975 = vadd.f32 %v3814, %v3974
        %3976 = vmatprep.mubr.bf16.mxu0 %v2505
        %3977 = vmatmul.mubr.bf16.gmra.mrb[0].mxu0 %v2504
        %v3978 = vpop.f32.mrb[0].mxu0
        %v3979 = vadd.f32 %v3818, %v3978
        %v3980 = vpop.f32.mrb[0].mxu0
        %v3981 = vadd.f32 %v3820, %v3980
        %v3982 = vpop.f32.mrb[0].mxu0
        %v3983 = vadd.f32 %v3822, %v3982
        %v3984 = vpop.f32.mrb[0].mxu0
        %v3985 = vadd.f32 %v3824, %v3984
        %3986 = vmatprep.mubr.bf16.mxu0 %v2514
        %3987 = vmatmul.mubr.bf16.gmra.mrb[0].mxu0 %v2513
        %v3988 = vpop.f32.mrb[0].mxu0
        %v3989 = vadd.f32 %v3828, %v3988
        %v3990 = vpop.f32.mrb[0].mxu0
        %v3991 = vadd.f32 %v3830, %v3990
        %v3992 = vpop.f32.mrb[0].mxu0
        %v3993 = vadd.f32 %v3832, %v3992
        %v3994 = vpop.f32.mrb[0].mxu0
        %v3995 = vadd.f32 %v3834, %v3994
        %3996 = vmatprep.mubr.bf16.mxu0 %v2523
        %3997 = vmatmul.mubr.bf16.gmra.mrb[0].mxu0 %v2522
        %v3998 = vpop.f32.mrb[0].mxu0
        %v3999 = vadd.f32 %v3838, %v3998
        %v4000 = vpop.f32.mrb[0].mxu0
        %v4001 = vadd.f32 %v3840, %v4000
        %v4002 = vpop.f32.mrb[0].mxu0
        %v4003 = vadd.f32 %v3842, %v4002
        %v4004 = vpop.f32.mrb[0].mxu0
        %v4005 = vadd.f32 %v3844, %v4004
        %4006 = vmatprep.mubr.bf16.mxu0 %v2532
        %4007 = vmatmul.mubr.bf16.gmra.mrb[0].mxu0 %v2531
        %v4008 = vpop.f32.mrb[0].mxu0
        %v4009 = vadd.f32 %v3848, %v4008
        %v4010 = vpop.f32.mrb[0].mxu0
        %v4011 = vadd.f32 %v3850, %v4010
        %v4012 = vpop.f32.mrb[0].mxu0
        %v4013 = vpop.f32.mrb[0].mxu0
        %4014 = vdwg.mxu0
        %4015 = vmatprep.subr.bf16.mxu0 %v3212
        %4016 = vmatpush1.bf16.msra.mxu0 %v3211
        %4017 = vmatprep.subr.bf16.mxu0 %v3214
        %4018 = vmatpush1.bf16.msra.mxu0 %v3213
        %4019 = vmatprep.subr.bf16.mxu0 %v3216
        %4020 = vmatpush1.bf16.msra.mxu0 %v3215
        %4021 = vmatprep.subr.bf16.mxu0 %v3218
        %4022 = vmatpush1.bf16.msra.mxu0 %v3217
        %4023 = vmatprep.subr.bf16.mxu0 %v3220
        %4024 = vmatpush1.bf16.msra.mxu0 %v3219
        %4025 = vmatprep.subr.bf16.mxu0 %v3222
        %4026 = vmatpush1.bf16.msra.mxu0 %v3221
        %4027 = vmatprep.subr.bf16.mxu0 %v3224
        %4028 = vmatpush1.bf16.msra.mxu0 %v3223
        %4029 = vmatprep.subr.bf16.mxu0 %v3226
        %4030 = vmatpush1.bf16.msra.mxu0 %v3225
        %4031 = vmatprep.subr.bf16.mxu0 0
        %4032 = vmatpush1.bf16.msra.mxu0 0
        %4033 = vmatprep.subr.bf16.mxu0 0
        %4034 = vmatpush1.bf16.msra.mxu0 0
        %4035 = vmatprep.subr.bf16.mxu0 0
        %4036 = vmatpush1.bf16.msra.mxu0 0
        %4037 = vmatprep.subr.bf16.mxu0 0
        %4038 = vmatpush1.bf16.msra.mxu0 0
        %4039 = vmatprep.subr.bf16.mxu0 0
        %4040 = vmatpush1.bf16.msra.mxu0 0
        %4041 = vmatprep.subr.bf16.mxu0 0
        %4042 = vmatpush1.bf16.msra.mxu0 0
        %4043 = vmatprep.subr.bf16.mxu0 0
        %4044 = vmatpush1.bf16.msra.mxu0 0
        %4045 = vmatprep.subr.bf16.mxu0 0
        %4046 = vmatpush1.bf16.msra.mxu0 0
        %4047 = vmatprep.mubr.bf16.mxu0 0
        %4048 = vmatmul.mubr.bf16.gmra.mrb[0].mxu0 %v2425
        %v4049 = vpop.f32.mrb[0].mxu0
        %v4050 = vadd.f32 %v3889, %v4049
        %v4051 = vpop.f32.mrb[0].mxu0
        %v4052 = vadd.f32 %v3891, %v4051
        %v4053 = vpop.f32.mrb[0].mxu0
        %v4054 = vadd.f32 %v3893, %v4053
        %v4055 = vpop.f32.mrb[0].mxu0
        %v4056 = vadd.f32 %v3895, %v4055
        %4057 = vmatprep.mubr.bf16.mxu0 0
        %4058 = vmatmul.mubr.bf16.gmra.mrb[0].mxu0 %v2434
        %v4059 = vpop.f32.mrb[0].mxu0
        %v4060 = vadd.f32 %v3899, %v4059
        %v4061 = vpop.f32.mrb[0].mxu0
        %v4062 = vadd.f32 %v3901, %v4061
        %v4063 = vpop.f32.mrb[0].mxu0
        %v4064 = vadd.f32 %v3903, %v4063
        %v4065 = vpop.f32.mrb[0].mxu0
        %v4066 = vadd.f32 %v3905, %v4065
        %4067 = vmatprep.mubr.bf16.mxu0 0
        %4068 = vmatmul.mubr.bf16.gmra.mrb[0].mxu0 %v2443
        %v4069 = vpop.f32.mrb[0].mxu0
        %v4070 = vadd.f32 %v3909, %v4069
        %v4071 = vpop.f32.mrb[0].mxu0
        %v4072 = vadd.f32 %v3911, %v4071
        %v4073 = vpop.f32.mrb[0].mxu0
        %v4074 = vadd.f32 %v3913, %v4073
        %v4075 = vpop.f32.mrb[0].mxu0
        %v4076 = vadd.f32 %v3915, %v4075
        %4077 = vmatprep.mubr.bf16.mxu0 0
        %4078 = vmatmul.mubr.bf16.gmra.mrb[0].mxu0 %v2452
        %v4079 = vpop.f32.mrb[0].mxu0
        %v4080 = vadd.f32 %v3919, %v4079
        %v4081 = vpop.f32.mrb[0].mxu0
        %v4082 = vadd.f32 %v3921, %v4081
        %v4083 = vpop.f32.mrb[0].mxu0
        %v4084 = vadd.f32 %v3923, %v4083
        %v4085 = vpop.f32.mrb[0].mxu0
        %v4086 = vadd.f32 %v3925, %v4085
        %4087 = vmatprep.mubr.bf16.mxu0 0
        %4088 = vmatmul.mubr.bf16.gmra.mrb[0].mxu0 %v2461
        %v4089 = vpop.f32.mrb[0].mxu0
        %v4090 = vadd.f32 %v3929, %v4089
        %v4091 = vpop.f32.mrb[0].mxu0
        %v4092 = vadd.f32 %v3931, %v4091
        %v4093 = vpop.f32.mrb[0].mxu0
        %v4094 = vadd.f32 %v3933, %v4093
        %v4095 = vpop.f32.mrb[0].mxu0
        %v4096 = vadd.f32 %v3935, %v4095
        %4097 = vmatprep.mubr.bf16.mxu0 0
        %4098 = vmatmul.mubr.bf16.gmra.mrb[0].mxu0 %v2470
        %v4099 = vpop.f32.mrb[0].mxu0
        %v4100 = vadd.f32 %v3939, %v4099
        %v4101 = vpop.f32.mrb[0].mxu0
        %v4102 = vadd.f32 %v3941, %v4101
        %v4103 = vpop.f32.mrb[0].mxu0
        %v4104 = vadd.f32 %v3943, %v4103
        %v4105 = vpop.f32.mrb[0].mxu0
        %v4106 = vadd.f32 %v3945, %v4105
        %4107 = vmatprep.mubr.bf16.mxu0 0
        %4108 = vmatmul.mubr.bf16.gmra.mrb[0].mxu0 %v2479
        %v4109 = vpop.f32.mrb[0].mxu0
        %v4110 = vadd.f32 %v3949, %v4109
        %v4111 = vpop.f32.mrb[0].mxu0
        %v4112 = vadd.f32 %v3951, %v4111
        %v4113 = vpop.f32.mrb[0].mxu0
        %v4114 = vadd.f32 %v3953, %v4113
        %v4115 = vpop.f32.mrb[0].mxu0
        %v4116 = vadd.f32 %v3955, %v4115
        %4117 = vmatprep.mubr.bf16.mxu0 0
        %4118 = vmatmul.mubr.bf16.gmra.mrb[0].mxu0 %v2488
        %v4119 = vpop.f32.mrb[0].mxu0
        %v4120 = vadd.f32 %v3959, %v4119
        %v4121 = vpop.f32.mrb[0].mxu0
        %v4122 = vadd.f32 %v3961, %v4121
        %v4123 = vpop.f32.mrb[0].mxu0
        %v4124 = vadd.f32 %v3963, %v4123
        %v4125 = vpop.f32.mrb[0].mxu0
        %v4126 = vadd.f32 %v3965, %v4125
        %4127 = vmatprep.mubr.bf16.mxu0 0
        %4128 = vmatmul.mubr.bf16.gmra.mrb[0].mxu0 %v2497
        %v4129 = vpop.f32.mrb[0].mxu0
        %v4130 = vadd.f32 %v3969, %v4129
        %v4131 = vpop.f32.mrb[0].mxu0
        %v4132 = vadd.f32 %v3971, %v4131
        %v4133 = vpop.f32.mrb[0].mxu0
        %v4134 = vadd.f32 %v3973, %v4133
        %v4135 = vpop.f32.mrb[0].mxu0
        %v4136 = vadd.f32 %v3975, %v4135
        %4137 = vmatprep.mubr.bf16.mxu0 0
        %4138 = vmatmul.mubr.bf16.gmra.mrb[0].mxu0 %v2506
        %v4139 = vpop.f32.mrb[0].mxu0
        %v4140 = vadd.f32 %v3979, %v4139
        %v4141 = vpop.f32.mrb[0].mxu0
        %v4142 = vadd.f32 %v3981, %v4141
        %v4143 = vpop.f32.mrb[0].mxu0
        %v4144 = vadd.f32 %v3983, %v4143
        %v4145 = vpop.f32.mrb[0].mxu0
        %v4146 = vadd.f32 %v3985, %v4145
        %4147 = vmatprep.mubr.bf16.mxu0 0
        %4148 = vmatmul.mubr.bf16.gmra.mrb[0].mxu0 %v2515
        %v4149 = vpop.f32.mrb[0].mxu0
        %v4150 = vadd.f32 %v3989, %v4149
        %v4151 = vpop.f32.mrb[0].mxu0
        %v4152 = vadd.f32 %v3991, %v4151
        %v4153 = vpop.f32.mrb[0].mxu0
        %v4154 = vadd.f32 %v3993, %v4153
        %v4155 = vpop.f32.mrb[0].mxu0
        %v4156 = vadd.f32 %v3995, %v4155
        %4157 = vmatprep.mubr.bf16.mxu0 0
        %4158 = vmatmul.mubr.bf16.gmra.mrb[0].mxu0 %v2524
        %v4159 = vpop.f32.mrb[0].mxu0
        %v4160 = vadd.f32 %v3999, %v4159
        %v4161 = vpop.f32.mrb[0].mxu0
        %v4162 = vadd.f32 %v4001, %v4161
        %v4163 = vpop.f32.mrb[0].mxu0
        %v4164 = vadd.f32 %v4003, %v4163
        %v4165 = vpop.f32.mrb[0].mxu0
        %v4166 = vadd.f32 %v4005, %v4165
        %4167 = vmatprep.mubr.bf16.mxu0 0
        %4168 = vmatmul.mubr.bf16.gmra.mrb[0].mxu0 %v2533
        %v4169 = vpop.f32.mrb[0].mxu0
        %v4170 = vadd.f32 %v4009, %v4169
        %v4171 = vpop.f32.mrb[0].mxu0
        %v4172 = vadd.f32 %v4011, %v4171
        %v4173 = vpop.f32.mrb[0].mxu0
        %v4174 = vpop.f32.mrb[0].mxu0
        %4175 = vdwg.mxu0
        %v4176 = vmax.f32 %v4050, 0.0
        %v4177 = vmax.f32 %v4052, 0.0
        %v4178 = vmax.f32 %v4054, 0.0
        %v4179 = vmax.f32 %v4056, 0.0
        %v4180 = vmax.f32 %v4060, 0.0
        %v4181 = vmax.f32 %v4062, 0.0
        %v4182 = vmax.f32 %v4064, 0.0
        %v4183 = vmax.f32 %v4066, 0.0
        %v4184 = vmax.f32 %v4070, 0.0
        %v4185 = vmax.f32 %v4072, 0.0
        %v4186 = vmax.f32 %v4074, 0.0
        %v4187 = vmax.f32 %v4076, 0.0
        %v4188 = vmax.f32 %v4080, 0.0
        %v4189 = vmax.f32 %v4082, 0.0
        %v4190 = vmax.f32 %v4084, 0.0
        %v4191 = vmax.f32 %v4086, 0.0
        %v4192 = vmax.f32 %v4090, 0.0
        %v4193 = vmax.f32 %v4092, 0.0
        %v4194 = vmax.f32 %v4094, 0.0
        %v4195 = vmax.f32 %v4096, 0.0
        %v4196 = vmax.f32 %v4100, 0.0
        %v4197 = vmax.f32 %v4102, 0.0
        %v4198 = vmax.f32 %v4104, 0.0
        %v4199 = vmax.f32 %v4106, 0.0
        %v4200 = vmax.f32 %v4110, 0.0
        %v4201 = vmax.f32 %v4112, 0.0
        %v4202 = vmax.f32 %v4114, 0.0
        %v4203 = vmax.f32 %v4116, 0.0
        %v4204 = vmax.f32 %v4120, 0.0
        %v4205 = vmax.f32 %v4122, 0.0
        %v4206 = vmax.f32 %v4124, 0.0
        %v4207 = vmax.f32 %v4126, 0.0
        %v4208 = vmax.f32 %v4130, 0.0
        %v4209 = vmax.f32 %v4132, 0.0
        %v4210 = vmax.f32 %v4134, 0.0
        %v4211 = vmax.f32 %v4136, 0.0
        %v4212 = vmax.f32 %v4140, 0.0
        %v4213 = vmax.f32 %v4142, 0.0
        %v4214 = vmax.f32 %v4144, 0.0
        %v4215 = vmax.f32 %v4146, 0.0
        %v4216 = vmax.f32 %v4150, 0.0
        %v4217 = vmax.f32 %v4152, 0.0
        %v4218 = vmax.f32 %v4154, 0.0
        %v4219 = vmax.f32 %v4156, 0.0
        %v4220 = vmax.f32 %v4160, 0.0
        %v4221 = vmax.f32 %v4162, 0.0
        %v4222 = vmax.f32 %v4164, 0.0
        %v4223 = vmax.f32 %v4166, 0.0
        %v4224 = vmax.f32 %v4170, 0.0
        %v4225 = vmax.f32 %v4172, 0.0
        %v4226 = vpack.c.bf16 %v4178, %v4176
        %v4227 = vpack.c.bf16 %v4179, %v4177
        %v4228 = vpack.c.bf16 %v4182, %v4180
        %v4229 = vpack.c.bf16 %v4183, %v4181
        %v4230 = vpack.c.bf16 %v4186, %v4184
        %v4231 = vpack.c.bf16 %v4187, %v4185
        %v4232 = vpack.c.bf16 %v4190, %v4188
        %v4233 = vpack.c.bf16 %v4191, %v4189
        %v4234 = vpack.c.bf16 %v4194, %v4192
        %v4235 = vpack.c.bf16 %v4195, %v4193
        %v4236 = vpack.c.bf16 %v4198, %v4196
        %v4237 = vpack.c.bf16 %v4199, %v4197
        %v4238 = vpack.c.bf16 %v4202, %v4200
        %v4239 = vpack.c.bf16 %v4203, %v4201
        %v4240 = vpack.c.bf16 %v4206, %v4204
        %v4241 = vpack.c.bf16 %v4207, %v4205
        %v4242 = vpack.c.bf16 %v4210, %v4208
        %v4243 = vpack.c.bf16 %v4211, %v4209
        %v4244 = vpack.c.bf16 %v4214, %v4212
        %v4245 = vpack.c.bf16 %v4215, %v4213
        %v4246 = vpack.c.bf16 %v4218, %v4216
        %v4247 = vpack.c.bf16 %v4219, %v4217
        %v4248 = vpack.c.bf16 %v4222, %v4220
        %v4249 = vpack.c.bf16 %v4223, %v4221
        %v4250 = vpack.c.bf16 %v4224, %v4224
        %v4251 = vpack.c.bf16 %v4225, %v4225
        %v4252 = vld [vmem:[#allocation8] sm:$0xf]
        %v4253 = vld [vmem:[#allocation8 + $0x4] sm:$0xf]
        %v4254 = vld [vmem:[#allocation8 + $0x8] sm:$0xf]
        %v4255 = vld [vmem:[#allocation8 + $0xc] sm:$0xf]
        %v4256 = vld [vmem:[#allocation8 + $0x10] sm:$0xf]
        %v4257 = vld [vmem:[#allocation8 + $0x14] sm:$0xf]
        %v4258 = vld [vmem:[#allocation8 + $0x18] sm:$0xf]
        %v4259 = vld [vmem:[#allocation8 + $0x1c] sm:$0xf]
        %v4260 = vld [vmem:[#allocation8 + $0x20] sm:$0xf]
        %v4261 = vld [vmem:[#allocation8 + $0x24] sm:$0xf]
        %v4262 = vld [vmem:[#allocation8 + $0x28] sm:$0xf]
        %v4263 = vld [vmem:[#allocation8 + $0x2c] sm:$0xf]
        %v4264 = vld [vmem:[#allocation8 + $0x30] sm:$0xf]
        %v4265 = vld [vmem:[#allocation8 + $0x34] sm:$0xf]
        %v4266 = vld [vmem:[#allocation8 + $0x38] sm:$0xf]
        %v4267 = vld [vmem:[#allocation8 + $0x3c] sm:$0xf]
        %v4268 = vld [vmem:[#allocation8 + $0x40] sm:$0xf]
        %v4269 = vld [vmem:[#allocation8 + $0x44] sm:$0xf]
        %v4270 = vld [vmem:[#allocation8 + $0x48] sm:$0xf]
        %v4271 = vld [vmem:[#allocation8 + $0x4c] sm:$0xf]
        %v4272 = vld [vmem:[#allocation8 + $0x50] sm:$0xf]
        %v4273 = vld [vmem:[#allocation8 + $0x54] sm:$0xf]
        %v4274 = vld [vmem:[#allocation8 + $0x58] sm:$0xf]
        %v4275 = vld [vmem:[#allocation8 + $0x5c] sm:$0xf]
        %v4276 = vld [vmem:[#allocation8 + $0x60] sm:$0xf]
        %v4277 = vld [vmem:[#allocation8 + $0x64] sm:$0xf]
        %v4278 = vld [vmem:[#allocation8 + $0x68] sm:$0xf]
        %v4279 = vld [vmem:[#allocation8 + $0x6c] sm:$0xf]
        %v4280 = vld [vmem:[#allocation8 + $0x70] sm:$0xf]
        %v4281 = vld [vmem:[#allocation8 + $0x74] sm:$0xf]
        %v4282 = vld [vmem:[#allocation8 + $0x78] sm:$0xf]
        %v4283 = vld [vmem:[#allocation8 + $0x7c] sm:$0xf]
        %v4284 = vld [vmem:[%s4] sm:$0x1]
        %v4286 = vlaneseq
        %v4287 = vshrl.u32 %v4286, 7
        %v4288 = vsub.s32 0, %v4287
        %v4289 = vrot.slane %v4284, %v4288
        %v4323 = vunpack.c.l.b16 %v4252
        %v4324 = vunpack.c.l.b16 %v4253
        %v4325 = vunpack.c.l.b16 %v4254
        %v4326 = vunpack.c.l.b16 %v4255
        %v4327 = vunpack.c.l.b16 %v4256
        %v4328 = vunpack.c.l.b16 %v4257
        %v4329 = vunpack.c.l.b16 %v4258
        %v4330 = vunpack.c.l.b16 %v4259
        %v4331 = vunpack.c.l.b16 %v4260
        %v4332 = vunpack.c.l.b16 %v4261
        %v4333 = vunpack.c.l.b16 %v4262
        %v4334 = vunpack.c.l.b16 %v4263
        %v4335 = vunpack.c.l.b16 %v4264
        %v4336 = vunpack.c.l.b16 %v4265
        %v4337 = vunpack.c.l.b16 %v4266
        %v4338 = vunpack.c.l.b16 %v4267
        %v4339 = vunpack.c.l.b16 %v4268
        %v4340 = vunpack.c.l.b16 %v4269
        %v4341 = vunpack.c.l.b16 %v4270
        %v4342 = vunpack.c.l.b16 %v4271
        %v4343 = vunpack.c.l.b16 %v4272
        %v4344 = vunpack.c.l.b16 %v4273
        %v4345 = vunpack.c.l.b16 %v4274
        %v4346 = vunpack.c.l.b16 %v4275
        %v4347 = vunpack.c.l.b16 %v4276
        %v4348 = vunpack.c.l.b16 %v4277
        %v4349 = vunpack.c.l.b16 %v4278
        %v4350 = vunpack.c.l.b16 %v4279
        %v4351 = vunpack.c.l.b16 %v4280
        %v4352 = vunpack.c.l.b16 %v4281
        %v4353 = vunpack.c.l.b16 %v4282
        %v4354 = vunpack.c.l.b16 %v4283
        %v4355 = vpack.c.b16 %v4324, %v4323
        %v4356 = vpack.c.b16 %v4326, %v4325
        %v4357 = vpack.c.b16 %v4328, %v4327
        %v4358 = vpack.c.b16 %v4330, %v4329
        %v4359 = vpack.c.b16 %v4332, %v4331
        %v4360 = vpack.c.b16 %v4334, %v4333
        %v4361 = vpack.c.b16 %v4336, %v4335
        %v4362 = vpack.c.b16 %v4338, %v4337
        %v4363 = vpack.c.b16 %v4340, %v4339
        %v4364 = vpack.c.b16 %v4342, %v4341
        %v4365 = vpack.c.b16 %v4344, %v4343
        %v4366 = vpack.c.b16 %v4346, %v4345
        %v4367 = vpack.c.b16 %v4348, %v4347
        %v4368 = vpack.c.b16 %v4350, %v4349
        %v4369 = vpack.c.b16 %v4352, %v4351
        %v4370 = vpack.c.b16 %v4354, %v4353
        %4387 = vmatprep.subr.bf16.mxu0 0
        %4388 = vmatpush1.bf16.msra.mxu0 %v4355
        %4389 = vmatprep.subr.bf16.mxu0 0
        %4390 = vmatpush1.bf16.msra.mxu0 %v4356
        %4391 = vmatprep.subr.bf16.mxu0 0
        %4392 = vmatpush1.bf16.msra.mxu0 %v4357
        %4393 = vmatprep.subr.bf16.mxu0 0
        %4394 = vmatpush1.bf16.msra.mxu0 %v4358
        %4395 = vmatprep.subr.bf16.mxu0 0
        %4396 = vmatpush1.bf16.msra.mxu0 %v4359
        %4397 = vmatprep.subr.bf16.mxu0 0
        %4398 = vmatpush1.bf16.msra.mxu0 %v4360
        %4399 = vmatprep.subr.bf16.mxu0 0
        %4400 = vmatpush1.bf16.msra.mxu0 %v4361
        %4401 = vmatprep.subr.bf16.mxu0 0
        %4402 = vmatpush1.bf16.msra.mxu0 %v4362
        %4403 = vmatprep.subr.bf16.mxu0 0
        %4404 = vmatpush1.bf16.msra.mxu0 %v4363
        %4405 = vmatprep.subr.bf16.mxu0 0
        %4406 = vmatpush1.bf16.msra.mxu0 %v4364
        %4407 = vmatprep.subr.bf16.mxu0 0
        %4408 = vmatpush1.bf16.msra.mxu0 %v4365
        %4409 = vmatprep.subr.bf16.mxu0 0
        %4410 = vmatpush1.bf16.msra.mxu0 %v4366
        %4411 = vmatprep.subr.bf16.mxu0 0
        %4412 = vmatpush1.bf16.msra.mxu0 %v4367
        %4413 = vmatprep.subr.bf16.mxu0 0
        %4414 = vmatpush1.bf16.msra.mxu0 %v4368
        %4415 = vmatprep.subr.bf16.mxu0 0
        %4416 = vmatpush1.bf16.msra.mxu0 %v4369
        %4417 = vmatprep.subr.bf16.mxu0 0
        %4418 = vmatpush1.bf16.msra.mxu0 %v4370
        %4419 = vmatprep.mubr.bf16.mxu0 %v4227
        %4420 = vmatmul.mubr.bf16.gmra.mrb[0].mxu0 %v4226
        %v4421 = vpop.f32.mrb[0].mxu0
        %v4422 = vadd.f32 %v4289, %v4421
        %v4423 = vpop.f32.mrb[0].mxu0
        %v4424 = vpop.f32.mrb[0].mxu0
        %v4425 = vadd.f32 %v4289, %v4424
        %v4426 = vpop.f32.mrb[0].mxu0
        %4427 = vmatprep.mubr.bf16.mxu0 %v4229
        %4428 = vmatmul.mubr.bf16.gmra.mrb[0].mxu0 %v4228
        %v4429 = vpop.f32.mrb[0].mxu0
        %v4430 = vadd.f32 %v4289, %v4429
        %v4431 = vpop.f32.mrb[0].mxu0
        %v4432 = vpop.f32.mrb[0].mxu0
        %v4433 = vadd.f32 %v4289, %v4432
        %v4434 = vpop.f32.mrb[0].mxu0
        %4435 = vmatprep.mubr.bf16.mxu0 %v4231
        %4436 = vmatmul.mubr.bf16.gmra.mrb[0].mxu0 %v4230
        %v4437 = vpop.f32.mrb[0].mxu0
        %v4438 = vadd.f32 %v4289, %v4437
        %v4439 = vpop.f32.mrb[0].mxu0
        %v4440 = vpop.f32.mrb[0].mxu0
        %v4441 = vadd.f32 %v4289, %v4440
        %v4442 = vpop.f32.mrb[0].mxu0
        %4443 = vmatprep.mubr.bf16.mxu0 %v4233
        %4444 = vmatmul.mubr.bf16.gmra.mrb[0].mxu0 %v4232
        %v4445 = vpop.f32.mrb[0].mxu0
        %v4446 = vadd.f32 %v4289, %v4445
        %v4447 = vpop.f32.mrb[0].mxu0
        %v4448 = vpop.f32.mrb[0].mxu0
        %v4449 = vadd.f32 %v4289, %v4448
        %v4450 = vpop.f32.mrb[0].mxu0
        %4451 = vmatprep.mubr.bf16.mxu0 %v4235
        %4452 = vmatmul.mubr.bf16.gmra.mrb[0].mxu0 %v4234
        %v4453 = vpop.f32.mrb[0].mxu0
        %v4454 = vadd.f32 %v4289, %v4453
        %v4455 = vpop.f32.mrb[0].mxu0
        %v4456 = vpop.f32.mrb[0].mxu0
        %v4457 = vadd.f32 %v4289, %v4456
        %v4458 = vpop.f32.mrb[0].mxu0
        %4459 = vmatprep.mubr.bf16.mxu0 %v4237
        %4460 = vmatmul.mubr.bf16.gmra.mrb[0].mxu0 %v4236
        %v4461 = vpop.f32.mrb[0].mxu0
        %v4462 = vadd.f32 %v4289, %v4461
        %v4463 = vpop.f32.mrb[0].mxu0
        %v4464 = vpop.f32.mrb[0].mxu0
        %v4465 = vadd.f32 %v4289, %v4464
        %v4466 = vpop.f32.mrb[0].mxu0
        %4467 = vmatprep.mubr.bf16.mxu0 %v4239
        %4468 = vmatmul.mubr.bf16.gmra.mrb[0].mxu0 %v4238
        %v4469 = vpop.f32.mrb[0].mxu0
        %v4470 = vadd.f32 %v4289, %v4469
        %v4471 = vpop.f32.mrb[0].mxu0
        %v4472 = vpop.f32.mrb[0].mxu0
        %v4473 = vadd.f32 %v4289, %v4472
        %v4474 = vpop.f32.mrb[0].mxu0
        %4475 = vmatprep.mubr.bf16.mxu0 %v4241
        %4476 = vmatmul.mubr.bf16.gmra.mrb[0].mxu0 %v4240
        %v4477 = vpop.f32.mrb[0].mxu0
        %v4478 = vadd.f32 %v4289, %v4477
        %v4479 = vpop.f32.mrb[0].mxu0
        %v4480 = vpop.f32.mrb[0].mxu0
        %v4481 = vadd.f32 %v4289, %v4480
        %v4482 = vpop.f32.mrb[0].mxu0
        %4483 = vmatprep.mubr.bf16.mxu0 %v4243
        %4484 = vmatmul.mubr.bf16.gmra.mrb[0].mxu0 %v4242
        %v4485 = vpop.f32.mrb[0].mxu0
        %v4486 = vadd.f32 %v4289, %v4485
        %v4487 = vpop.f32.mrb[0].mxu0
        %v4488 = vpop.f32.mrb[0].mxu0
        %v4489 = vadd.f32 %v4289, %v4488
        %v4490 = vpop.f32.mrb[0].mxu0
        %4491 = vmatprep.mubr.bf16.mxu0 %v4245
        %4492 = vmatmul.mubr.bf16.gmra.mrb[0].mxu0 %v4244
        %v4493 = vpop.f32.mrb[0].mxu0
        %v4494 = vadd.f32 %v4289, %v4493
        %v4495 = vpop.f32.mrb[0].mxu0
        %v4496 = vpop.f32.mrb[0].mxu0
        %v4497 = vadd.f32 %v4289, %v4496
        %v4498 = vpop.f32.mrb[0].mxu0
        %4499 = vmatprep.mubr.bf16.mxu0 %v4247
        %4500 = vmatmul.mubr.bf16.gmra.mrb[0].mxu0 %v4246
        %v4501 = vpop.f32.mrb[0].mxu0
        %v4502 = vadd.f32 %v4289, %v4501
        %v4503 = vpop.f32.mrb[0].mxu0
        %v4504 = vpop.f32.mrb[0].mxu0
        %v4505 = vadd.f32 %v4289, %v4504
        %v4506 = vpop.f32.mrb[0].mxu0
        %4507 = vmatprep.mubr.bf16.mxu0 %v4249
        %4508 = vmatmul.mubr.bf16.gmra.mrb[0].mxu0 %v4248
        %v4509 = vpop.f32.mrb[0].mxu0
        %v4510 = vadd.f32 %v4289, %v4509
        %v4511 = vpop.f32.mrb[0].mxu0
        %v4512 = vpop.f32.mrb[0].mxu0
        %v4513 = vadd.f32 %v4289, %v4512
        %v4514 = vpop.f32.mrb[0].mxu0
        %4515 = vmatprep.mubr.bf16.mxu0 %v4251
        %4516 = vmatmul.mubr.bf16.gmra.mrb[0].mxu0 %v4250
        %v4517 = vpop.f32.mrb[0].mxu0
        %v4518 = vadd.f32 %v4289, %v4517
        %v4519 = vpop.f32.mrb[0].mxu0
        %v4520 = vpop.f32.mrb[0].mxu0
        %v4521 = vpop.f32.mrb[0].mxu0
        %4522 = vdwg.mxu0
        %vm4549 = vcmask 1043456
        %v4550 = vrot.slane %v290, 4
        %v4551 = vrot.slane %v291, 4
        %v4552 = vsel %vm4549, %v4550, %v4551
        %v4553 = vrot.slane %v292, 4
        %v4554 = vsel %vm4549, %v4551, %v4553
        %v4555 = vrot.slane %v293, 4
        %v4556 = vsel %vm4549, %v4553, %v4555
        %v4557 = vrot.slane %v294, 4
        %v4558 = vsel %vm4549, %v4555, %v4557
        %v4559 = vrot.slane %v295, 4
        %v4560 = vsel %vm4549, %v4557, %v4559
        %v4561 = vrot.slane %v296, 4
        %v4562 = vsel %vm4549, %v4559, %v4561
        %v4563 = vrot.slane %v297, 4
        %v4564 = vsel %vm4549, %v4561, %v4563
        %v4565 = vrot.slane %v298, 4
        %v4566 = vsel %vm4549, %v4563, %v4565
        %v4567 = vrot.slane %v299, 4
        %v4568 = vsel %vm4549, %v4565, %v4567
        %v4569 = vrot.slane %v300, 4
        %v4570 = vsel %vm4549, %v4567, %v4569
        %v4571 = vrot.slane %v301, 4
        %v4572 = vsel %vm4549, %v4569, %v4571
        %v4573 = vrot.slane %v302, 4
        %v4574 = vsel %vm4549, %v4571, %v4573
        %v4575 = vrot.slane %v303, 4
        %v4576 = vsel %vm4549, %v4573, %v4575
        %v4577 = vrot.slane %v304, 4
        %v4578 = vsel %vm4549, %v4575, %v4577
        %v4579 = vrot.slane %v305, 4
        %v4580 = vsel %vm4549, %v4577, %v4579
        %v4581 = vrot.slane %v306, 4
        %v4582 = vsel %vm4549, %v4579, %v4581
        %v4583 = vrot.slane %v307, 4
        %v4584 = vsel %vm4549, %v4581, %v4583
        %v4585 = vrot.slane %v308, 4
        %v4586 = vsel %vm4549, %v4583, %v4585
        %v4587 = vrot.slane %v309, 4
        %v4588 = vsel %vm4549, %v4585, %v4587
        %v4589 = vrot.slane %v310, 4
        %v4590 = vsel %vm4549, %v4587, %v4589
        %v4591 = vrot.slane %v311, 4
        %v4592 = vsel %vm4549, %v4589, %v4591
        %v4593 = vrot.slane %v312, 4
        %v4594 = vsel %vm4549, %v4591, %v4593
        %v4595 = vrot.slane %v313, 4
        %v4596 = vsel %vm4549, %v4593, %v4595
        %v4597 = vrot.slane %v314, 4
        %v4598 = vsel %vm4549, %v4595, %v4597
        %v4599 = vrot.slane %v315, 4
        %v4600 = vsel %vm4549, %v4597, %v4599
        %v4626 = vadd.f32 %v4422, %v4552
        %v4627 = vadd.f32 %v4425, %v4554
        %v4628 = vadd.f32 %v4430, %v4556
        %v4629 = vadd.f32 %v4433, %v4558
        %v4630 = vadd.f32 %v4438, %v4560
        %v4631 = vadd.f32 %v4441, %v4562
        %v4632 = vadd.f32 %v4446, %v4564
        %v4633 = vadd.f32 %v4449, %v4566
        %v4634 = vadd.f32 %v4454, %v4568
        %v4635 = vadd.f32 %v4457, %v4570
        %v4636 = vadd.f32 %v4462, %v4572
        %v4637 = vadd.f32 %v4465, %v4574
        %v4638 = vadd.f32 %v4470, %v4576
        %v4639 = vadd.f32 %v4473, %v4578
        %v4640 = vadd.f32 %v4478, %v4580
        %v4641 = vadd.f32 %v4481, %v4582
        %v4642 = vadd.f32 %v4486, %v4584
        %v4643 = vadd.f32 %v4489, %v4586
        %v4644 = vadd.f32 %v4494, %v4588
        %v4645 = vadd.f32 %v4497, %v4590
        %v4646 = vadd.f32 %v4502, %v4592
        %v4647 = vadd.f32 %v4505, %v4594
        %v4648 = vadd.f32 %v4510, %v4596
        %v4649 = vadd.f32 %v4513, %v4598
        %v4650 = vadd.f32 %v4518, %v4600
        %4651 = vst [vmem:[%s285] sm:$0xff] %v4626
        %4652 = vst [vmem:[%s285 + $0x8] sm:$0xff] %v4627
        %4653 = vst [vmem:[%s285 + $0x10] sm:$0xff] %v4628
        %4654 = vst [vmem:[%s285 + $0x18] sm:$0xff] %v4629
        %4655 = vst [vmem:[%s285 + $0x20] sm:$0xff] %v4630
        %4656 = vst [vmem:[%s285 + $0x28] sm:$0xff] %v4631
        %4657 = vst [vmem:[%s285 + $0x30] sm:$0xff] %v4632
        %4658 = vst [vmem:[%s285 + $0x38] sm:$0xff] %v4633
        %4659 = vst [vmem:[%s285 + $0x40] sm:$0xff] %v4634
        %4660 = vst [vmem:[%s285 + $0x48] sm:$0xff] %v4635
        %4661 = vst [vmem:[%s285 + $0x50] sm:$0xff] %v4636
        %4662 = vst [vmem:[%s285 + $0x58] sm:$0xff] %v4637
        %4663 = vst [vmem:[%s285 + $0x60] sm:$0xff] %v4638
        %4664 = vst [vmem:[%s285 + $0x68] sm:$0xff] %v4639
        %4665 = vst [vmem:[%s285 + $0x70] sm:$0xff] %v4640
        %4666 = vst [vmem:[%s285 + $0x78] sm:$0xff] %v4641
        %4667 = vst [vmem:[%s285 + $0x80] sm:$0xff] %v4642
        %4668 = vst [vmem:[%s285 + $0x88] sm:$0xff] %v4643
        %4669 = vst [vmem:[%s285 + $0x90] sm:$0xff] %v4644
        %4670 = vst [vmem:[%s285 + $0x98] sm:$0xff] %v4645
        %4671 = vst [vmem:[%s285 + $0xa0] sm:$0xff] %v4646
        %4672 = vst [vmem:[%s285 + $0xa8] sm:$0xff] %v4647
        %4673 = vst [vmem:[%s285 + $0xb0] sm:$0xff] %v4648
        %4674 = vst [vmem:[%s285 + $0xb8] sm:$0xff] %v4649
        %4675 = vst [vmem:[%s285 + $0xc0] sm:$0xff] %v4650
        %s4676 = sand.u32 %s155, 1
        %s4677 = scalar_lea.sflag [#allocation5], %s4676
        %s4678 = sand.u32 %s155, 1
        %s4679 = smul.addr %s4678, 200
        %s4680 = scalar_lea.vmem [#allocation9], %s4679
        // Predicated region
        $region53: #{tpu_custom_call.1} parent=39 // pred_check
          %p4681 = pneg %p165
        $region54: #{tpu_custom_call.1} parent=39 // pred_check_branch
          %4683 = sbr.rel (%p4681) target = $region56
        $region55: #{tpu_custom_call.1} parent=39 // pred_region
          %s4684 = smul.u32 25, %s28
          %s4686 = ssub.s32 3200, 3200
          %4687 = vsyncadd %s4677, %s4686
          %s4688 = smul.addr %s27, 25
          %s4689 = sadd.s32 %s4684, %s4688
          %s4690 = smul.addr %s4689, 128
          %s4691 = scalar_lea.hbm %s5, %s4690
          %s4692 = sshll.u32 %s4680, 4
          %s4693 = int_to_ptr.vmem [resolvable:$true] %s4692
          %4698 = dma.vmem_to_hbm [thread:$0]  %s4693, 3200, %s4691, %s4677, 128, 128, 8
        $region56: #{tpu_custom_call.1} parent=39 // pred_fallthru
          _
      $region40: #{tpu_custom_call.1} parent=5 // pred_fallthru
        _
      %p4699 = scmp.le.s32.totalorder 2, %s18
      // Predicated region
      $region57: #{tpu_custom_call.1} parent=5 // pred_check
        %p4700 = pneg %p4699
      $region58: #{tpu_custom_call.1} parent=5 // pred_check_branch
        %4702 = sbr.rel (%p4700) target = $region60
      $region59: #{tpu_custom_call.1} parent=5 // pred_region
        %s4703 = ssub.s32 %s18, 2
        // Predicated region
        $region61: #{tpu_custom_call.1} parent=59 // pred_check
          %p4704 = pneg %p171
        $region62: #{tpu_custom_call.1} parent=59 // pred_check_branch
          %4706 = sbr.rel (%p4704) target = $region64
        $region63: #{tpu_custom_call.1} parent=59 // pred_region
          %s4707 = sand.u32 %s156, 1
          %s4708 = scalar_lea.sflag [#allocation5], %s4707
          %s4709 = sand.u32 %s156, 1
          %s4710 = smul.addr %s4709, 200
          %s4711 = scalar_lea.vmem [#allocation9], %s4710
          %4712 = dma.done %s4708, 3200
        $region64: #{tpu_custom_call.1} parent=59 // pred_fallthru
          _
      $region60: #{tpu_custom_call.1} parent=5 // pred_fallthru
        _
    $region6: #{tpu_custom_call.1} parent=1 // loop_footer
      %s22 = sadd.s32 1, %s18
    $region7: #{tpu_custom_call.1} parent=1 // loop_footer_branch
      %17 = sbr.rel target = $region3
    $region8: #{tpu_custom_call.1} parent=1 // loop_exit
      _
    %4713 = vsyncpa [#allocation4], 1
    %s4714 = scalar_lea.sflag [#allocation4], 1
    %4715 = vsyncpa %s4714, 1
    %4716 = vsyncpa [#allocation7], 1
    %4717 = vsyncpa [#allocation5], 1
    %s4718 = scalar_lea.sflag [#allocation5], 1
    %4719 = vsyncpa %s4718, 1

</llo_original>
